<compile_context>
chip_gen: v7x
topology: tpu7x:2x2x1
jax: 0.10.0
libtpu: 0.0.40
codegen_flags: <defaults>
</compile_context>

<pallas_src>
import jax
import jax.numpy as jnp
from jax import lax
from jax.experimental import pallas as pl
from jax.experimental.pallas import tpu as pltpu


def _make_resblock_kernel(C, H, W, K, eps):
    S = H * W
    P = K // 2  # reflection pad width (=1 for the 3x3 convs in ResidualBlock)

    def reflect_pad(a):
        # a: (C, H, W) -> (C, H+2P, W+2P); PyTorch ReflectionPad2d semantics.
        rows = (
            [a[:, P - j:P - j + 1, :] for j in range(P)]
            + [a]
            + [a[:, H - 2 - j:H - 1 - j, :] for j in range(P)]
        )
        a = jnp.concatenate(rows, axis=1)
        cols = (
            [a[:, :, P - j:P - j + 1] for j in range(P)]
            + [a]
            + [a[:, :, W - 2 - j:W - 1 - j] for j in range(P)]
        )
        return jnp.concatenate(cols, axis=2)

    def conv(a_flat, w_ref, b_ref):
        # a_flat: (C, S) f32; w_ref: (C, K*K*C); b_ref: (C, 1)  ->  (C, S) f32
        xp = reflect_pad(a_flat.reshape(C, H, W))          # (C, H+2P, W+2P)
        # im2col patch matrix (K*K*C, S); row order (kh, kw, ci) matches the
        # wrapper's weight permutation.  Single MXU matmul per conv.
        pieces = []
        for kh in range(K):
            for kw in range(K):
                pieces.append(xp[:, kh:kh + H, kw:kw + W].reshape(C, S))
        patches = jnp.concatenate(pieces, axis=0)          # (K*K*C, S)
        y = jnp.dot(w_ref[...], patches, preferred_element_type=jnp.float32)
        return y + b_ref[...]                              # bias bcast over S

    def instance_norm(y, g_ref, b_ref):
        # y: (C, S); per-channel mean / biased var over the S (lane) axis.
        mean = jnp.mean(y, axis=1, keepdims=True)
        var = jnp.mean(jnp.square(y - mean), axis=1, keepdims=True)
        return (y - mean) * lax.rsqrt(var + eps) * g_ref[...] + b_ref[...]

    def kernel(x_ref, w1_ref, b1_ref, g1_ref, be1_ref,
               w2_ref, b2_ref, g2_ref, be2_ref, o_ref):
        x = x_ref[...].astype(jnp.float32)                 # (C, S)
        h = conv(x, w1_ref, b1_ref)
        h = jnp.maximum(instance_norm(h, g1_ref, be1_ref), 0.0)
        h = conv(h, w2_ref, b2_ref)
        h = instance_norm(h, g2_ref, be2_ref)
        o_ref[...] = (h + x).astype(o_ref.dtype)

    return kernel


def residual_block(x_nchw, w1, b1, g1, be1, w2, b2, g2, be2, *, eps=1e-5):
    """Forward pass equivalent to the PyTorch ResidualBlock.

    x_nchw           : (N, C, H, W) float32
    w1, w2           : (C, C, 3, 3) conv weights (PyTorch OIHW layout)
    b1, b2           : (C,) conv biases
    g1, be1, g2, be2 : (C,) InstanceNorm2d affine weight / bias
    """
    N, C, H, W = x_nchw.shape
    K = w1.shape[-1]
    S = H * W

    # Free contiguous reshape; no transpose / pad / upsample HBM passes.
    x_flat = x_nchw.reshape(N, C, S)

    # (Cout, Cin, K, K) -> (Cout, K*K*Cin): matches in-kernel patch row order.
    def prep_w(w):
        return jnp.transpose(w, (0, 2, 3, 1)).reshape(C, K * K * C)

    col = lambda v: v.reshape(C, 1)
    args = (x_flat, prep_w(w1), col(b1), col(g1), col(be1),
            prep_w(w2), col(b2), col(g2), col(be2))

    kernel = _make_resblock_kernel(C, H, W, K, eps)

    param_spec = lambda shape: pl.BlockSpec(shape, lambda n: (0, 0))
    act_spec = pl.BlockSpec((pl.Squeezed(), C, S), lambda n: (n, 0, 0))

    flops = int(N * (2 * 2 * S * (K * K * C) * C + 14 * C * S))
    bytes_accessed = int(4 * (2 * N * C * S + 2 * C * K * K * C + 6 * C))

    # TODO(synk): for large images the fused single-pass block would exceed
    # VMEM; InstanceNorm's full-H*W reduction then requires a spatially tiled
    # two-pass (conv+stats, then normalize) formulation.
    out_flat = pl.pallas_call(
        kernel,
        out_shape=jax.ShapeDtypeStruct((N, C, S), x_nchw.dtype),
        grid_spec=pltpu.PrefetchScalarGridSpec(
            num_scalar_prefetch=0,
            grid=(N,),
            in_specs=[
                act_spec,
                param_spec((C, K * K * C)), param_spec((C, 1)),
                param_spec((C, 1)), param_spec((C, 1)),
                param_spec((C, K * K * C)), param_spec((C, 1)),
                param_spec((C, 1)), param_spec((C, 1)),
            ],
            out_specs=act_spec,
        ),
        compiler_params=pltpu.CompilerParams(
            dimension_semantics=("parallel",),   # batch -> v7x's 2 TensorCores
            vmem_limit_bytes=32 * 1024 * 1024,
        ),
        cost_estimate=pl.CostEstimate(
            flops=flops,
            transcendentals=int(2 * N * C),
            bytes_accessed=bytes_accessed,
        ),
    )(*args)

    return out_flat.reshape(N, C, H, W)


def _ref_residual_block(x, w1, b1, g1, be1, w2, b2, g2, be2, eps=1e-5):
    """Pure-JAX reference (XLA conv + explicit InstanceNorm)."""
    def conv(x, w, b):
        xp = jnp.pad(x, ((0, 0), (0, 0), (1, 1), (1, 1)), mode="reflect")
        y = lax.conv_general_dilated(
            xp, w, window_strides=(1, 1), padding="VALID",
            dimension_numbers=("NCHW", "OIHW", "NCHW"),
            precision=lax.Precision.HIGHEST)
        return y + b.reshape(1, -1, 1, 1)

    def inorm(y, g, be):
        mean = y.mean(axis=(2, 3), keepdims=True)
        var = ((y - mean) ** 2).mean(axis=(2, 3), keepdims=True)
        return ((y - mean) * lax.rsqrt(var + eps) * g.reshape(1, -1, 1, 1)
                + be.reshape(1, -1, 1, 1))

    out = jax.nn.relu(inorm(conv(x, w1, b1), g1, be1))
    out = inorm(conv(out, w2, b2), g2, be2)
    return out + x


if __name__ == "__main__":
    # ResidualBlock(channels=4) on a small image: N=2, C=4, H=W=16, K=3.
    N, C, H, W, K = 2, 4, 16, 16, 3

    key = jax.random.PRNGKey(0)
    ks = jax.random.split(key, 9)
    x = jax.random.normal(ks[0], (N, C, H, W), dtype=jnp.float32)

    fan_in = C * K * K
    bound = 1.0 / (fan_in ** 0.5)
    w1 = jax.random.uniform(ks[1], (C, C, K, K), jnp.float32, -bound, bound)
    b1 = jax.random.uniform(ks[2], (C,), jnp.float32, -bound, bound)
    w2 = jax.random.uniform(ks[3], (C, C, K, K), jnp.float32, -bound, bound)
    b2 = jax.random.uniform(ks[4], (C,), jnp.float32, -bound, bound)
    # InstanceNorm2d(affine=True) params (PyTorch init is weight=1, bias=0;
    # perturb them so the affine path is actually exercised).
    g1 = 1.0 + 0.1 * jax.random.normal(ks[5], (C,), jnp.float32)
    be1 = 0.1 * jax.random.normal(ks[6], (C,), jnp.float32)
    g2 = 1.0 + 0.1 * jax.random.normal(ks[7], (C,), jnp.float32)
    be2 = 0.1 * jax.random.normal(ks[8], (C,), jnp.float32)

    fwd = jax.jit(residual_block)
    out = jax.block_until_ready(fwd(x, w1, b1, g1, be1, w2, b2, g2, be2))

    ref = _ref_residual_block(x, w1, b1, g1, be1, w2, b2, g2, be2)
    assert out.shape == (N, C, H, W), out.shape
    max_err = float(jnp.max(jnp.abs(out - ref)))
    assert jnp.allclose(out, ref, atol=1e-3, rtol=1e-3), max_err

    print("KERNEL_OK")
</pallas_src>

<mosaic_0001>
module attributes {stable_mosaic.version = 11 : i64} {
  func.func @kernel(%arg0: i32, %arg1: memref<1x4x256xf32, #tpu.memory_space<vmem>>, %arg2: memref<4x36xf32, #tpu.memory_space<vmem>>, %arg3: memref<4x1xf32, #tpu.memory_space<vmem>>, %arg4: memref<4x1xf32, #tpu.memory_space<vmem>>, %arg5: memref<4x1xf32, #tpu.memory_space<vmem>>, %arg6: memref<4x36xf32, #tpu.memory_space<vmem>>, %arg7: memref<4x1xf32, #tpu.memory_space<vmem>>, %arg8: memref<4x1xf32, #tpu.memory_space<vmem>>, %arg9: memref<4x1xf32, #tpu.memory_space<vmem>>, %arg10: memref<1x4x256xf32, #tpu.memory_space<vmem>>) attributes {dimension_semantics = [#tpu.dimension_semantics<parallel>], iteration_bounds = array<i64: 2>, scalar_prefetch = 0 : i64, scratch_operands = 0 : i64, tpu.core_type = #tpu.core_type<tc>, window_params = [{transform_indices = @transform_0, window_bounds = array<i64: 1, 4, 256>}, {pipeline_mode = #tpu.pipeline_mode<synchronous>, transform_indices = @transform_1, window_bounds = array<i64: 4, 36>}, {pipeline_mode = #tpu.pipeline_mode<synchronous>, transform_indices = @transform_2, window_bounds = array<i64: 4, 1>}, {pipeline_mode = #tpu.pipeline_mode<synchronous>, transform_indices = @transform_3, window_bounds = array<i64: 4, 1>}, {pipeline_mode = #tpu.pipeline_mode<synchronous>, transform_indices = @transform_4, window_bounds = array<i64: 4, 1>}, {pipeline_mode = #tpu.pipeline_mode<synchronous>, transform_indices = @transform_5, window_bounds = array<i64: 4, 36>}, {pipeline_mode = #tpu.pipeline_mode<synchronous>, transform_indices = @transform_6, window_bounds = array<i64: 4, 1>}, {pipeline_mode = #tpu.pipeline_mode<synchronous>, transform_indices = @transform_7, window_bounds = array<i64: 4, 1>}, {pipeline_mode = #tpu.pipeline_mode<synchronous>, transform_indices = @transform_8, window_bounds = array<i64: 4, 1>}, {transform_indices = @transform_9, window_bounds = array<i64: 1, 4, 256>}]} {
    %c0 = arith.constant 0 : index
    %c0_0 = arith.constant 0 : index
    %c0_1 = arith.constant 0 : index
    %0 = vector.load %arg1[%c0, %c0_0, %c0_1] : memref<1x4x256xf32, #tpu.memory_space<vmem>>, vector<1x4x256xf32>
    %1 = vector.shape_cast %0 : vector<1x4x256xf32> to vector<4x256xf32>
    %2 = vector.shape_cast %1 : vector<4x256xf32> to vector<4x16x16xf32>
    %3 = vector.extract_strided_slice %2 {offsets = [0, 1, 0], sizes = [4, 1, 16], strides = [1, 1, 1]} : vector<4x16x16xf32> to vector<4x1x16xf32>
    %4 = vector.extract_strided_slice %2 {offsets = [0, 14, 0], sizes = [4, 1, 16], strides = [1, 1, 1]} : vector<4x16x16xf32> to vector<4x1x16xf32>
    %5 = tpu.concatenate %3, %2, %4 in 1 : vector<4x1x16xf32>, vector<4x16x16xf32>, vector<4x1x16xf32> -> vector<4x18x16xf32>
    %6 = vector.extract_strided_slice %5 {offsets = [0, 0, 1], sizes = [4, 18, 1], strides = [1, 1, 1]} : vector<4x18x16xf32> to vector<4x18x1xf32>
    %7 = vector.extract_strided_slice %5 {offsets = [0, 0, 14], sizes = [4, 18, 1], strides = [1, 1, 1]} : vector<4x18x16xf32> to vector<4x18x1xf32>
    %8 = tpu.concatenate %6, %5, %7 in 2 : vector<4x18x1xf32>, vector<4x18x16xf32>, vector<4x18x1xf32> -> vector<4x18x18xf32>
    %9 = vector.extract_strided_slice %8 {offsets = [0, 0, 0], sizes = [4, 16, 16], strides = [1, 1, 1]} : vector<4x18x18xf32> to vector<4x16x16xf32>
    %10 = vector.shape_cast %9 : vector<4x16x16xf32> to vector<4x256xf32>
    %11 = vector.extract_strided_slice %8 {offsets = [0, 0, 1], sizes = [4, 16, 16], strides = [1, 1, 1]} : vector<4x18x18xf32> to vector<4x16x16xf32>
    %12 = vector.shape_cast %11 : vector<4x16x16xf32> to vector<4x256xf32>
    %13 = vector.extract_strided_slice %8 {offsets = [0, 0, 2], sizes = [4, 16, 16], strides = [1, 1, 1]} : vector<4x18x18xf32> to vector<4x16x16xf32>
    %14 = vector.shape_cast %13 : vector<4x16x16xf32> to vector<4x256xf32>
    %15 = vector.extract_strided_slice %8 {offsets = [0, 1, 0], sizes = [4, 16, 16], strides = [1, 1, 1]} : vector<4x18x18xf32> to vector<4x16x16xf32>
    %16 = vector.shape_cast %15 : vector<4x16x16xf32> to vector<4x256xf32>
    %17 = vector.extract_strided_slice %8 {offsets = [0, 1, 1], sizes = [4, 16, 16], strides = [1, 1, 1]} : vector<4x18x18xf32> to vector<4x16x16xf32>
    %18 = vector.shape_cast %17 : vector<4x16x16xf32> to vector<4x256xf32>
    %19 = vector.extract_strided_slice %8 {offsets = [0, 1, 2], sizes = [4, 16, 16], strides = [1, 1, 1]} : vector<4x18x18xf32> to vector<4x16x16xf32>
    %20 = vector.shape_cast %19 : vector<4x16x16xf32> to vector<4x256xf32>
    %21 = vector.extract_strided_slice %8 {offsets = [0, 2, 0], sizes = [4, 16, 16], strides = [1, 1, 1]} : vector<4x18x18xf32> to vector<4x16x16xf32>
    %22 = vector.shape_cast %21 : vector<4x16x16xf32> to vector<4x256xf32>
    %23 = vector.extract_strided_slice %8 {offsets = [0, 2, 1], sizes = [4, 16, 16], strides = [1, 1, 1]} : vector<4x18x18xf32> to vector<4x16x16xf32>
    %24 = vector.shape_cast %23 : vector<4x16x16xf32> to vector<4x256xf32>
    %25 = vector.extract_strided_slice %8 {offsets = [0, 2, 2], sizes = [4, 16, 16], strides = [1, 1, 1]} : vector<4x18x18xf32> to vector<4x16x16xf32>
    %26 = vector.shape_cast %25 : vector<4x16x16xf32> to vector<4x256xf32>
    %27 = tpu.concatenate %10, %12, %14, %16, %18, %20, %22, %24, %26 in 0 : vector<4x256xf32>, vector<4x256xf32>, vector<4x256xf32>, vector<4x256xf32>, vector<4x256xf32>, vector<4x256xf32>, vector<4x256xf32>, vector<4x256xf32>, vector<4x256xf32> -> vector<36x256xf32>
    %c0_2 = arith.constant 0 : index
    %c0_3 = arith.constant 0 : index
    %28 = vector.load %arg2[%c0_2, %c0_3] : memref<4x36xf32, #tpu.memory_space<vmem>>, vector<4x36xf32>
    %cst = arith.constant dense<0.000000e+00> : vector<4x256xf32>
    %29 = tpu.matmul %28, %27, %cst {dimension_numbers = #tpu.dot_dimension_numbers<[1], [0], [0], [1], [0, 0, 1, 1], [], []>} : vector<4x36xf32>, vector<36x256xf32>, vector<4x256xf32> -> vector<4x256xf32>
    %c0_4 = arith.constant 0 : index
    %c0_5 = arith.constant 0 : index
    %30 = vector.load %arg3[%c0_4, %c0_5] : memref<4x1xf32, #tpu.memory_space<vmem>>, vector<4x1xf32>
    %31 = vector.broadcast %30 : vector<4x1xf32> to vector<4x256xf32>
    %32 = arith.addf %29, %31 : vector<4x256xf32>
    %cst_6 = arith.constant dense<0.000000e+00> : vector<4xf32>
    %33 = vector.multi_reduction <add>, %32, %cst_6 [1] : vector<4x256xf32> to vector<4xf32>
    %34 = vector.shape_cast %33 : vector<4xf32> to vector<4x1xf32>
    %cst_7 = arith.constant 2.560000e+02 : f32
    %35 = vector.broadcast %cst_7 : f32 to vector<4x1xf32>
    %36 = arith.divf %34, %35 : vector<4x1xf32>
    %37 = vector.broadcast %36 : vector<4x1xf32> to vector<4x256xf32>
    %38 = arith.subf %32, %37 : vector<4x256xf32>
    %39 = arith.mulf %38, %38 : vector<4x256xf32>
    %cst_8 = arith.constant dense<0.000000e+00> : vector<4xf32>
    %40 = vector.multi_reduction <add>, %39, %cst_8 [1] : vector<4x256xf32> to vector<4xf32>
    %41 = vector.shape_cast %40 : vector<4xf32> to vector<4x1xf32>
    %cst_9 = arith.constant 2.560000e+02 : f32
    %42 = vector.broadcast %cst_9 : f32 to vector<4x1xf32>
    %43 = arith.divf %41, %42 : vector<4x1xf32>
    %44 = vector.broadcast %36 : vector<4x1xf32> to vector<4x256xf32>
    %45 = arith.subf %32, %44 : vector<4x256xf32>
    %cst_10 = arith.constant 9.99999974E-6 : f32
    %46 = vector.broadcast %cst_10 : f32 to vector<4x1xf32>
    %47 = arith.addf %43, %46 : vector<4x1xf32>
    %48 = math.rsqrt %47 : vector<4x1xf32>
    %49 = vector.broadcast %48 : vector<4x1xf32> to vector<4x256xf32>
    %50 = arith.mulf %45, %49 : vector<4x256xf32>
    %c0_11 = arith.constant 0 : index
    %c0_12 = arith.constant 0 : index
    %51 = vector.load %arg4[%c0_11, %c0_12] : memref<4x1xf32, #tpu.memory_space<vmem>>, vector<4x1xf32>
    %52 = vector.broadcast %51 : vector<4x1xf32> to vector<4x256xf32>
    %53 = arith.mulf %50, %52 : vector<4x256xf32>
    %c0_13 = arith.constant 0 : index
    %c0_14 = arith.constant 0 : index
    %54 = vector.load %arg5[%c0_13, %c0_14] : memref<4x1xf32, #tpu.memory_space<vmem>>, vector<4x1xf32>
    %55 = vector.broadcast %54 : vector<4x1xf32> to vector<4x256xf32>
    %56 = arith.addf %53, %55 : vector<4x256xf32>
    %cst_15 = arith.constant 0.000000e+00 : f32
    %57 = vector.broadcast %cst_15 : f32 to vector<4x256xf32>
    %58 = arith.maximumf %56, %57 : vector<4x256xf32>
    %59 = vector.shape_cast %58 : vector<4x256xf32> to vector<4x16x16xf32>
    %60 = vector.extract_strided_slice %59 {offsets = [0, 1, 0], sizes = [4, 1, 16], strides = [1, 1, 1]} : vector<4x16x16xf32> to vector<4x1x16xf32>
    %61 = vector.extract_strided_slice %59 {offsets = [0, 14, 0], sizes = [4, 1, 16], strides = [1, 1, 1]} : vector<4x16x16xf32> to vector<4x1x16xf32>
    %62 = tpu.concatenate %60, %59, %61 in 1 : vector<4x1x16xf32>, vector<4x16x16xf32>, vector<4x1x16xf32> -> vector<4x18x16xf32>
    %63 = vector.extract_strided_slice %62 {offsets = [0, 0, 1], sizes = [4, 18, 1], strides = [1, 1, 1]} : vector<4x18x16xf32> to vector<4x18x1xf32>
    %64 = vector.extract_strided_slice %62 {offsets = [0, 0, 14], sizes = [4, 18, 1], strides = [1, 1, 1]} : vector<4x18x16xf32> to vector<4x18x1xf32>
    %65 = tpu.concatenate %63, %62, %64 in 2 : vector<4x18x1xf32>, vector<4x18x16xf32>, vector<4x18x1xf32> -> vector<4x18x18xf32>
    %66 = vector.extract_strided_slice %65 {offsets = [0, 0, 0], sizes = [4, 16, 16], strides = [1, 1, 1]} : vector<4x18x18xf32> to vector<4x16x16xf32>
    %67 = vector.shape_cast %66 : vector<4x16x16xf32> to vector<4x256xf32>
    %68 = vector.extract_strided_slice %65 {offsets = [0, 0, 1], sizes = [4, 16, 16], strides = [1, 1, 1]} : vector<4x18x18xf32> to vector<4x16x16xf32>
    %69 = vector.shape_cast %68 : vector<4x16x16xf32> to vector<4x256xf32>
    %70 = vector.extract_strided_slice %65 {offsets = [0, 0, 2], sizes = [4, 16, 16], strides = [1, 1, 1]} : vector<4x18x18xf32> to vector<4x16x16xf32>
    %71 = vector.shape_cast %70 : vector<4x16x16xf32> to vector<4x256xf32>
    %72 = vector.extract_strided_slice %65 {offsets = [0, 1, 0], sizes = [4, 16, 16], strides = [1, 1, 1]} : vector<4x18x18xf32> to vector<4x16x16xf32>
    %73 = vector.shape_cast %72 : vector<4x16x16xf32> to vector<4x256xf32>
    %74 = vector.extract_strided_slice %65 {offsets = [0, 1, 1], sizes = [4, 16, 16], strides = [1, 1, 1]} : vector<4x18x18xf32> to vector<4x16x16xf32>
    %75 = vector.shape_cast %74 : vector<4x16x16xf32> to vector<4x256xf32>
    %76 = vector.extract_strided_slice %65 {offsets = [0, 1, 2], sizes = [4, 16, 16], strides = [1, 1, 1]} : vector<4x18x18xf32> to vector<4x16x16xf32>
    %77 = vector.shape_cast %76 : vector<4x16x16xf32> to vector<4x256xf32>
    %78 = vector.extract_strided_slice %65 {offsets = [0, 2, 0], sizes = [4, 16, 16], strides = [1, 1, 1]} : vector<4x18x18xf32> to vector<4x16x16xf32>
    %79 = vector.shape_cast %78 : vector<4x16x16xf32> to vector<4x256xf32>
    %80 = vector.extract_strided_slice %65 {offsets = [0, 2, 1], sizes = [4, 16, 16], strides = [1, 1, 1]} : vector<4x18x18xf32> to vector<4x16x16xf32>
    %81 = vector.shape_cast %80 : vector<4x16x16xf32> to vector<4x256xf32>
    %82 = vector.extract_strided_slice %65 {offsets = [0, 2, 2], sizes = [4, 16, 16], strides = [1, 1, 1]} : vector<4x18x18xf32> to vector<4x16x16xf32>
    %83 = vector.shape_cast %82 : vector<4x16x16xf32> to vector<4x256xf32>
    %84 = tpu.concatenate %67, %69, %71, %73, %75, %77, %79, %81, %83 in 0 : vector<4x256xf32>, vector<4x256xf32>, vector<4x256xf32>, vector<4x256xf32>, vector<4x256xf32>, vector<4x256xf32>, vector<4x256xf32>, vector<4x256xf32>, vector<4x256xf32> -> vector<36x256xf32>
    %c0_16 = arith.constant 0 : index
    %c0_17 = arith.constant 0 : index
    %85 = vector.load %arg6[%c0_16, %c0_17] : memref<4x36xf32, #tpu.memory_space<vmem>>, vector<4x36xf32>
    %cst_18 = arith.constant dense<0.000000e+00> : vector<4x256xf32>
    %86 = tpu.matmul %85, %84, %cst_18 {dimension_numbers = #tpu.dot_dimension_numbers<[1], [0], [0], [1], [0, 0, 1, 1], [], []>} : vector<4x36xf32>, vector<36x256xf32>, vector<4x256xf32> -> vector<4x256xf32>
    %c0_19 = arith.constant 0 : index
    %c0_20 = arith.constant 0 : index
    %87 = vector.load %arg7[%c0_19, %c0_20] : memref<4x1xf32, #tpu.memory_space<vmem>>, vector<4x1xf32>
    %88 = vector.broadcast %87 : vector<4x1xf32> to vector<4x256xf32>
    %89 = arith.addf %86, %88 : vector<4x256xf32>
    %cst_21 = arith.constant dense<0.000000e+00> : vector<4xf32>
    %90 = vector.multi_reduction <add>, %89, %cst_21 [1] : vector<4x256xf32> to vector<4xf32>
    %91 = vector.shape_cast %90 : vector<4xf32> to vector<4x1xf32>
    %cst_22 = arith.constant 2.560000e+02 : f32
    %92 = vector.broadcast %cst_22 : f32 to vector<4x1xf32>
    %93 = arith.divf %91, %92 : vector<4x1xf32>
    %94 = vector.broadcast %93 : vector<4x1xf32> to vector<4x256xf32>
    %95 = arith.subf %89, %94 : vector<4x256xf32>
    %96 = arith.mulf %95, %95 : vector<4x256xf32>
    %cst_23 = arith.constant dense<0.000000e+00> : vector<4xf32>
    %97 = vector.multi_reduction <add>, %96, %cst_23 [1] : vector<4x256xf32> to vector<4xf32>
    %98 = vector.shape_cast %97 : vector<4xf32> to vector<4x1xf32>
    %cst_24 = arith.constant 2.560000e+02 : f32
    %99 = vector.broadcast %cst_24 : f32 to vector<4x1xf32>
    %100 = arith.divf %98, %99 : vector<4x1xf32>
    %101 = vector.broadcast %93 : vector<4x1xf32> to vector<4x256xf32>
    %102 = arith.subf %89, %101 : vector<4x256xf32>
    %cst_25 = arith.constant 9.99999974E-6 : f32
    %103 = vector.broadcast %cst_25 : f32 to vector<4x1xf32>
    %104 = arith.addf %100, %103 : vector<4x1xf32>
    %105 = math.rsqrt %104 : vector<4x1xf32>
    %106 = vector.broadcast %105 : vector<4x1xf32> to vector<4x256xf32>
    %107 = arith.mulf %102, %106 : vector<4x256xf32>
    %c0_26 = arith.constant 0 : index
    %c0_27 = arith.constant 0 : index
    %108 = vector.load %arg8[%c0_26, %c0_27] : memref<4x1xf32, #tpu.memory_space<vmem>>, vector<4x1xf32>
    %109 = vector.broadcast %108 : vector<4x1xf32> to vector<4x256xf32>
    %110 = arith.mulf %107, %109 : vector<4x256xf32>
    %c0_28 = arith.constant 0 : index
    %c0_29 = arith.constant 0 : index
    %111 = vector.load %arg9[%c0_28, %c0_29] : memref<4x1xf32, #tpu.memory_space<vmem>>, vector<4x1xf32>
    %112 = vector.broadcast %111 : vector<4x1xf32> to vector<4x256xf32>
    %113 = arith.addf %110, %112 : vector<4x256xf32>
    %114 = arith.addf %113, %1 : vector<4x256xf32>
    %c0_30 = arith.constant 0 : index
    %c0_31 = arith.constant 0 : index
    %c0_32 = arith.constant 0 : index
    %115 = vector.load %arg10[%c0_30, %c0_31, %c0_32] : memref<1x4x256xf32, #tpu.memory_space<vmem>>, vector<1x4x256xf32>
    %116 = vector.shape_cast %115 : vector<1x4x256xf32> to vector<4x256xf32>
    %117 = vector.shape_cast %114 : vector<4x256xf32> to vector<1x4x256xf32>
    tpu.vector_store %arg10[%c0_30, %c0_31, %c0_32], %117 {strides = array<i32>} : memref<1x4x256xf32, #tpu.memory_space<vmem>>, vector<1x4x256xf32>,
    return
  }
  func.func @transform_0(%arg0: i32) -> (i32, i32, i32) {
    %c0_i32 = arith.constant 0 : i32
    %c0_i32_0 = arith.constant 0 : i32
    %c0_i32_1 = arith.constant 0 : i32
    return %arg0, %c0_i32, %c0_i32_0 : i32, i32, i32
  }
  func.func @transform_1(%arg0: i32) -> (i32, i32) {
    %c0_i32 = arith.constant 0 : i32
    %c0_i32_0 = arith.constant 0 : i32
    %c0_i32_1 = arith.constant 0 : i32
    return %c0_i32, %c0_i32_0 : i32, i32
  }
  func.func @transform_2(%arg0: i32) -> (i32, i32) {
    %c0_i32 = arith.constant 0 : i32
    %c0_i32_0 = arith.constant 0 : i32
    %c0_i32_1 = arith.constant 0 : i32
    return %c0_i32, %c0_i32_0 : i32, i32
  }
  func.func @transform_3(%arg0: i32) -> (i32, i32) {
    %c0_i32 = arith.constant 0 : i32
    %c0_i32_0 = arith.constant 0 : i32
    %c0_i32_1 = arith.constant 0 : i32
    return %c0_i32, %c0_i32_0 : i32, i32
  }
  func.func @transform_4(%arg0: i32) -> (i32, i32) {
    %c0_i32 = arith.constant 0 : i32
    %c0_i32_0 = arith.constant 0 : i32
    %c0_i32_1 = arith.constant 0 : i32
    return %c0_i32, %c0_i32_0 : i32, i32
  }
  func.func @transform_5(%arg0: i32) -> (i32, i32) {
    %c0_i32 = arith.constant 0 : i32
    %c0_i32_0 = arith.constant 0 : i32
    %c0_i32_1 = arith.constant 0 : i32
    return %c0_i32, %c0_i32_0 : i32, i32
  }
  func.func @transform_6(%arg0: i32) -> (i32, i32) {
    %c0_i32 = arith.constant 0 : i32
    %c0_i32_0 = arith.constant 0 : i32
    %c0_i32_1 = arith.constant 0 : i32
    return %c0_i32, %c0_i32_0 : i32, i32
  }
  func.func @transform_7(%arg0: i32) -> (i32, i32) {
    %c0_i32 = arith.constant 0 : i32
    %c0_i32_0 = arith.constant 0 : i32
    %c0_i32_1 = arith.constant 0 : i32
    return %c0_i32, %c0_i32_0 : i32, i32
  }
  func.func @transform_8(%arg0: i32) -> (i32, i32) {
    %c0_i32 = arith.constant 0 : i32
    %c0_i32_0 = arith.constant 0 : i32
    %c0_i32_1 = arith.constant 0 : i32
    return %c0_i32, %c0_i32_0 : i32, i32
  }
  func.func @transform_9(%arg0: i32) -> (i32, i32, i32) {
    %c0_i32 = arith.constant 0 : i32
    %c0_i32_0 = arith.constant 0 : i32
    %c0_i32_1 = arith.constant 0 : i32
    return %arg0, %c0_i32, %c0_i32_0 : i32, i32, i32
  }
}

</mosaic_0001>

<llo_original>
// kernel: residual_block.1
$region0: #{residual_block.1}
  #allocation0 [shape = 'u32[]', space=smem, size = 0x4, offset = 0x4, fixed_abs, tag = 'smem constant byte address 0x4 - core index']
  #allocation1 [shape = 'u32[144,128]{1,0:T(1,128)}', space=vmem, size = 0x12000, scoped, tag = 'internal scratch']
  %s0 = inlined_call_operand.vmem [shape: f32[2,4,256], index: 0, kind: input, shape index: {}]
  %s1 = inlined_call_operand.vmem [shape: f32[4,36], index: 1, kind: input, shape index: {}]
  %s2 = inlined_call_operand.vmem [shape: f32[4,1], index: 2, kind: input, shape index: {}]
  %s3 = inlined_call_operand.vmem [shape: f32[4,1], index: 3, kind: input, shape index: {}]
  %s4 = inlined_call_operand.vmem [shape: f32[4,1], index: 4, kind: input, shape index: {}]
  %s5 = inlined_call_operand.vmem [shape: f32[4,36], index: 5, kind: input, shape index: {}]
  %s6 = inlined_call_operand.vmem [shape: f32[4,1], index: 6, kind: input, shape index: {}]
  %s7 = inlined_call_operand.vmem [shape: f32[4,1], index: 7, kind: input, shape index: {}]
  %s8 = inlined_call_operand.vmem [shape: f32[4,1], index: 8, kind: input, shape index: {}]
  %s9 = inlined_call_operand.vmem [shape: f32[2,4,256], index: 9, kind: output, shape index: {}]
  %s10 = sld [smem:[#allocation0]]
  $region69: #{residual_block.1} parent=0
    _
  %s12 = ssub.s32 1, %s10
  %s13 = scalar_select 0, %s12, %s10
  loop: start=0, step=1, limit=4
  $region2: #{residual_block.1} parent=0 // loop_pre_header
    _
  $region3: #{residual_block.1} parent=0 // loop_header
    %s15 = sphi 0, %s19
    %p16 = scmp.ge.s32.totalorder %s15, 4
    %s25 = sphi 0, %s27
    %s28 = sphi 0, %s25
    %s29 = sphi 0, %s28
    %s45 = sphi 0, %s29
    %s49 = sphi 0, %s49
    %s51 = sphi 0, %s49
    %s52 = sphi 0, %s51
    %s66 = sphi 0, %s52
    %s70 = sphi 0, %s70
    %s72 = sphi 0, %s70
    %s73 = sphi 0, %s72
    %s87 = sphi 0, %s73
    %s91 = sphi 0, %s91
    %s93 = sphi 0, %s91
    %s94 = sphi 0, %s93
    %s108 = sphi 0, %s94
    %s112 = sphi 0, %s112
    %s114 = sphi 0, %s112
    %s115 = sphi 0, %s114
    %s129 = sphi 0, %s115
    %s133 = sphi 0, %s133
    %s135 = sphi 0, %s133
    %s136 = sphi 0, %s135
    %s150 = sphi 0, %s136
    %s154 = sphi 0, %s154
    %s156 = sphi 0, %s154
    %s157 = sphi 0, %s156
    %s171 = sphi 0, %s157
    %s175 = sphi 0, %s175
    %s177 = sphi 0, %s175
    %s178 = sphi 0, %s177
    %s192 = sphi 0, %s178
    %s196 = sphi 0, %s196
    %s198 = sphi 0, %s196
    %s199 = sphi 0, %s198
    %s213 = sphi 0, %s199
    %s219 = sphi 0, %s221
    %s222 = sphi 0, %s219
    %s223 = sphi 0, %s222
    %s239 = sphi 0, %s223
  $region4: #{residual_block.1} parent=0 // loop_header_branch
    %18 = sbr.rel (%p16) target = $region8
  $region5: #{residual_block.1} parent=0 // loop_body
    %s20 = ssub.s32 %s15, 1
    %s21 = ssub.s32 %s15, 2
    %s22 = sadd.s32 %s15, 1
    %s23 = ssub.s32 %s15, %s22
    %p24 = scmp.eq.s32.totalorder %s23, 0
    %s26 = sadd.s32 %s25, 1
    %s27 = scalar_select %p24, %s25, %s26
    %p30 = pneg %p24
    %p31 = scmp.eq.s32.totalorder %s15, 1
    %p32 = por %p30, %p31
    %p33 = scmp.ne.s32.totalorder %s25, %s28
    %p34 = scmp.eq.s32.totalorder %s15, 0
    %p35 = por %p33, %p34
    %p36 = scmp.ne.s32.totalorder %s25, %s28
    %p37 = scmp.eq.s32.totalorder %s20, 1
    %p38 = por %p36, %p37
    %p39 = scmp.ne.s32.totalorder %s28, %s29
    %p40 = scmp.eq.s32.totalorder %s20, 0
    %p41 = por %p39, %p40
    %p42 = scmp.ne.s32.totalorder %s28, %s29
    %p43 = scmp.eq.s32.totalorder %s21, 1
    %p44 = por %p42, %p43
    %p46 = scmp.ne.s32.totalorder %s29, %s45
    %p47 = scmp.eq.s32.totalorder %s21, 0
    %p48 = por %p46, %p47
    %s50 = sadd.s32 %s49, 1
    %p53 = scmp.eq.s32.totalorder %s15, 1
    %p54 = scmp.ne.s32.totalorder %s49, %s51
    %p55 = scmp.eq.s32.totalorder %s15, 0
    %p56 = por %p54, %p55
    %p57 = scmp.ne.s32.totalorder %s49, %s51
    %p58 = scmp.eq.s32.totalorder %s20, 1
    %p59 = por %p57, %p58
    %p60 = scmp.ne.s32.totalorder %s51, %s52
    %p61 = scmp.eq.s32.totalorder %s20, 0
    %p62 = por %p60, %p61
    %p63 = scmp.ne.s32.totalorder %s51, %s52
    %p64 = scmp.eq.s32.totalorder %s21, 1
    %p65 = por %p63, %p64
    %p67 = scmp.ne.s32.totalorder %s52, %s66
    %p68 = scmp.eq.s32.totalorder %s21, 0
    %p69 = por %p67, %p68
    %s71 = sadd.s32 %s70, 1
    %p74 = scmp.eq.s32.totalorder %s15, 1
    %p75 = scmp.ne.s32.totalorder %s70, %s72
    %p76 = scmp.eq.s32.totalorder %s15, 0
    %p77 = por %p75, %p76
    %p78 = scmp.ne.s32.totalorder %s70, %s72
    %p79 = scmp.eq.s32.totalorder %s20, 1
    %p80 = por %p78, %p79
    %p81 = scmp.ne.s32.totalorder %s72, %s73
    %p82 = scmp.eq.s32.totalorder %s20, 0
    %p83 = por %p81, %p82
    %p84 = scmp.ne.s32.totalorder %s72, %s73
    %p85 = scmp.eq.s32.totalorder %s21, 1
    %p86 = por %p84, %p85
    %p88 = scmp.ne.s32.totalorder %s73, %s87
    %p89 = scmp.eq.s32.totalorder %s21, 0
    %p90 = por %p88, %p89
    %s92 = sadd.s32 %s91, 1
    %p95 = scmp.eq.s32.totalorder %s15, 1
    %p96 = scmp.ne.s32.totalorder %s91, %s93
    %p97 = scmp.eq.s32.totalorder %s15, 0
    %p98 = por %p96, %p97
    %p99 = scmp.ne.s32.totalorder %s91, %s93
    %p100 = scmp.eq.s32.totalorder %s20, 1
    %p101 = por %p99, %p100
    %p102 = scmp.ne.s32.totalorder %s93, %s94
    %p103 = scmp.eq.s32.totalorder %s20, 0
    %p104 = por %p102, %p103
    %p105 = scmp.ne.s32.totalorder %s93, %s94
    %p106 = scmp.eq.s32.totalorder %s21, 1
    %p107 = por %p105, %p106
    %p109 = scmp.ne.s32.totalorder %s94, %s108
    %p110 = scmp.eq.s32.totalorder %s21, 0
    %p111 = por %p109, %p110
    %s113 = sadd.s32 %s112, 1
    %p116 = scmp.eq.s32.totalorder %s15, 1
    %p117 = scmp.ne.s32.totalorder %s112, %s114
    %p118 = scmp.eq.s32.totalorder %s15, 0
    %p119 = por %p117, %p118
    %p120 = scmp.ne.s32.totalorder %s112, %s114
    %p121 = scmp.eq.s32.totalorder %s20, 1
    %p122 = por %p120, %p121
    %p123 = scmp.ne.s32.totalorder %s114, %s115
    %p124 = scmp.eq.s32.totalorder %s20, 0
    %p125 = por %p123, %p124
    %p126 = scmp.ne.s32.totalorder %s114, %s115
    %p127 = scmp.eq.s32.totalorder %s21, 1
    %p128 = por %p126, %p127
    %p130 = scmp.ne.s32.totalorder %s115, %s129
    %p131 = scmp.eq.s32.totalorder %s21, 0
    %p132 = por %p130, %p131
    %s134 = sadd.s32 %s133, 1
    %p137 = scmp.eq.s32.totalorder %s15, 1
    %p138 = scmp.ne.s32.totalorder %s133, %s135
    %p139 = scmp.eq.s32.totalorder %s15, 0
    %p140 = por %p138, %p139
    %p141 = scmp.ne.s32.totalorder %s133, %s135
    %p142 = scmp.eq.s32.totalorder %s20, 1
    %p143 = por %p141, %p142
    %p144 = scmp.ne.s32.totalorder %s135, %s136
    %p145 = scmp.eq.s32.totalorder %s20, 0
    %p146 = por %p144, %p145
    %p147 = scmp.ne.s32.totalorder %s135, %s136
    %p148 = scmp.eq.s32.totalorder %s21, 1
    %p149 = por %p147, %p148
    %p151 = scmp.ne.s32.totalorder %s136, %s150
    %p152 = scmp.eq.s32.totalorder %s21, 0
    %p153 = por %p151, %p152
    %s155 = sadd.s32 %s154, 1
    %p158 = scmp.eq.s32.totalorder %s15, 1
    %p159 = scmp.ne.s32.totalorder %s154, %s156
    %p160 = scmp.eq.s32.totalorder %s15, 0
    %p161 = por %p159, %p160
    %p162 = scmp.ne.s32.totalorder %s154, %s156
    %p163 = scmp.eq.s32.totalorder %s20, 1
    %p164 = por %p162, %p163
    %p165 = scmp.ne.s32.totalorder %s156, %s157
    %p166 = scmp.eq.s32.totalorder %s20, 0
    %p167 = por %p165, %p166
    %p168 = scmp.ne.s32.totalorder %s156, %s157
    %p169 = scmp.eq.s32.totalorder %s21, 1
    %p170 = por %p168, %p169
    %p172 = scmp.ne.s32.totalorder %s157, %s171
    %p173 = scmp.eq.s32.totalorder %s21, 0
    %p174 = por %p172, %p173
    %s176 = sadd.s32 %s175, 1
    %p179 = scmp.eq.s32.totalorder %s15, 1
    %p180 = scmp.ne.s32.totalorder %s175, %s177
    %p181 = scmp.eq.s32.totalorder %s15, 0
    %p182 = por %p180, %p181
    %p183 = scmp.ne.s32.totalorder %s175, %s177
    %p184 = scmp.eq.s32.totalorder %s20, 1
    %p185 = por %p183, %p184
    %p186 = scmp.ne.s32.totalorder %s177, %s178
    %p187 = scmp.eq.s32.totalorder %s20, 0
    %p188 = por %p186, %p187
    %p189 = scmp.ne.s32.totalorder %s177, %s178
    %p190 = scmp.eq.s32.totalorder %s21, 1
    %p191 = por %p189, %p190
    %p193 = scmp.ne.s32.totalorder %s178, %s192
    %p194 = scmp.eq.s32.totalorder %s21, 0
    %p195 = por %p193, %p194
    %s197 = sadd.s32 %s196, 1
    %p200 = scmp.eq.s32.totalorder %s15, 1
    %p201 = scmp.ne.s32.totalorder %s196, %s198
    %p202 = scmp.eq.s32.totalorder %s15, 0
    %p203 = por %p201, %p202
    %p204 = scmp.ne.s32.totalorder %s196, %s198
    %p205 = scmp.eq.s32.totalorder %s20, 1
    %p206 = por %p204, %p205
    %p207 = scmp.ne.s32.totalorder %s198, %s199
    %p208 = scmp.eq.s32.totalorder %s20, 0
    %p209 = por %p207, %p208
    %p210 = scmp.ne.s32.totalorder %s198, %s199
    %p211 = scmp.eq.s32.totalorder %s21, 1
    %p212 = por %p210, %p211
    %p214 = scmp.ne.s32.totalorder %s199, %s213
    %p215 = scmp.eq.s32.totalorder %s21, 0
    %p216 = por %p214, %p215
    %s217 = ssub.s32 %s15, %s22
    %p218 = scmp.eq.s32.totalorder %s217, 0
    %s220 = sadd.s32 %s219, 1
    %s221 = scalar_select %p218, %s219, %s220
    %p224 = pneg %p218
    %p225 = scmp.eq.s32.totalorder %s15, 1
    %p226 = por %p224, %p225
    %p227 = scmp.ne.s32.totalorder %s219, %s222
    %p228 = scmp.eq.s32.totalorder %s15, 0
    %p229 = por %p227, %p228
    %p230 = scmp.ne.s32.totalorder %s219, %s222
    %p231 = scmp.eq.s32.totalorder %s20, 1
    %p232 = por %p230, %p231
    %p233 = scmp.ne.s32.totalorder %s222, %s223
    %p234 = scmp.eq.s32.totalorder %s20, 0
    %p235 = por %p233, %p234
    %p236 = scmp.ne.s32.totalorder %s222, %s223
    %p237 = scmp.eq.s32.totalorder %s21, 1
    %p238 = por %p236, %p237
    %p240 = scmp.ne.s32.totalorder %s223, %s239
    %p241 = scmp.eq.s32.totalorder %s21, 0
    %p242 = por %p240, %p241
    %p243 = scmp.le.s32.totalorder 1, %s15
    %p244 = scmp.lt.s32.totalorder %s15, 3
    %p245 = pnand %p243, %p244
    %p246 = pneg %p245
    // Predicated region
    $region9: #{residual_block.1} parent=5 // pred_check
      _
    $region10: #{residual_block.1} parent=5 // pred_check_branch
      %248 = sbr.rel (%p245) target = $region12
    $region11: #{residual_block.1} parent=5 // pred_region
      %s249 = ssub.s32 %s15, 1
      // Predicated region
      $region13: #{residual_block.1} parent=11 // pred_check
        %p250 = pneg %p62
      $region14: #{residual_block.1} parent=11 // pred_check_branch
        %252 = sbr.rel (%p250) target = $region16
      $region15: #{residual_block.1} parent=11 // pred_region
        _
      $region16: #{residual_block.1} parent=11 // pred_fallthru
        _
      // Predicated region
      $region17: #{residual_block.1} parent=11 // pred_check
        %p253 = pneg %p83
      $region18: #{residual_block.1} parent=11 // pred_check_branch
        %255 = sbr.rel (%p253) target = $region20
      $region19: #{residual_block.1} parent=11 // pred_region
        _
      $region20: #{residual_block.1} parent=11 // pred_fallthru
        _
      // Predicated region
      $region21: #{residual_block.1} parent=11 // pred_check
        %p256 = pneg %p104
      $region22: #{residual_block.1} parent=11 // pred_check_branch
        %258 = sbr.rel (%p256) target = $region24
      $region23: #{residual_block.1} parent=11 // pred_region
        _
      $region24: #{residual_block.1} parent=11 // pred_fallthru
        _
      // Predicated region
      $region25: #{residual_block.1} parent=11 // pred_check
        %p259 = pneg %p125
      $region26: #{residual_block.1} parent=11 // pred_check_branch
        %261 = sbr.rel (%p259) target = $region28
      $region27: #{residual_block.1} parent=11 // pred_region
        _
      $region28: #{residual_block.1} parent=11 // pred_fallthru
        _
      // Predicated region
      $region29: #{residual_block.1} parent=11 // pred_check
        %p262 = pneg %p146
      $region30: #{residual_block.1} parent=11 // pred_check_branch
        %264 = sbr.rel (%p262) target = $region32
      $region31: #{residual_block.1} parent=11 // pred_region
        _
      $region32: #{residual_block.1} parent=11 // pred_fallthru
        _
      // Predicated region
      $region33: #{residual_block.1} parent=11 // pred_check
        %p265 = pneg %p167
      $region34: #{residual_block.1} parent=11 // pred_check_branch
        %267 = sbr.rel (%p265) target = $region36
      $region35: #{residual_block.1} parent=11 // pred_region
        _
      $region36: #{residual_block.1} parent=11 // pred_fallthru
        _
      // Predicated region
      $region37: #{residual_block.1} parent=11 // pred_check
        %p268 = pneg %p188
      $region38: #{residual_block.1} parent=11 // pred_check_branch
        %270 = sbr.rel (%p268) target = $region40
      $region39: #{residual_block.1} parent=11 // pred_region
        _
      $region40: #{residual_block.1} parent=11 // pred_fallthru
        _
      // Predicated region
      $region41: #{residual_block.1} parent=11 // pred_check
        %p271 = pneg %p209
      $region42: #{residual_block.1} parent=11 // pred_check_branch
        %273 = sbr.rel (%p271) target = $region44
      $region43: #{residual_block.1} parent=11 // pred_region
        _
      $region44: #{residual_block.1} parent=11 // pred_fallthru
        _
    $region12: #{residual_block.1} parent=5 // pred_fallthru
      _
    %p274 = scmp.lt.s32.totalorder %s15, 2
    // Predicated region
    $region45: #{residual_block.1} parent=5 // pred_check
      %p275 = pneg %p274
    $region46: #{residual_block.1} parent=5 // pred_check_branch
      %277 = sbr.rel (%p275) target = $region48
    $region47: #{residual_block.1} parent=5 // pred_region
      // Predicated region
      $region49: #{residual_block.1} parent=47 // pred_check
        %p278 = pneg %p35
      $region50: #{residual_block.1} parent=47 // pred_check_branch
        %280 = sbr.rel (%p278) target = $region52
      $region51: #{residual_block.1} parent=47 // pred_region
        %p281 = scmp.lt.s32.totalorder %s15, 1
        %s282 = scalar_select %p281, %s15, 1
        %s283 = smul.addr %s282, 2
        %s284 = smul.addr %s283, 4
        %s285 = scalar_lea.vmem %s0, %s284
      $region52: #{residual_block.1} parent=47 // pred_fallthru
        _
    $region48: #{residual_block.1} parent=5 // pred_fallthru
      _
    %p286 = scmp.le.s32.totalorder 1, %s15
    %p287 = scmp.lt.s32.totalorder %s15, 3
    %p288 = pnand %p286, %p287
    %p289 = pneg %p288
    // Predicated region
    $region53: #{residual_block.1} parent=5 // pred_check
      _
    $region54: #{residual_block.1} parent=5 // pred_check_branch
      %291 = sbr.rel (%p288) target = $region56
    $region55: #{residual_block.1} parent=5 // pred_region
      %s292 = ssub.s32 %s15, 1
      %p293 = scmp.lt.s32.totalorder %s20, 1
      %s294 = scalar_select %p293, %s20, 1
      %s295 = smul.addr %s294, 2
      %s296 = smul.addr %s295, 4
      %s297 = scalar_lea.vmem %s0, %s296
      %p298 = pneg %p41
      %p299 = pneg %p38
      %p300 = pneg %p62
      %p301 = pneg %p59
      %p302 = pneg %p83
      %p303 = pneg %p80
      %p304 = pneg %p104
      %p305 = pneg %p101
      %p306 = pneg %p125
      %p307 = pneg %p122
      %p308 = pneg %p146
      %p309 = pneg %p143
      %p310 = pneg %p167
      %p311 = pneg %p164
      %p312 = pneg %p188
      %p313 = pneg %p185
      %p314 = pneg %p209
      %p315 = pneg %p206
      %p316 = pneg %p235
      %p317 = pneg %p232
      %p318 = scmp.lt.s32.totalorder %s20, 1
      %s319 = scalar_select %p318, %s20, 1
      %s320 = smul.addr %s319, 2
      %s321 = smul.addr %s320, 4
      %s322 = scalar_lea.vmem %s9, %s321
      %p323 = scmp.lt.s32.totalorder %s20, 1
      %s324 = scalar_select %p323, %s20, 1
      %s325 = smul.addr %s324, 2
      %s326 = smul.addr %s325, 4
      %s327 = scalar_lea.vmem %s0, %s326
      %p328 = scmp.lt.s32.totalorder %s20, 1
      %s329 = scalar_select %p328, %s20, 1
      %s330 = smul.addr %s329, 2
      %s331 = smul.addr %s330, 4
      %s332 = scalar_lea.vmem %s9, %s331
      %v333 = vld [vmem:[%s327] sm:$0xff]
      %v335 = vrot.slane %v333, 4
      %337 = vrot.lane.b32.xlu0 %v333, 112
      %v338 = vpop.permute.xlu0 %337
      %v339 = vrot.slane %v338, 4
      %341 = vrot.lane.b32.xlu0 %v333, 96
      %v342 = vpop.permute.xlu0 %341
      %v343 = vrot.slane %v342, 4
      %345 = vrot.lane.b32.xlu0 %v333, 80
      %v346 = vpop.permute.xlu0 %345
      %v347 = vrot.slane %v346, 4
      %349 = vrot.lane.b32.xlu0 %v333, 64
      %v350 = vpop.permute.xlu0 %349
      %v351 = vrot.slane %v350, 4
      %353 = vrot.lane.b32.xlu0 %v333, 48
      %v354 = vpop.permute.xlu0 %353
      %v355 = vrot.slane %v354, 4
      %357 = vrot.lane.b32.xlu0 %v333, 32
      %v358 = vpop.permute.xlu0 %357
      %v359 = vrot.slane %v358, 4
      %361 = vrot.lane.b32.xlu0 %v333, 16
      %v362 = vpop.permute.xlu0 %361
      %v363 = vrot.slane %v362, 4
      %v372 = vcombine.low %v333, %v342
      %v374 = vunpack.c.l.s4 1983009808
      %v375 = vunpack.c.0.s8 %v374
      %v376 = vlaneseq
      %v377 = vshrl.u32 %v376, 7
      %v378 = vsub.s32 %v375, %v377
      %v379 = vrot.slane %v372, %v378
      %v380 = vcombine.low %v338, %v346
      %v382 = vunpack.c.l.s4 1983009808
      %v383 = vunpack.c.0.s8 %v382
      %v384 = vlaneseq
      %v385 = vshrl.u32 %v384, 7
      %v386 = vsub.s32 %v383, %v385
      %v387 = vrot.slane %v380, %v386
      %v388 = vcombine.low %v379, %v387
      %v389 = vcombine.high %v379, %v387
      %v391 = vunpack.c.l.s4 1934713408
      %v392 = vunpack.c.0.s8 %v391
      %v393 = vlaneseq
      %v394 = vshrl.u32 %v393, 7
      %v395 = vsub.s32 %v392, %v394
      %v396 = vrot.slane %v388, %v395
      %v398 = vunpack.c.l.s4 1934713408
      %v399 = vunpack.c.0.s8 %v398
      %v400 = vlaneseq
      %v401 = vshrl.u32 %v400, 7
      %v402 = vsub.s32 %v399, %v401
      %v403 = vrot.slane %v389, %v402
      %v404 = vcombine.high %v396, 0.0
      %v405 = vcombine.high %v403, 0.0
      %v406 = vcombine.low %v350, %v358
      %v408 = vunpack.c.l.s4 1983009808
      %v409 = vunpack.c.0.s8 %v408
      %v410 = vlaneseq
      %v411 = vshrl.u32 %v410, 7
      %v412 = vsub.s32 %v409, %v411
      %v413 = vrot.slane %v406, %v412
      %v414 = vcombine.low %v354, %v362
      %v416 = vunpack.c.l.s4 1983009808
      %v417 = vunpack.c.0.s8 %v416
      %v418 = vlaneseq
      %v419 = vshrl.u32 %v418, 7
      %v420 = vsub.s32 %v417, %v419
      %v421 = vrot.slane %v414, %v420
      %v422 = vcombine.low %v413, %v421
      %v423 = vcombine.high %v413, %v421
      %v425 = vunpack.c.l.s4 1934713408
      %v426 = vunpack.c.0.s8 %v425
      %v427 = vlaneseq
      %v428 = vshrl.u32 %v427, 7
      %v429 = vsub.s32 %v426, %v428
      %v430 = vrot.slane %v422, %v429
      %v432 = vunpack.c.l.s4 1934713408
      %v433 = vunpack.c.0.s8 %v432
      %v434 = vlaneseq
      %v435 = vshrl.u32 %v434, 7
      %v436 = vsub.s32 %v433, %v435
      %v437 = vrot.slane %v423, %v436
      %v438 = vcombine.high %v430, 0.0
      %v439 = vcombine.high %v437, 0.0
      %v440 = vcombine.low %v335, %v343
      %v442 = vunpack.c.l.s4 1983009808
      %v443 = vunpack.c.0.s8 %v442
      %v444 = vlaneseq
      %v445 = vshrl.u32 %v444, 7
      %v446 = vsub.s32 %v443, %v445
      %v447 = vrot.slane %v440, %v446
      %v448 = vcombine.low %v339, %v347
      %v450 = vunpack.c.l.s4 1983009808
      %v451 = vunpack.c.0.s8 %v450
      %v452 = vlaneseq
      %v453 = vshrl.u32 %v452, 7
      %v454 = vsub.s32 %v451, %v453
      %v455 = vrot.slane %v448, %v454
      %v456 = vcombine.low %v447, %v455
      %v457 = vcombine.high %v447, %v455
      %v459 = vunpack.c.l.s4 1934713408
      %v460 = vunpack.c.0.s8 %v459
      %v461 = vlaneseq
      %v462 = vshrl.u32 %v461, 7
      %v463 = vsub.s32 %v460, %v462
      %v464 = vrot.slane %v456, %v463
      %v466 = vunpack.c.l.s4 1934713408
      %v467 = vunpack.c.0.s8 %v466
      %v468 = vlaneseq
      %v469 = vshrl.u32 %v468, 7
      %v470 = vsub.s32 %v467, %v469
      %v471 = vrot.slane %v457, %v470
      %v472 = vcombine.high %v464, 0.0
      %v473 = vcombine.high %v471, 0.0
      %v474 = vcombine.low %v351, %v359
      %v476 = vunpack.c.l.s4 1983009808
      %v477 = vunpack.c.0.s8 %v476
      %v478 = vlaneseq
      %v479 = vshrl.u32 %v478, 7
      %v480 = vsub.s32 %v477, %v479
      %v481 = vrot.slane %v474, %v480
      %v482 = vcombine.low %v355, %v363
      %v484 = vunpack.c.l.s4 1983009808
      %v485 = vunpack.c.0.s8 %v484
      %v486 = vlaneseq
      %v487 = vshrl.u32 %v486, 7
      %v488 = vsub.s32 %v485, %v487
      %v489 = vrot.slane %v482, %v488
      %v490 = vcombine.low %v481, %v489
      %v491 = vcombine.high %v481, %v489
      %v493 = vunpack.c.l.s4 1934713408
      %v494 = vunpack.c.0.s8 %v493
      %v495 = vlaneseq
      %v496 = vshrl.u32 %v495, 7
      %v497 = vsub.s32 %v494, %v496
      %v498 = vrot.slane %v490, %v497
      %v500 = vunpack.c.l.s4 1934713408
      %v501 = vunpack.c.0.s8 %v500
      %v502 = vlaneseq
      %v503 = vshrl.u32 %v502, 7
      %v504 = vsub.s32 %v501, %v503
      %v505 = vrot.slane %v491, %v504
      %v506 = vcombine.high %v498, 0.0
      %v507 = vcombine.high %v505, 0.0
      %v512 = vlaneseq
      %v513 = vshrl.u32 %v512, 7
      %v514 = vsub.s32 1, %v513
      %v515 = vrot.slane %v396, %v514
      %v516 = vlaneseq
      %v517 = vshrl.u32 %v516, 7
      %v518 = vsub.s32 1, %v517
      %v519 = vrot.slane %v404, %v518
      %v520 = vlaneseq
      %v521 = vshrl.u32 %v520, 7
      %v522 = vsub.s32 1, %v521
      %v523 = vrot.slane %v403, %v522
      %v524 = vlaneseq
      %v525 = vshrl.u32 %v524, 7
      %v526 = vsub.s32 1, %v525
      %v527 = vrot.slane %v405, %v526
      %v544 = vcombine.low %v396, %v430
      %v545 = vcombine.low %v464, %v498
      %v546 = vcombine.low %v404, %v438
      %v547 = vcombine.low %v472, %v506
      %v548 = vcombine.low %v403, %v437
      %v549 = vcombine.low %v471, %v505
      %v550 = vcombine.low %v405, %v439
      %v551 = vcombine.low %v473, %v507
      %vm552 = vcmask 1040384
      %v553 = vrot.slane %v544, 7
      %v554 = vrot.slane %v545, 7
      %v555 = vsel %vm552, %v553, %v554
      %v556 = vrot.slane %v546, 7
      %v557 = vrot.slane %v547, 7
      %v558 = vsel %vm552, %v556, %v557
      %v559 = vrot.slane %v548, 7
      %v560 = vrot.slane %v549, 7
      %v561 = vsel %vm552, %v559, %v560
      %v562 = vrot.slane %v550, 7
      %v563 = vrot.slane %v551, 7
      %v564 = vsel %vm552, %v562, %v563
      %v573 = vlaneseq
      %v574 = vshrl.u32 %v573, 7
      %v575 = vsub.s32 2, %v574
      %v576 = vrot.slane %v498, %v575
      %v577 = vlaneseq
      %v578 = vshrl.u32 %v577, 7
      %v579 = vsub.s32 2, %v578
      %v580 = vrot.slane %v506, %v579
      %v581 = vlaneseq
      %v582 = vshrl.u32 %v581, 7
      %v583 = vsub.s32 2, %v582
      %v584 = vrot.slane %v505, %v583
      %v585 = vlaneseq
      %v586 = vshrl.u32 %v585, 7
      %v587 = vsub.s32 2, %v586
      %v588 = vrot.slane %v507, %v587
      %v593 = vsel %vm552, %v515, %v553
      %v594 = vsel %vm552, %v519, %v556
      %v595 = vsel %vm552, %v523, %v559
      %v596 = vsel %vm552, %v527, %v562
      %v597 = vsel %vm552, %v554, %v576
      %v598 = vsel %vm552, %v557, %v580
      %v599 = vsel %vm552, %v560, %v584
      %v600 = vsel %vm552, %v563, %v588
      %609 = vrot.lane.b32.xlu0 %v593, 127
      %v610 = vpop.permute.xlu0 %609
      %611 = vrot.lane.b32.xlu0 %v555, 127
      %v612 = vpop.permute.xlu0 %611
      %613 = vrot.lane.b32.xlu0 %v597, 127
      %v614 = vpop.permute.xlu0 %613
      %615 = vrot.lane.b32.xlu0 %v594, 127
      %v616 = vpop.permute.xlu0 %615
      %617 = vrot.lane.b32.xlu0 %v558, 127
      %v618 = vpop.permute.xlu0 %617
      %619 = vrot.lane.b32.xlu0 %v598, 127
      %v620 = vpop.permute.xlu0 %619
      %621 = vrot.lane.b32.xlu0 %v595, 127
      %v622 = vpop.permute.xlu0 %621
      %623 = vrot.lane.b32.xlu0 %v561, 127
      %v624 = vpop.permute.xlu0 %623
      %625 = vrot.lane.b32.xlu0 %v599, 127
      %v626 = vpop.permute.xlu0 %625
      %627 = vrot.lane.b32.xlu0 %v596, 127
      %v628 = vpop.permute.xlu0 %627
      %629 = vrot.lane.b32.xlu0 %v564, 127
      %v630 = vpop.permute.xlu0 %629
      %631 = vrot.lane.b32.xlu0 %v600, 127
      %v632 = vpop.permute.xlu0 %631
      %645 = vrot.lane.b32.xlu0 %v593, 1
      %v646 = vpop.permute.xlu0 %645
      %647 = vrot.lane.b32.xlu0 %v555, 1
      %v648 = vpop.permute.xlu0 %647
      %649 = vrot.lane.b32.xlu0 %v597, 1
      %v650 = vpop.permute.xlu0 %649
      %651 = vrot.lane.b32.xlu0 %v594, 1
      %v652 = vpop.permute.xlu0 %651
      %653 = vrot.lane.b32.xlu0 %v558, 1
      %v654 = vpop.permute.xlu0 %653
      %655 = vrot.lane.b32.xlu0 %v598, 1
      %v656 = vpop.permute.xlu0 %655
      %657 = vrot.lane.b32.xlu0 %v595, 1
      %v658 = vpop.permute.xlu0 %657
      %659 = vrot.lane.b32.xlu0 %v561, 1
      %v660 = vpop.permute.xlu0 %659
      %661 = vrot.lane.b32.xlu0 %v599, 1
      %v662 = vpop.permute.xlu0 %661
      %663 = vrot.lane.b32.xlu0 %v596, 1
      %v664 = vpop.permute.xlu0 %663
      %665 = vrot.lane.b32.xlu0 %v564, 1
      %v666 = vpop.permute.xlu0 %665
      %667 = vrot.lane.b32.xlu0 %v600, 1
      %v668 = vpop.permute.xlu0 %667
      %681 = vrot.lane.b32.xlu0 %v593, 3
      %v682 = vpop.permute.xlu0 %681
      %683 = vrot.lane.b32.xlu0 %v555, 3
      %v684 = vpop.permute.xlu0 %683
      %685 = vrot.lane.b32.xlu0 %v597, 3
      %v686 = vpop.permute.xlu0 %685
      %687 = vrot.lane.b32.xlu0 %v594, 3
      %v688 = vpop.permute.xlu0 %687
      %689 = vrot.lane.b32.xlu0 %v558, 3
      %v690 = vpop.permute.xlu0 %689
      %691 = vrot.lane.b32.xlu0 %v598, 3
      %v692 = vpop.permute.xlu0 %691
      %693 = vrot.lane.b32.xlu0 %v595, 3
      %v694 = vpop.permute.xlu0 %693
      %695 = vrot.lane.b32.xlu0 %v561, 3
      %v696 = vpop.permute.xlu0 %695
      %697 = vrot.lane.b32.xlu0 %v599, 3
      %v698 = vpop.permute.xlu0 %697
      %699 = vrot.lane.b32.xlu0 %v596, 3
      %v700 = vpop.permute.xlu0 %699
      %701 = vrot.lane.b32.xlu0 %v564, 3
      %v702 = vpop.permute.xlu0 %701
      %703 = vrot.lane.b32.xlu0 %v600, 3
      %v704 = vpop.permute.xlu0 %703
      %vm717 = vcmask 7168
      %v718 = vsel %vm717, %v610, %v646
      %v719 = vsel %vm717, %v612, %v648
      %v720 = vsel %vm717, %v614, %v650
      %v721 = vsel %vm717, %v616, %v652
      %v722 = vsel %vm717, %v618, %v654
      %v723 = vsel %vm717, %v620, %v656
      %v724 = vsel %vm717, %v622, %v658
      %v725 = vsel %vm717, %v624, %v660
      %v726 = vsel %vm717, %v626, %v662
      %v727 = vsel %vm717, %v628, %v664
      %v728 = vsel %vm717, %v630, %v666
      %v729 = vsel %vm717, %v632, %v668
      %vm730 = vcmask 138240
      %v731 = vsel %vm730, %v718, %v682
      %v732 = vsel %vm730, %v719, %v684
      %v733 = vsel %vm730, %v720, %v686
      %v734 = vsel %vm730, %v721, %v688
      %v735 = vsel %vm730, %v722, %v690
      %v736 = vsel %vm730, %v723, %v692
      %v737 = vsel %vm730, %v724, %v694
      %v738 = vsel %vm730, %v725, %v696
      %v739 = vsel %vm730, %v726, %v698
      %v740 = vsel %vm730, %v727, %v700
      %v741 = vsel %vm730, %v728, %v702
      %v742 = vsel %vm730, %v729, %v704
      %v743 = vcombine.low %v731, %v737
      %v744 = vcombine.high %v731, %v737
      %v746 = vunpack.c.l.s4 1983009808
      %v747 = vunpack.c.0.s8 %v746
      %v748 = vlaneseq
      %v749 = vshrl.u32 %v748, 7
      %v750 = vsub.s32 %v747, %v749
      %v751 = vrot.slane %v743, %v750
      %v753 = vunpack.c.l.s4 1983009808
      %v754 = vunpack.c.0.s8 %v753
      %v755 = vlaneseq
      %v756 = vshrl.u32 %v755, 7
      %v757 = vsub.s32 %v754, %v756
      %v758 = vrot.slane %v744, %v757
      %v759 = vcombine.low %v734, %v740
      %v760 = vcombine.high %v734, %v740
      %v762 = vunpack.c.l.s4 1983009808
      %v763 = vunpack.c.0.s8 %v762
      %v764 = vlaneseq
      %v765 = vshrl.u32 %v764, 7
      %v766 = vsub.s32 %v763, %v765
      %v767 = vrot.slane %v759, %v766
      %v769 = vunpack.c.l.s4 1983009808
      %v770 = vunpack.c.0.s8 %v769
      %v771 = vlaneseq
      %v772 = vshrl.u32 %v771, 7
      %v773 = vsub.s32 %v770, %v772
      %v774 = vrot.slane %v760, %v773
      %v775 = vcombine.low %v751, %v767
      %v776 = vcombine.high %v751, %v767
      %v778 = vunpack.c.l.s4 1934713408
      %v779 = vunpack.c.0.s8 %v778
      %v780 = vlaneseq
      %v781 = vshrl.u32 %v780, 7
      %v782 = vsub.s32 %v779, %v781
      %v783 = vrot.slane %v775, %v782
      %v785 = vunpack.c.l.s4 1934713408
      %v786 = vunpack.c.0.s8 %v785
      %v787 = vlaneseq
      %v788 = vshrl.u32 %v787, 7
      %v789 = vsub.s32 %v786, %v788
      %v790 = vrot.slane %v776, %v789
      %v791 = vcombine.low %v758, %v774
      %v792 = vcombine.high %v758, %v774
      %v794 = vunpack.c.l.s4 1934713408
      %v795 = vunpack.c.0.s8 %v794
      %v796 = vlaneseq
      %v797 = vshrl.u32 %v796, 7
      %v798 = vsub.s32 %v795, %v797
      %v799 = vrot.slane %v791, %v798
      %v801 = vunpack.c.l.s4 1934713408
      %v802 = vunpack.c.0.s8 %v801
      %v803 = vlaneseq
      %v804 = vshrl.u32 %v803, 7
      %v805 = vsub.s32 %v802, %v804
      %v806 = vrot.slane %v792, %v805
      %v807 = vcombine.high %v783, 0.0
      %v808 = vcombine.high %v790, 0.0
      %v809 = vcombine.high %v799, 0.0
      %v810 = vcombine.high %v806, 0.0
      %v811 = vcombine.low %v732, %v738
      %v812 = vcombine.high %v732, %v738
      %v814 = vunpack.c.l.s4 1983009808
      %v815 = vunpack.c.0.s8 %v814
      %v816 = vlaneseq
      %v817 = vshrl.u32 %v816, 7
      %v818 = vsub.s32 %v815, %v817
      %v819 = vrot.slane %v811, %v818
      %v821 = vunpack.c.l.s4 1983009808
      %v822 = vunpack.c.0.s8 %v821
      %v823 = vlaneseq
      %v824 = vshrl.u32 %v823, 7
      %v825 = vsub.s32 %v822, %v824
      %v826 = vrot.slane %v812, %v825
      %v827 = vcombine.low %v735, %v741
      %v828 = vcombine.high %v735, %v741
      %v830 = vunpack.c.l.s4 1983009808
      %v831 = vunpack.c.0.s8 %v830
      %v832 = vlaneseq
      %v833 = vshrl.u32 %v832, 7
      %v834 = vsub.s32 %v831, %v833
      %v835 = vrot.slane %v827, %v834
      %v837 = vunpack.c.l.s4 1983009808
      %v838 = vunpack.c.0.s8 %v837
      %v839 = vlaneseq
      %v840 = vshrl.u32 %v839, 7
      %v841 = vsub.s32 %v838, %v840
      %v842 = vrot.slane %v828, %v841
      %v843 = vcombine.low %v819, %v835
      %v844 = vcombine.high %v819, %v835
      %v846 = vunpack.c.l.s4 1934713408
      %v847 = vunpack.c.0.s8 %v846
      %v848 = vlaneseq
      %v849 = vshrl.u32 %v848, 7
      %v850 = vsub.s32 %v847, %v849
      %v851 = vrot.slane %v843, %v850
      %v853 = vunpack.c.l.s4 1934713408
      %v854 = vunpack.c.0.s8 %v853
      %v855 = vlaneseq
      %v856 = vshrl.u32 %v855, 7
      %v857 = vsub.s32 %v854, %v856
      %v858 = vrot.slane %v844, %v857
      %v859 = vcombine.low %v826, %v842
      %v860 = vcombine.high %v826, %v842
      %v862 = vunpack.c.l.s4 1934713408
      %v863 = vunpack.c.0.s8 %v862
      %v864 = vlaneseq
      %v865 = vshrl.u32 %v864, 7
      %v866 = vsub.s32 %v863, %v865
      %v867 = vrot.slane %v859, %v866
      %v869 = vunpack.c.l.s4 1934713408
      %v870 = vunpack.c.0.s8 %v869
      %v871 = vlaneseq
      %v872 = vshrl.u32 %v871, 7
      %v873 = vsub.s32 %v870, %v872
      %v874 = vrot.slane %v860, %v873
      %v875 = vcombine.high %v851, 0.0
      %v876 = vcombine.high %v858, 0.0
      %v877 = vcombine.high %v867, 0.0
      %v878 = vcombine.high %v874, 0.0
      %880 = vrot.lane.b32.xlu0 %v807, 16
      %v881 = vpop.permute.xlu0 %880
      %884 = vrot.lane.b32.xlu0 %v790, 32
      %v885 = vpop.permute.xlu0 %884
      %888 = vrot.lane.b32.xlu0 %v808, 48
      %v889 = vpop.permute.xlu0 %888
      %892 = vrot.lane.b32.xlu0 %v799, 64
      %v893 = vpop.permute.xlu0 %892
      %896 = vrot.lane.b32.xlu0 %v809, 80
      %v897 = vpop.permute.xlu0 %896
      %900 = vrot.lane.b32.xlu0 %v806, 96
      %v901 = vpop.permute.xlu0 %900
      %904 = vrot.lane.b32.xlu0 %v810, 112
      %v905 = vpop.permute.xlu0 %904
      %908 = vrot.lane.b32.xlu0 %v875, 16
      %v909 = vpop.permute.xlu0 %908
      %912 = vrot.lane.b32.xlu0 %v858, 32
      %v913 = vpop.permute.xlu0 %912
      %916 = vrot.lane.b32.xlu0 %v876, 48
      %v917 = vpop.permute.xlu0 %916
      %920 = vrot.lane.b32.xlu0 %v867, 64
      %v921 = vpop.permute.xlu0 %920
      %924 = vrot.lane.b32.xlu0 %v877, 80
      %v925 = vpop.permute.xlu0 %924
      %928 = vrot.lane.b32.xlu0 %v874, 96
      %v929 = vpop.permute.xlu0 %928
      %932 = vrot.lane.b32.xlu0 %v878, 112
      %v933 = vpop.permute.xlu0 %932
      %vm935 = vcmask 130048
      %v936 = vsel %vm935, %v783, %v881
      %vm937 = vcmask 261120
      %v938 = vsel %vm937, %v936, %v885
      %vm939 = vcmask 392192
      %v940 = vsel %vm939, %v938, %v889
      %vm941 = vcmask 523264
      %v942 = vsel %vm941, %v940, %v893
      %vm943 = vcmask 654336
      %v944 = vsel %vm943, %v942, %v897
      %vm945 = vcmask 785408
      %v946 = vsel %vm945, %v944, %v901
      %vm947 = vcmask 916480
      %v948 = vsel %vm947, %v946, %v905
      %v949 = vsel %vm935, %v851, %v909
      %v950 = vsel %vm937, %v949, %v913
      %v951 = vsel %vm939, %v950, %v917
      %v952 = vsel %vm941, %v951, %v921
      %v953 = vsel %vm943, %v952, %v925
      %v954 = vsel %vm945, %v953, %v929
      %v955 = vsel %vm947, %v954, %v933
      %964 = vrot.lane.b32.xlu0 %v731, 127
      %v965 = vpop.permute.xlu0 %964
      %966 = vrot.lane.b32.xlu0 %v732, 127
      %v967 = vpop.permute.xlu0 %966
      %968 = vrot.lane.b32.xlu0 %v734, 127
      %v969 = vpop.permute.xlu0 %968
      %970 = vrot.lane.b32.xlu0 %v735, 127
      %v971 = vpop.permute.xlu0 %970
      %972 = vrot.lane.b32.xlu0 %v737, 127
      %v973 = vpop.permute.xlu0 %972
      %974 = vrot.lane.b32.xlu0 %v738, 127
      %v975 = vpop.permute.xlu0 %974
      %976 = vrot.lane.b32.xlu0 %v740, 127
      %v977 = vpop.permute.xlu0 %976
      %978 = vrot.lane.b32.xlu0 %v741, 127
      %v979 = vpop.permute.xlu0 %978
      %v988 = vcombine.low %v965, %v973
      %v989 = vcombine.high %v965, %v973
      %v991 = vunpack.c.l.s4 1983009808
      %v992 = vunpack.c.0.s8 %v991
      %v993 = vlaneseq
      %v994 = vshrl.u32 %v993, 7
      %v995 = vsub.s32 %v992, %v994
      %v996 = vrot.slane %v988, %v995
      %v998 = vunpack.c.l.s4 1983009808
      %v999 = vunpack.c.0.s8 %v998
      %v1000 = vlaneseq
      %v1001 = vshrl.u32 %v1000, 7
      %v1002 = vsub.s32 %v999, %v1001
      %v1003 = vrot.slane %v989, %v1002
      %v1004 = vcombine.low %v969, %v977
      %v1005 = vcombine.high %v969, %v977
      %v1007 = vunpack.c.l.s4 1983009808
      %v1008 = vunpack.c.0.s8 %v1007
      %v1009 = vlaneseq
      %v1010 = vshrl.u32 %v1009, 7
      %v1011 = vsub.s32 %v1008, %v1010
      %v1012 = vrot.slane %v1004, %v1011
      %v1014 = vunpack.c.l.s4 1983009808
      %v1015 = vunpack.c.0.s8 %v1014
      %v1016 = vlaneseq
      %v1017 = vshrl.u32 %v1016, 7
      %v1018 = vsub.s32 %v1015, %v1017
      %v1019 = vrot.slane %v1005, %v1018
      %v1020 = vcombine.low %v996, %v1012
      %v1021 = vcombine.high %v996, %v1012
      %v1023 = vunpack.c.l.s4 1934713408
      %v1024 = vunpack.c.0.s8 %v1023
      %v1025 = vlaneseq
      %v1026 = vshrl.u32 %v1025, 7
      %v1027 = vsub.s32 %v1024, %v1026
      %v1028 = vrot.slane %v1020, %v1027
      %v1030 = vunpack.c.l.s4 1934713408
      %v1031 = vunpack.c.0.s8 %v1030
      %v1032 = vlaneseq
      %v1033 = vshrl.u32 %v1032, 7
      %v1034 = vsub.s32 %v1031, %v1033
      %v1035 = vrot.slane %v1021, %v1034
      %v1036 = vcombine.low %v1003, %v1019
      %v1037 = vcombine.high %v1003, %v1019
      %v1039 = vunpack.c.l.s4 1934713408
      %v1040 = vunpack.c.0.s8 %v1039
      %v1041 = vlaneseq
      %v1042 = vshrl.u32 %v1041, 7
      %v1043 = vsub.s32 %v1040, %v1042
      %v1044 = vrot.slane %v1036, %v1043
      %v1046 = vunpack.c.l.s4 1934713408
      %v1047 = vunpack.c.0.s8 %v1046
      %v1048 = vlaneseq
      %v1049 = vshrl.u32 %v1048, 7
      %v1050 = vsub.s32 %v1047, %v1049
      %v1051 = vrot.slane %v1037, %v1050
      %v1052 = vcombine.high %v1028, 0.0
      %v1053 = vcombine.high %v1035, 0.0
      %v1054 = vcombine.high %v1044, 0.0
      %v1055 = vcombine.high %v1051, 0.0
      %v1056 = vcombine.low %v967, %v975
      %v1057 = vcombine.high %v967, %v975
      %v1059 = vunpack.c.l.s4 1983009808
      %v1060 = vunpack.c.0.s8 %v1059
      %v1061 = vlaneseq
      %v1062 = vshrl.u32 %v1061, 7
      %v1063 = vsub.s32 %v1060, %v1062
      %v1064 = vrot.slane %v1056, %v1063
      %v1066 = vunpack.c.l.s4 1983009808
      %v1067 = vunpack.c.0.s8 %v1066
      %v1068 = vlaneseq
      %v1069 = vshrl.u32 %v1068, 7
      %v1070 = vsub.s32 %v1067, %v1069
      %v1071 = vrot.slane %v1057, %v1070
      %v1072 = vcombine.low %v971, %v979
      %v1073 = vcombine.high %v971, %v979
      %v1075 = vunpack.c.l.s4 1983009808
      %v1076 = vunpack.c.0.s8 %v1075
      %v1077 = vlaneseq
      %v1078 = vshrl.u32 %v1077, 7
      %v1079 = vsub.s32 %v1076, %v1078
      %v1080 = vrot.slane %v1072, %v1079
      %v1082 = vunpack.c.l.s4 1983009808
      %v1083 = vunpack.c.0.s8 %v1082
      %v1084 = vlaneseq
      %v1085 = vshrl.u32 %v1084, 7
      %v1086 = vsub.s32 %v1083, %v1085
      %v1087 = vrot.slane %v1073, %v1086
      %v1088 = vcombine.low %v1064, %v1080
      %v1089 = vcombine.high %v1064, %v1080
      %v1091 = vunpack.c.l.s4 1934713408
      %v1092 = vunpack.c.0.s8 %v1091
      %v1093 = vlaneseq
      %v1094 = vshrl.u32 %v1093, 7
      %v1095 = vsub.s32 %v1092, %v1094
      %v1096 = vrot.slane %v1088, %v1095
      %v1098 = vunpack.c.l.s4 1934713408
      %v1099 = vunpack.c.0.s8 %v1098
      %v1100 = vlaneseq
      %v1101 = vshrl.u32 %v1100, 7
      %v1102 = vsub.s32 %v1099, %v1101
      %v1103 = vrot.slane %v1089, %v1102
      %v1104 = vcombine.low %v1071, %v1087
      %v1105 = vcombine.high %v1071, %v1087
      %v1107 = vunpack.c.l.s4 1934713408
      %v1108 = vunpack.c.0.s8 %v1107
      %v1109 = vlaneseq
      %v1110 = vshrl.u32 %v1109, 7
      %v1111 = vsub.s32 %v1108, %v1110
      %v1112 = vrot.slane %v1104, %v1111
      %v1114 = vunpack.c.l.s4 1934713408
      %v1115 = vunpack.c.0.s8 %v1114
      %v1116 = vlaneseq
      %v1117 = vshrl.u32 %v1116, 7
      %v1118 = vsub.s32 %v1115, %v1117
      %v1119 = vrot.slane %v1105, %v1118
      %v1120 = vcombine.high %v1096, 0.0
      %v1121 = vcombine.high %v1103, 0.0
      %v1122 = vcombine.high %v1112, 0.0
      %v1123 = vcombine.high %v1119, 0.0
      %1125 = vrot.lane.b32.xlu0 %v1052, 16
      %v1126 = vpop.permute.xlu0 %1125
      %1129 = vrot.lane.b32.xlu0 %v1035, 32
      %v1130 = vpop.permute.xlu0 %1129
      %1133 = vrot.lane.b32.xlu0 %v1053, 48
      %v1134 = vpop.permute.xlu0 %1133
      %1137 = vrot.lane.b32.xlu0 %v1044, 64
      %v1138 = vpop.permute.xlu0 %1137
      %1141 = vrot.lane.b32.xlu0 %v1054, 80
      %v1142 = vpop.permute.xlu0 %1141
      %1145 = vrot.lane.b32.xlu0 %v1051, 96
      %v1146 = vpop.permute.xlu0 %1145
      %1149 = vrot.lane.b32.xlu0 %v1055, 112
      %v1150 = vpop.permute.xlu0 %1149
      %1153 = vrot.lane.b32.xlu0 %v1120, 16
      %v1154 = vpop.permute.xlu0 %1153
      %1157 = vrot.lane.b32.xlu0 %v1103, 32
      %v1158 = vpop.permute.xlu0 %1157
      %1161 = vrot.lane.b32.xlu0 %v1121, 48
      %v1162 = vpop.permute.xlu0 %1161
      %1165 = vrot.lane.b32.xlu0 %v1112, 64
      %v1166 = vpop.permute.xlu0 %1165
      %1169 = vrot.lane.b32.xlu0 %v1122, 80
      %v1170 = vpop.permute.xlu0 %1169
      %1173 = vrot.lane.b32.xlu0 %v1119, 96
      %v1174 = vpop.permute.xlu0 %1173
      %1177 = vrot.lane.b32.xlu0 %v1123, 112
      %v1178 = vpop.permute.xlu0 %1177
      %v1180 = vsel %vm935, %v1028, %v1126
      %v1181 = vsel %vm937, %v1180, %v1130
      %v1182 = vsel %vm939, %v1181, %v1134
      %v1183 = vsel %vm941, %v1182, %v1138
      %v1184 = vsel %vm943, %v1183, %v1142
      %v1185 = vsel %vm945, %v1184, %v1146
      %v1186 = vsel %vm947, %v1185, %v1150
      %v1187 = vsel %vm935, %v1096, %v1154
      %v1188 = vsel %vm937, %v1187, %v1158
      %v1189 = vsel %vm939, %v1188, %v1162
      %v1190 = vsel %vm941, %v1189, %v1166
      %v1191 = vsel %vm943, %v1190, %v1170
      %v1192 = vsel %vm945, %v1191, %v1174
      %v1193 = vsel %vm947, %v1192, %v1178
      %1194 = vrot.lane.b32.xlu0 %v731, 126
      %v1195 = vpop.permute.xlu0 %1194
      %1196 = vrot.lane.b32.xlu0 %v732, 126
      %v1197 = vpop.permute.xlu0 %1196
      %1198 = vrot.lane.b32.xlu0 %v734, 126
      %v1199 = vpop.permute.xlu0 %1198
      %1200 = vrot.lane.b32.xlu0 %v735, 126
      %v1201 = vpop.permute.xlu0 %1200
      %1202 = vrot.lane.b32.xlu0 %v737, 126
      %v1203 = vpop.permute.xlu0 %1202
      %1204 = vrot.lane.b32.xlu0 %v738, 126
      %v1205 = vpop.permute.xlu0 %1204
      %1206 = vrot.lane.b32.xlu0 %v740, 126
      %v1207 = vpop.permute.xlu0 %1206
      %1208 = vrot.lane.b32.xlu0 %v741, 126
      %v1209 = vpop.permute.xlu0 %1208
      %v1218 = vcombine.low %v1195, %v1203
      %v1219 = vcombine.high %v1195, %v1203
      %v1221 = vunpack.c.l.s4 1983009808
      %v1222 = vunpack.c.0.s8 %v1221
      %v1223 = vlaneseq
      %v1224 = vshrl.u32 %v1223, 7
      %v1225 = vsub.s32 %v1222, %v1224
      %v1226 = vrot.slane %v1218, %v1225
      %v1228 = vunpack.c.l.s4 1983009808
      %v1229 = vunpack.c.0.s8 %v1228
      %v1230 = vlaneseq
      %v1231 = vshrl.u32 %v1230, 7
      %v1232 = vsub.s32 %v1229, %v1231
      %v1233 = vrot.slane %v1219, %v1232
      %v1234 = vcombine.low %v1199, %v1207
      %v1235 = vcombine.high %v1199, %v1207
      %v1237 = vunpack.c.l.s4 1983009808
      %v1238 = vunpack.c.0.s8 %v1237
      %v1239 = vlaneseq
      %v1240 = vshrl.u32 %v1239, 7
      %v1241 = vsub.s32 %v1238, %v1240
      %v1242 = vrot.slane %v1234, %v1241
      %v1244 = vunpack.c.l.s4 1983009808
      %v1245 = vunpack.c.0.s8 %v1244
      %v1246 = vlaneseq
      %v1247 = vshrl.u32 %v1246, 7
      %v1248 = vsub.s32 %v1245, %v1247
      %v1249 = vrot.slane %v1235, %v1248
      %v1250 = vcombine.low %v1226, %v1242
      %v1251 = vcombine.high %v1226, %v1242
      %v1253 = vunpack.c.l.s4 1934713408
      %v1254 = vunpack.c.0.s8 %v1253
      %v1255 = vlaneseq
      %v1256 = vshrl.u32 %v1255, 7
      %v1257 = vsub.s32 %v1254, %v1256
      %v1258 = vrot.slane %v1250, %v1257
      %v1260 = vunpack.c.l.s4 1934713408
      %v1261 = vunpack.c.0.s8 %v1260
      %v1262 = vlaneseq
      %v1263 = vshrl.u32 %v1262, 7
      %v1264 = vsub.s32 %v1261, %v1263
      %v1265 = vrot.slane %v1251, %v1264
      %v1266 = vcombine.low %v1233, %v1249
      %v1267 = vcombine.high %v1233, %v1249
      %v1269 = vunpack.c.l.s4 1934713408
      %v1270 = vunpack.c.0.s8 %v1269
      %v1271 = vlaneseq
      %v1272 = vshrl.u32 %v1271, 7
      %v1273 = vsub.s32 %v1270, %v1272
      %v1274 = vrot.slane %v1266, %v1273
      %v1276 = vunpack.c.l.s4 1934713408
      %v1277 = vunpack.c.0.s8 %v1276
      %v1278 = vlaneseq
      %v1279 = vshrl.u32 %v1278, 7
      %v1280 = vsub.s32 %v1277, %v1279
      %v1281 = vrot.slane %v1267, %v1280
      %v1282 = vcombine.high %v1258, 0.0
      %v1283 = vcombine.high %v1265, 0.0
      %v1284 = vcombine.high %v1274, 0.0
      %v1285 = vcombine.high %v1281, 0.0
      %v1286 = vcombine.low %v1197, %v1205
      %v1287 = vcombine.high %v1197, %v1205
      %v1289 = vunpack.c.l.s4 1983009808
      %v1290 = vunpack.c.0.s8 %v1289
      %v1291 = vlaneseq
      %v1292 = vshrl.u32 %v1291, 7
      %v1293 = vsub.s32 %v1290, %v1292
      %v1294 = vrot.slane %v1286, %v1293
      %v1296 = vunpack.c.l.s4 1983009808
      %v1297 = vunpack.c.0.s8 %v1296
      %v1298 = vlaneseq
      %v1299 = vshrl.u32 %v1298, 7
      %v1300 = vsub.s32 %v1297, %v1299
      %v1301 = vrot.slane %v1287, %v1300
      %v1302 = vcombine.low %v1201, %v1209
      %v1303 = vcombine.high %v1201, %v1209
      %v1305 = vunpack.c.l.s4 1983009808
      %v1306 = vunpack.c.0.s8 %v1305
      %v1307 = vlaneseq
      %v1308 = vshrl.u32 %v1307, 7
      %v1309 = vsub.s32 %v1306, %v1308
      %v1310 = vrot.slane %v1302, %v1309
      %v1312 = vunpack.c.l.s4 1983009808
      %v1313 = vunpack.c.0.s8 %v1312
      %v1314 = vlaneseq
      %v1315 = vshrl.u32 %v1314, 7
      %v1316 = vsub.s32 %v1313, %v1315
      %v1317 = vrot.slane %v1303, %v1316
      %v1318 = vcombine.low %v1294, %v1310
      %v1319 = vcombine.high %v1294, %v1310
      %v1321 = vunpack.c.l.s4 1934713408
      %v1322 = vunpack.c.0.s8 %v1321
      %v1323 = vlaneseq
      %v1324 = vshrl.u32 %v1323, 7
      %v1325 = vsub.s32 %v1322, %v1324
      %v1326 = vrot.slane %v1318, %v1325
      %v1328 = vunpack.c.l.s4 1934713408
      %v1329 = vunpack.c.0.s8 %v1328
      %v1330 = vlaneseq
      %v1331 = vshrl.u32 %v1330, 7
      %v1332 = vsub.s32 %v1329, %v1331
      %v1333 = vrot.slane %v1319, %v1332
      %v1334 = vcombine.low %v1301, %v1317
      %v1335 = vcombine.high %v1301, %v1317
      %v1337 = vunpack.c.l.s4 1934713408
      %v1338 = vunpack.c.0.s8 %v1337
      %v1339 = vlaneseq
      %v1340 = vshrl.u32 %v1339, 7
      %v1341 = vsub.s32 %v1338, %v1340
      %v1342 = vrot.slane %v1334, %v1341
      %v1344 = vunpack.c.l.s4 1934713408
      %v1345 = vunpack.c.0.s8 %v1344
      %v1346 = vlaneseq
      %v1347 = vshrl.u32 %v1346, 7
      %v1348 = vsub.s32 %v1345, %v1347
      %v1349 = vrot.slane %v1335, %v1348
      %v1350 = vcombine.high %v1326, 0.0
      %v1351 = vcombine.high %v1333, 0.0
      %v1352 = vcombine.high %v1342, 0.0
      %v1353 = vcombine.high %v1349, 0.0
      %1355 = vrot.lane.b32.xlu0 %v1282, 16
      %v1356 = vpop.permute.xlu0 %1355
      %1359 = vrot.lane.b32.xlu0 %v1265, 32
      %v1360 = vpop.permute.xlu0 %1359
      %1363 = vrot.lane.b32.xlu0 %v1283, 48
      %v1364 = vpop.permute.xlu0 %1363
      %1367 = vrot.lane.b32.xlu0 %v1274, 64
      %v1368 = vpop.permute.xlu0 %1367
      %1371 = vrot.lane.b32.xlu0 %v1284, 80
      %v1372 = vpop.permute.xlu0 %1371
      %1375 = vrot.lane.b32.xlu0 %v1281, 96
      %v1376 = vpop.permute.xlu0 %1375
      %1379 = vrot.lane.b32.xlu0 %v1285, 112
      %v1380 = vpop.permute.xlu0 %1379
      %1383 = vrot.lane.b32.xlu0 %v1350, 16
      %v1384 = vpop.permute.xlu0 %1383
      %1387 = vrot.lane.b32.xlu0 %v1333, 32
      %v1388 = vpop.permute.xlu0 %1387
      %1391 = vrot.lane.b32.xlu0 %v1351, 48
      %v1392 = vpop.permute.xlu0 %1391
      %1395 = vrot.lane.b32.xlu0 %v1342, 64
      %v1396 = vpop.permute.xlu0 %1395
      %1399 = vrot.lane.b32.xlu0 %v1352, 80
      %v1400 = vpop.permute.xlu0 %1399
      %1403 = vrot.lane.b32.xlu0 %v1349, 96
      %v1404 = vpop.permute.xlu0 %1403
      %1407 = vrot.lane.b32.xlu0 %v1353, 112
      %v1408 = vpop.permute.xlu0 %1407
      %v1410 = vsel %vm935, %v1258, %v1356
      %v1411 = vsel %vm937, %v1410, %v1360
      %v1412 = vsel %vm939, %v1411, %v1364
      %v1413 = vsel %vm941, %v1412, %v1368
      %v1414 = vsel %vm943, %v1413, %v1372
      %v1415 = vsel %vm945, %v1414, %v1376
      %v1416 = vsel %vm947, %v1415, %v1380
      %v1417 = vsel %vm935, %v1326, %v1384
      %v1418 = vsel %vm937, %v1417, %v1388
      %v1419 = vsel %vm939, %v1418, %v1392
      %v1420 = vsel %vm941, %v1419, %v1396
      %v1421 = vsel %vm943, %v1420, %v1400
      %v1422 = vsel %vm945, %v1421, %v1404
      %v1423 = vsel %vm947, %v1422, %v1408
      %vm1428 = vcmask 1046528
      %v1429 = vrot.slane %v731, 1
      %v1430 = vrot.slane %v732, 1
      %v1431 = vsel %vm1428, %v1429, %v1430
      %v1432 = vrot.slane %v733, 1
      %v1433 = vsel %vm1428, %v1430, %v1432
      %v1434 = vrot.slane %v734, 1
      %v1435 = vrot.slane %v735, 1
      %v1436 = vsel %vm1428, %v1434, %v1435
      %v1437 = vrot.slane %v736, 1
      %v1438 = vsel %vm1428, %v1435, %v1437
      %v1439 = vrot.slane %v737, 1
      %v1440 = vrot.slane %v738, 1
      %v1441 = vsel %vm1428, %v1439, %v1440
      %v1442 = vrot.slane %v739, 1
      %v1443 = vsel %vm1428, %v1440, %v1442
      %v1444 = vrot.slane %v740, 1
      %v1445 = vrot.slane %v741, 1
      %v1446 = vsel %vm1428, %v1444, %v1445
      %v1447 = vrot.slane %v742, 1
      %v1448 = vsel %vm1428, %v1445, %v1447
      %v1457 = vcombine.low %v1431, %v1441
      %v1458 = vcombine.high %v1431, %v1441
      %v1460 = vunpack.c.l.s4 1983009808
      %v1461 = vunpack.c.0.s8 %v1460
      %v1462 = vlaneseq
      %v1463 = vshrl.u32 %v1462, 7
      %v1464 = vsub.s32 %v1461, %v1463
      %v1465 = vrot.slane %v1457, %v1464
      %v1467 = vunpack.c.l.s4 1983009808
      %v1468 = vunpack.c.0.s8 %v1467
      %v1469 = vlaneseq
      %v1470 = vshrl.u32 %v1469, 7
      %v1471 = vsub.s32 %v1468, %v1470
      %v1472 = vrot.slane %v1458, %v1471
      %v1473 = vcombine.low %v1436, %v1446
      %v1474 = vcombine.high %v1436, %v1446
      %v1476 = vunpack.c.l.s4 1983009808
      %v1477 = vunpack.c.0.s8 %v1476
      %v1478 = vlaneseq
      %v1479 = vshrl.u32 %v1478, 7
      %v1480 = vsub.s32 %v1477, %v1479
      %v1481 = vrot.slane %v1473, %v1480
      %v1483 = vunpack.c.l.s4 1983009808
      %v1484 = vunpack.c.0.s8 %v1483
      %v1485 = vlaneseq
      %v1486 = vshrl.u32 %v1485, 7
      %v1487 = vsub.s32 %v1484, %v1486
      %v1488 = vrot.slane %v1474, %v1487
      %v1489 = vcombine.low %v1465, %v1481
      %v1490 = vcombine.high %v1465, %v1481
      %v1492 = vunpack.c.l.s4 1934713408
      %v1493 = vunpack.c.0.s8 %v1492
      %v1494 = vlaneseq
      %v1495 = vshrl.u32 %v1494, 7
      %v1496 = vsub.s32 %v1493, %v1495
      %v1497 = vrot.slane %v1489, %v1496
      %v1499 = vunpack.c.l.s4 1934713408
      %v1500 = vunpack.c.0.s8 %v1499
      %v1501 = vlaneseq
      %v1502 = vshrl.u32 %v1501, 7
      %v1503 = vsub.s32 %v1500, %v1502
      %v1504 = vrot.slane %v1490, %v1503
      %v1505 = vcombine.low %v1472, %v1488
      %v1506 = vcombine.high %v1472, %v1488
      %v1508 = vunpack.c.l.s4 1934713408
      %v1509 = vunpack.c.0.s8 %v1508
      %v1510 = vlaneseq
      %v1511 = vshrl.u32 %v1510, 7
      %v1512 = vsub.s32 %v1509, %v1511
      %v1513 = vrot.slane %v1505, %v1512
      %v1515 = vunpack.c.l.s4 1934713408
      %v1516 = vunpack.c.0.s8 %v1515
      %v1517 = vlaneseq
      %v1518 = vshrl.u32 %v1517, 7
      %v1519 = vsub.s32 %v1516, %v1518
      %v1520 = vrot.slane %v1506, %v1519
      %v1521 = vcombine.high %v1497, 0.0
      %v1522 = vcombine.high %v1504, 0.0
      %v1523 = vcombine.high %v1513, 0.0
      %v1524 = vcombine.high %v1520, 0.0
      %v1525 = vcombine.low %v1433, %v1443
      %v1526 = vcombine.high %v1433, %v1443
      %v1528 = vunpack.c.l.s4 1983009808
      %v1529 = vunpack.c.0.s8 %v1528
      %v1530 = vlaneseq
      %v1531 = vshrl.u32 %v1530, 7
      %v1532 = vsub.s32 %v1529, %v1531
      %v1533 = vrot.slane %v1525, %v1532
      %v1535 = vunpack.c.l.s4 1983009808
      %v1536 = vunpack.c.0.s8 %v1535
      %v1537 = vlaneseq
      %v1538 = vshrl.u32 %v1537, 7
      %v1539 = vsub.s32 %v1536, %v1538
      %v1540 = vrot.slane %v1526, %v1539
      %v1541 = vcombine.low %v1438, %v1448
      %v1542 = vcombine.high %v1438, %v1448
      %v1544 = vunpack.c.l.s4 1983009808
      %v1545 = vunpack.c.0.s8 %v1544
      %v1546 = vlaneseq
      %v1547 = vshrl.u32 %v1546, 7
      %v1548 = vsub.s32 %v1545, %v1547
      %v1549 = vrot.slane %v1541, %v1548
      %v1551 = vunpack.c.l.s4 1983009808
      %v1552 = vunpack.c.0.s8 %v1551
      %v1553 = vlaneseq
      %v1554 = vshrl.u32 %v1553, 7
      %v1555 = vsub.s32 %v1552, %v1554
      %v1556 = vrot.slane %v1542, %v1555
      %v1557 = vcombine.low %v1533, %v1549
      %v1558 = vcombine.high %v1533, %v1549
      %v1560 = vunpack.c.l.s4 1934713408
      %v1561 = vunpack.c.0.s8 %v1560
      %v1562 = vlaneseq
      %v1563 = vshrl.u32 %v1562, 7
      %v1564 = vsub.s32 %v1561, %v1563
      %v1565 = vrot.slane %v1557, %v1564
      %v1567 = vunpack.c.l.s4 1934713408
      %v1568 = vunpack.c.0.s8 %v1567
      %v1569 = vlaneseq
      %v1570 = vshrl.u32 %v1569, 7
      %v1571 = vsub.s32 %v1568, %v1570
      %v1572 = vrot.slane %v1558, %v1571
      %v1573 = vcombine.low %v1540, %v1556
      %v1574 = vcombine.high %v1540, %v1556
      %v1576 = vunpack.c.l.s4 1934713408
      %v1577 = vunpack.c.0.s8 %v1576
      %v1578 = vlaneseq
      %v1579 = vshrl.u32 %v1578, 7
      %v1580 = vsub.s32 %v1577, %v1579
      %v1581 = vrot.slane %v1573, %v1580
      %v1583 = vunpack.c.l.s4 1934713408
      %v1584 = vunpack.c.0.s8 %v1583
      %v1585 = vlaneseq
      %v1586 = vshrl.u32 %v1585, 7
      %v1587 = vsub.s32 %v1584, %v1586
      %v1588 = vrot.slane %v1574, %v1587
      %v1589 = vcombine.high %v1565, 0.0
      %v1590 = vcombine.high %v1572, 0.0
      %v1591 = vcombine.high %v1581, 0.0
      %v1592 = vcombine.high %v1588, 0.0
      %1594 = vrot.lane.b32.xlu0 %v1521, 16
      %v1595 = vpop.permute.xlu0 %1594
      %1598 = vrot.lane.b32.xlu0 %v1504, 32
      %v1599 = vpop.permute.xlu0 %1598
      %1602 = vrot.lane.b32.xlu0 %v1522, 48
      %v1603 = vpop.permute.xlu0 %1602
      %1606 = vrot.lane.b32.xlu0 %v1513, 64
      %v1607 = vpop.permute.xlu0 %1606
      %1610 = vrot.lane.b32.xlu0 %v1523, 80
      %v1611 = vpop.permute.xlu0 %1610
      %1614 = vrot.lane.b32.xlu0 %v1520, 96
      %v1615 = vpop.permute.xlu0 %1614
      %1618 = vrot.lane.b32.xlu0 %v1524, 112
      %v1619 = vpop.permute.xlu0 %1618
      %1622 = vrot.lane.b32.xlu0 %v1589, 16
      %v1623 = vpop.permute.xlu0 %1622
      %1626 = vrot.lane.b32.xlu0 %v1572, 32
      %v1627 = vpop.permute.xlu0 %1626
      %1630 = vrot.lane.b32.xlu0 %v1590, 48
      %v1631 = vpop.permute.xlu0 %1630
      %1634 = vrot.lane.b32.xlu0 %v1581, 64
      %v1635 = vpop.permute.xlu0 %1634
      %1638 = vrot.lane.b32.xlu0 %v1591, 80
      %v1639 = vpop.permute.xlu0 %1638
      %1642 = vrot.lane.b32.xlu0 %v1588, 96
      %v1643 = vpop.permute.xlu0 %1642
      %1646 = vrot.lane.b32.xlu0 %v1592, 112
      %v1647 = vpop.permute.xlu0 %1646
      %v1649 = vsel %vm935, %v1497, %v1595
      %v1650 = vsel %vm937, %v1649, %v1599
      %v1651 = vsel %vm939, %v1650, %v1603
      %v1652 = vsel %vm941, %v1651, %v1607
      %v1653 = vsel %vm943, %v1652, %v1611
      %v1654 = vsel %vm945, %v1653, %v1615
      %v1655 = vsel %vm947, %v1654, %v1619
      %v1656 = vsel %vm935, %v1565, %v1623
      %v1657 = vsel %vm937, %v1656, %v1627
      %v1658 = vsel %vm939, %v1657, %v1631
      %v1659 = vsel %vm941, %v1658, %v1635
      %v1660 = vsel %vm943, %v1659, %v1639
      %v1661 = vsel %vm945, %v1660, %v1643
      %v1662 = vsel %vm947, %v1661, %v1647
      %1663 = vrot.lane.b32.xlu0 %v1431, 127
      %v1664 = vpop.permute.xlu0 %1663
      %1665 = vrot.lane.b32.xlu0 %v1433, 127
      %v1666 = vpop.permute.xlu0 %1665
      %1667 = vrot.lane.b32.xlu0 %v1436, 127
      %v1668 = vpop.permute.xlu0 %1667
      %1669 = vrot.lane.b32.xlu0 %v1438, 127
      %v1670 = vpop.permute.xlu0 %1669
      %1671 = vrot.lane.b32.xlu0 %v1441, 127
      %v1672 = vpop.permute.xlu0 %1671
      %1673 = vrot.lane.b32.xlu0 %v1443, 127
      %v1674 = vpop.permute.xlu0 %1673
      %1675 = vrot.lane.b32.xlu0 %v1446, 127
      %v1676 = vpop.permute.xlu0 %1675
      %1677 = vrot.lane.b32.xlu0 %v1448, 127
      %v1678 = vpop.permute.xlu0 %1677
      %v1687 = vcombine.low %v1664, %v1672
      %v1688 = vcombine.high %v1664, %v1672
      %v1690 = vunpack.c.l.s4 1983009808
      %v1691 = vunpack.c.0.s8 %v1690
      %v1692 = vlaneseq
      %v1693 = vshrl.u32 %v1692, 7
      %v1694 = vsub.s32 %v1691, %v1693
      %v1695 = vrot.slane %v1687, %v1694
      %v1697 = vunpack.c.l.s4 1983009808
      %v1698 = vunpack.c.0.s8 %v1697
      %v1699 = vlaneseq
      %v1700 = vshrl.u32 %v1699, 7
      %v1701 = vsub.s32 %v1698, %v1700
      %v1702 = vrot.slane %v1688, %v1701
      %v1703 = vcombine.low %v1668, %v1676
      %v1704 = vcombine.high %v1668, %v1676
      %v1706 = vunpack.c.l.s4 1983009808
      %v1707 = vunpack.c.0.s8 %v1706
      %v1708 = vlaneseq
      %v1709 = vshrl.u32 %v1708, 7
      %v1710 = vsub.s32 %v1707, %v1709
      %v1711 = vrot.slane %v1703, %v1710
      %v1713 = vunpack.c.l.s4 1983009808
      %v1714 = vunpack.c.0.s8 %v1713
      %v1715 = vlaneseq
      %v1716 = vshrl.u32 %v1715, 7
      %v1717 = vsub.s32 %v1714, %v1716
      %v1718 = vrot.slane %v1704, %v1717
      %v1719 = vcombine.low %v1695, %v1711
      %v1720 = vcombine.high %v1695, %v1711
      %v1722 = vunpack.c.l.s4 1934713408
      %v1723 = vunpack.c.0.s8 %v1722
      %v1724 = vlaneseq
      %v1725 = vshrl.u32 %v1724, 7
      %v1726 = vsub.s32 %v1723, %v1725
      %v1727 = vrot.slane %v1719, %v1726
      %v1729 = vunpack.c.l.s4 1934713408
      %v1730 = vunpack.c.0.s8 %v1729
      %v1731 = vlaneseq
      %v1732 = vshrl.u32 %v1731, 7
      %v1733 = vsub.s32 %v1730, %v1732
      %v1734 = vrot.slane %v1720, %v1733
      %v1735 = vcombine.low %v1702, %v1718
      %v1736 = vcombine.high %v1702, %v1718
      %v1738 = vunpack.c.l.s4 1934713408
      %v1739 = vunpack.c.0.s8 %v1738
      %v1740 = vlaneseq
      %v1741 = vshrl.u32 %v1740, 7
      %v1742 = vsub.s32 %v1739, %v1741
      %v1743 = vrot.slane %v1735, %v1742
      %v1745 = vunpack.c.l.s4 1934713408
      %v1746 = vunpack.c.0.s8 %v1745
      %v1747 = vlaneseq
      %v1748 = vshrl.u32 %v1747, 7
      %v1749 = vsub.s32 %v1746, %v1748
      %v1750 = vrot.slane %v1736, %v1749
      %v1751 = vcombine.high %v1727, 0.0
      %v1752 = vcombine.high %v1734, 0.0
      %v1753 = vcombine.high %v1743, 0.0
      %v1754 = vcombine.high %v1750, 0.0
      %v1755 = vcombine.low %v1666, %v1674
      %v1756 = vcombine.high %v1666, %v1674
      %v1758 = vunpack.c.l.s4 1983009808
      %v1759 = vunpack.c.0.s8 %v1758
      %v1760 = vlaneseq
      %v1761 = vshrl.u32 %v1760, 7
      %v1762 = vsub.s32 %v1759, %v1761
      %v1763 = vrot.slane %v1755, %v1762
      %v1765 = vunpack.c.l.s4 1983009808
      %v1766 = vunpack.c.0.s8 %v1765
      %v1767 = vlaneseq
      %v1768 = vshrl.u32 %v1767, 7
      %v1769 = vsub.s32 %v1766, %v1768
      %v1770 = vrot.slane %v1756, %v1769
      %v1771 = vcombine.low %v1670, %v1678
      %v1772 = vcombine.high %v1670, %v1678
      %v1774 = vunpack.c.l.s4 1983009808
      %v1775 = vunpack.c.0.s8 %v1774
      %v1776 = vlaneseq
      %v1777 = vshrl.u32 %v1776, 7
      %v1778 = vsub.s32 %v1775, %v1777
      %v1779 = vrot.slane %v1771, %v1778
      %v1781 = vunpack.c.l.s4 1983009808
      %v1782 = vunpack.c.0.s8 %v1781
      %v1783 = vlaneseq
      %v1784 = vshrl.u32 %v1783, 7
      %v1785 = vsub.s32 %v1782, %v1784
      %v1786 = vrot.slane %v1772, %v1785
      %v1787 = vcombine.low %v1763, %v1779
      %v1788 = vcombine.high %v1763, %v1779
      %v1790 = vunpack.c.l.s4 1934713408
      %v1791 = vunpack.c.0.s8 %v1790
      %v1792 = vlaneseq
      %v1793 = vshrl.u32 %v1792, 7
      %v1794 = vsub.s32 %v1791, %v1793
      %v1795 = vrot.slane %v1787, %v1794
      %v1797 = vunpack.c.l.s4 1934713408
      %v1798 = vunpack.c.0.s8 %v1797
      %v1799 = vlaneseq
      %v1800 = vshrl.u32 %v1799, 7
      %v1801 = vsub.s32 %v1798, %v1800
      %v1802 = vrot.slane %v1788, %v1801
      %v1803 = vcombine.low %v1770, %v1786
      %v1804 = vcombine.high %v1770, %v1786
      %v1806 = vunpack.c.l.s4 1934713408
      %v1807 = vunpack.c.0.s8 %v1806
      %v1808 = vlaneseq
      %v1809 = vshrl.u32 %v1808, 7
      %v1810 = vsub.s32 %v1807, %v1809
      %v1811 = vrot.slane %v1803, %v1810
      %v1813 = vunpack.c.l.s4 1934713408
      %v1814 = vunpack.c.0.s8 %v1813
      %v1815 = vlaneseq
      %v1816 = vshrl.u32 %v1815, 7
      %v1817 = vsub.s32 %v1814, %v1816
      %v1818 = vrot.slane %v1804, %v1817
      %v1819 = vcombine.high %v1795, 0.0
      %v1820 = vcombine.high %v1802, 0.0
      %v1821 = vcombine.high %v1811, 0.0
      %v1822 = vcombine.high %v1818, 0.0
      %1824 = vrot.lane.b32.xlu0 %v1751, 16
      %v1825 = vpop.permute.xlu0 %1824
      %1828 = vrot.lane.b32.xlu0 %v1734, 32
      %v1829 = vpop.permute.xlu0 %1828
      %1832 = vrot.lane.b32.xlu0 %v1752, 48
      %v1833 = vpop.permute.xlu0 %1832
      %1836 = vrot.lane.b32.xlu0 %v1743, 64
      %v1837 = vpop.permute.xlu0 %1836
      %1840 = vrot.lane.b32.xlu0 %v1753, 80
      %v1841 = vpop.permute.xlu0 %1840
      %1844 = vrot.lane.b32.xlu0 %v1750, 96
      %v1845 = vpop.permute.xlu0 %1844
      %1848 = vrot.lane.b32.xlu0 %v1754, 112
      %v1849 = vpop.permute.xlu0 %1848
      %1852 = vrot.lane.b32.xlu0 %v1819, 16
      %v1853 = vpop.permute.xlu0 %1852
      %1856 = vrot.lane.b32.xlu0 %v1802, 32
      %v1857 = vpop.permute.xlu0 %1856
      %1860 = vrot.lane.b32.xlu0 %v1820, 48
      %v1861 = vpop.permute.xlu0 %1860
      %1864 = vrot.lane.b32.xlu0 %v1811, 64
      %v1865 = vpop.permute.xlu0 %1864
      %1868 = vrot.lane.b32.xlu0 %v1821, 80
      %v1869 = vpop.permute.xlu0 %1868
      %1872 = vrot.lane.b32.xlu0 %v1818, 96
      %v1873 = vpop.permute.xlu0 %1872
      %1876 = vrot.lane.b32.xlu0 %v1822, 112
      %v1877 = vpop.permute.xlu0 %1876
      %v1879 = vsel %vm935, %v1727, %v1825
      %v1880 = vsel %vm937, %v1879, %v1829
      %v1881 = vsel %vm939, %v1880, %v1833
      %v1882 = vsel %vm941, %v1881, %v1837
      %v1883 = vsel %vm943, %v1882, %v1841
      %v1884 = vsel %vm945, %v1883, %v1845
      %v1885 = vsel %vm947, %v1884, %v1849
      %v1886 = vsel %vm935, %v1795, %v1853
      %v1887 = vsel %vm937, %v1886, %v1857
      %v1888 = vsel %vm939, %v1887, %v1861
      %v1889 = vsel %vm941, %v1888, %v1865
      %v1890 = vsel %vm943, %v1889, %v1869
      %v1891 = vsel %vm945, %v1890, %v1873
      %v1892 = vsel %vm947, %v1891, %v1877
      %1893 = vrot.lane.b32.xlu0 %v1431, 126
      %v1894 = vpop.permute.xlu0 %1893
      %1895 = vrot.lane.b32.xlu0 %v1433, 126
      %v1896 = vpop.permute.xlu0 %1895
      %1897 = vrot.lane.b32.xlu0 %v1436, 126
      %v1898 = vpop.permute.xlu0 %1897
      %1899 = vrot.lane.b32.xlu0 %v1438, 126
      %v1900 = vpop.permute.xlu0 %1899
      %1901 = vrot.lane.b32.xlu0 %v1441, 126
      %v1902 = vpop.permute.xlu0 %1901
      %1903 = vrot.lane.b32.xlu0 %v1443, 126
      %v1904 = vpop.permute.xlu0 %1903
      %1905 = vrot.lane.b32.xlu0 %v1446, 126
      %v1906 = vpop.permute.xlu0 %1905
      %1907 = vrot.lane.b32.xlu0 %v1448, 126
      %v1908 = vpop.permute.xlu0 %1907
      %v1917 = vcombine.low %v1894, %v1902
      %v1918 = vcombine.high %v1894, %v1902
      %v1920 = vunpack.c.l.s4 1983009808
      %v1921 = vunpack.c.0.s8 %v1920
      %v1922 = vlaneseq
      %v1923 = vshrl.u32 %v1922, 7
      %v1924 = vsub.s32 %v1921, %v1923
      %v1925 = vrot.slane %v1917, %v1924
      %v1927 = vunpack.c.l.s4 1983009808
      %v1928 = vunpack.c.0.s8 %v1927
      %v1929 = vlaneseq
      %v1930 = vshrl.u32 %v1929, 7
      %v1931 = vsub.s32 %v1928, %v1930
      %v1932 = vrot.slane %v1918, %v1931
      %v1933 = vcombine.low %v1898, %v1906
      %v1934 = vcombine.high %v1898, %v1906
      %v1936 = vunpack.c.l.s4 1983009808
      %v1937 = vunpack.c.0.s8 %v1936
      %v1938 = vlaneseq
      %v1939 = vshrl.u32 %v1938, 7
      %v1940 = vsub.s32 %v1937, %v1939
      %v1941 = vrot.slane %v1933, %v1940
      %v1943 = vunpack.c.l.s4 1983009808
      %v1944 = vunpack.c.0.s8 %v1943
      %v1945 = vlaneseq
      %v1946 = vshrl.u32 %v1945, 7
      %v1947 = vsub.s32 %v1944, %v1946
      %v1948 = vrot.slane %v1934, %v1947
      %v1949 = vcombine.low %v1925, %v1941
      %v1950 = vcombine.high %v1925, %v1941
      %v1952 = vunpack.c.l.s4 1934713408
      %v1953 = vunpack.c.0.s8 %v1952
      %v1954 = vlaneseq
      %v1955 = vshrl.u32 %v1954, 7
      %v1956 = vsub.s32 %v1953, %v1955
      %v1957 = vrot.slane %v1949, %v1956
      %v1959 = vunpack.c.l.s4 1934713408
      %v1960 = vunpack.c.0.s8 %v1959
      %v1961 = vlaneseq
      %v1962 = vshrl.u32 %v1961, 7
      %v1963 = vsub.s32 %v1960, %v1962
      %v1964 = vrot.slane %v1950, %v1963
      %v1965 = vcombine.low %v1932, %v1948
      %v1966 = vcombine.high %v1932, %v1948
      %v1968 = vunpack.c.l.s4 1934713408
      %v1969 = vunpack.c.0.s8 %v1968
      %v1970 = vlaneseq
      %v1971 = vshrl.u32 %v1970, 7
      %v1972 = vsub.s32 %v1969, %v1971
      %v1973 = vrot.slane %v1965, %v1972
      %v1975 = vunpack.c.l.s4 1934713408
      %v1976 = vunpack.c.0.s8 %v1975
      %v1977 = vlaneseq
      %v1978 = vshrl.u32 %v1977, 7
      %v1979 = vsub.s32 %v1976, %v1978
      %v1980 = vrot.slane %v1966, %v1979
      %v1981 = vcombine.high %v1957, 0.0
      %v1982 = vcombine.high %v1964, 0.0
      %v1983 = vcombine.high %v1973, 0.0
      %v1984 = vcombine.high %v1980, 0.0
      %v1985 = vcombine.low %v1896, %v1904
      %v1986 = vcombine.high %v1896, %v1904
      %v1988 = vunpack.c.l.s4 1983009808
      %v1989 = vunpack.c.0.s8 %v1988
      %v1990 = vlaneseq
      %v1991 = vshrl.u32 %v1990, 7
      %v1992 = vsub.s32 %v1989, %v1991
      %v1993 = vrot.slane %v1985, %v1992
      %v1995 = vunpack.c.l.s4 1983009808
      %v1996 = vunpack.c.0.s8 %v1995
      %v1997 = vlaneseq
      %v1998 = vshrl.u32 %v1997, 7
      %v1999 = vsub.s32 %v1996, %v1998
      %v2000 = vrot.slane %v1986, %v1999
      %v2001 = vcombine.low %v1900, %v1908
      %v2002 = vcombine.high %v1900, %v1908
      %v2004 = vunpack.c.l.s4 1983009808
      %v2005 = vunpack.c.0.s8 %v2004
      %v2006 = vlaneseq
      %v2007 = vshrl.u32 %v2006, 7
      %v2008 = vsub.s32 %v2005, %v2007
      %v2009 = vrot.slane %v2001, %v2008
      %v2011 = vunpack.c.l.s4 1983009808
      %v2012 = vunpack.c.0.s8 %v2011
      %v2013 = vlaneseq
      %v2014 = vshrl.u32 %v2013, 7
      %v2015 = vsub.s32 %v2012, %v2014
      %v2016 = vrot.slane %v2002, %v2015
      %v2017 = vcombine.low %v1993, %v2009
      %v2018 = vcombine.high %v1993, %v2009
      %v2020 = vunpack.c.l.s4 1934713408
      %v2021 = vunpack.c.0.s8 %v2020
      %v2022 = vlaneseq
      %v2023 = vshrl.u32 %v2022, 7
      %v2024 = vsub.s32 %v2021, %v2023
      %v2025 = vrot.slane %v2017, %v2024
      %v2027 = vunpack.c.l.s4 1934713408
      %v2028 = vunpack.c.0.s8 %v2027
      %v2029 = vlaneseq
      %v2030 = vshrl.u32 %v2029, 7
      %v2031 = vsub.s32 %v2028, %v2030
      %v2032 = vrot.slane %v2018, %v2031
      %v2033 = vcombine.low %v2000, %v2016
      %v2034 = vcombine.high %v2000, %v2016
      %v2036 = vunpack.c.l.s4 1934713408
      %v2037 = vunpack.c.0.s8 %v2036
      %v2038 = vlaneseq
      %v2039 = vshrl.u32 %v2038, 7
      %v2040 = vsub.s32 %v2037, %v2039
      %v2041 = vrot.slane %v2033, %v2040
      %v2043 = vunpack.c.l.s4 1934713408
      %v2044 = vunpack.c.0.s8 %v2043
      %v2045 = vlaneseq
      %v2046 = vshrl.u32 %v2045, 7
      %v2047 = vsub.s32 %v2044, %v2046
      %v2048 = vrot.slane %v2034, %v2047
      %v2049 = vcombine.high %v2025, 0.0
      %v2050 = vcombine.high %v2032, 0.0
      %v2051 = vcombine.high %v2041, 0.0
      %v2052 = vcombine.high %v2048, 0.0
      %2054 = vrot.lane.b32.xlu0 %v1981, 16
      %v2055 = vpop.permute.xlu0 %2054
      %2058 = vrot.lane.b32.xlu0 %v1964, 32
      %v2059 = vpop.permute.xlu0 %2058
      %2062 = vrot.lane.b32.xlu0 %v1982, 48
      %v2063 = vpop.permute.xlu0 %2062
      %2066 = vrot.lane.b32.xlu0 %v1973, 64
      %v2067 = vpop.permute.xlu0 %2066
      %2070 = vrot.lane.b32.xlu0 %v1983, 80
      %v2071 = vpop.permute.xlu0 %2070
      %2074 = vrot.lane.b32.xlu0 %v1980, 96
      %v2075 = vpop.permute.xlu0 %2074
      %2078 = vrot.lane.b32.xlu0 %v1984, 112
      %v2079 = vpop.permute.xlu0 %2078
      %2082 = vrot.lane.b32.xlu0 %v2049, 16
      %v2083 = vpop.permute.xlu0 %2082
      %2086 = vrot.lane.b32.xlu0 %v2032, 32
      %v2087 = vpop.permute.xlu0 %2086
      %2090 = vrot.lane.b32.xlu0 %v2050, 48
      %v2091 = vpop.permute.xlu0 %2090
      %2094 = vrot.lane.b32.xlu0 %v2041, 64
      %v2095 = vpop.permute.xlu0 %2094
      %2098 = vrot.lane.b32.xlu0 %v2051, 80
      %v2099 = vpop.permute.xlu0 %2098
      %2102 = vrot.lane.b32.xlu0 %v2048, 96
      %v2103 = vpop.permute.xlu0 %2102
      %2106 = vrot.lane.b32.xlu0 %v2052, 112
      %v2107 = vpop.permute.xlu0 %2106
      %v2109 = vsel %vm935, %v1957, %v2055
      %v2110 = vsel %vm937, %v2109, %v2059
      %v2111 = vsel %vm939, %v2110, %v2063
      %v2112 = vsel %vm941, %v2111, %v2067
      %v2113 = vsel %vm943, %v2112, %v2071
      %v2114 = vsel %vm945, %v2113, %v2075
      %v2115 = vsel %vm947, %v2114, %v2079
      %v2116 = vsel %vm935, %v2025, %v2083
      %v2117 = vsel %vm937, %v2116, %v2087
      %v2118 = vsel %vm939, %v2117, %v2091
      %v2119 = vsel %vm941, %v2118, %v2095
      %v2120 = vsel %vm943, %v2119, %v2099
      %v2121 = vsel %vm945, %v2120, %v2103
      %v2122 = vsel %vm947, %v2121, %v2107
      %vm2123 = vcmask 1045504
      %v2124 = vrot.slane %v731, 2
      %v2125 = vrot.slane %v732, 2
      %v2126 = vsel %vm2123, %v2124, %v2125
      %v2127 = vrot.slane %v733, 2
      %v2128 = vsel %vm2123, %v2125, %v2127
      %v2129 = vrot.slane %v734, 2
      %v2130 = vrot.slane %v735, 2
      %v2131 = vsel %vm2123, %v2129, %v2130
      %v2132 = vrot.slane %v736, 2
      %v2133 = vsel %vm2123, %v2130, %v2132
      %v2134 = vrot.slane %v737, 2
      %v2135 = vrot.slane %v738, 2
      %v2136 = vsel %vm2123, %v2134, %v2135
      %v2137 = vrot.slane %v739, 2
      %v2138 = vsel %vm2123, %v2135, %v2137
      %v2139 = vrot.slane %v740, 2
      %v2140 = vrot.slane %v741, 2
      %v2141 = vsel %vm2123, %v2139, %v2140
      %v2142 = vrot.slane %v742, 2
      %v2143 = vsel %vm2123, %v2140, %v2142
      %v2152 = vcombine.low %v2126, %v2136
      %v2153 = vcombine.high %v2126, %v2136
      %v2155 = vunpack.c.l.s4 1983009808
      %v2156 = vunpack.c.0.s8 %v2155
      %v2157 = vlaneseq
      %v2158 = vshrl.u32 %v2157, 7
      %v2159 = vsub.s32 %v2156, %v2158
      %v2160 = vrot.slane %v2152, %v2159
      %v2162 = vunpack.c.l.s4 1983009808
      %v2163 = vunpack.c.0.s8 %v2162
      %v2164 = vlaneseq
      %v2165 = vshrl.u32 %v2164, 7
      %v2166 = vsub.s32 %v2163, %v2165
      %v2167 = vrot.slane %v2153, %v2166
      %v2168 = vcombine.low %v2131, %v2141
      %v2169 = vcombine.high %v2131, %v2141
      %v2171 = vunpack.c.l.s4 1983009808
      %v2172 = vunpack.c.0.s8 %v2171
      %v2173 = vlaneseq
      %v2174 = vshrl.u32 %v2173, 7
      %v2175 = vsub.s32 %v2172, %v2174
      %v2176 = vrot.slane %v2168, %v2175
      %v2178 = vunpack.c.l.s4 1983009808
      %v2179 = vunpack.c.0.s8 %v2178
      %v2180 = vlaneseq
      %v2181 = vshrl.u32 %v2180, 7
      %v2182 = vsub.s32 %v2179, %v2181
      %v2183 = vrot.slane %v2169, %v2182
      %v2184 = vcombine.low %v2160, %v2176
      %v2185 = vcombine.high %v2160, %v2176
      %v2187 = vunpack.c.l.s4 1934713408
      %v2188 = vunpack.c.0.s8 %v2187
      %v2189 = vlaneseq
      %v2190 = vshrl.u32 %v2189, 7
      %v2191 = vsub.s32 %v2188, %v2190
      %v2192 = vrot.slane %v2184, %v2191
      %v2194 = vunpack.c.l.s4 1934713408
      %v2195 = vunpack.c.0.s8 %v2194
      %v2196 = vlaneseq
      %v2197 = vshrl.u32 %v2196, 7
      %v2198 = vsub.s32 %v2195, %v2197
      %v2199 = vrot.slane %v2185, %v2198
      %v2200 = vcombine.low %v2167, %v2183
      %v2201 = vcombine.high %v2167, %v2183
      %v2203 = vunpack.c.l.s4 1934713408
      %v2204 = vunpack.c.0.s8 %v2203
      %v2205 = vlaneseq
      %v2206 = vshrl.u32 %v2205, 7
      %v2207 = vsub.s32 %v2204, %v2206
      %v2208 = vrot.slane %v2200, %v2207
      %v2210 = vunpack.c.l.s4 1934713408
      %v2211 = vunpack.c.0.s8 %v2210
      %v2212 = vlaneseq
      %v2213 = vshrl.u32 %v2212, 7
      %v2214 = vsub.s32 %v2211, %v2213
      %v2215 = vrot.slane %v2201, %v2214
      %v2216 = vcombine.high %v2192, 0.0
      %v2217 = vcombine.high %v2199, 0.0
      %v2218 = vcombine.high %v2208, 0.0
      %v2219 = vcombine.high %v2215, 0.0
      %v2220 = vcombine.low %v2128, %v2138
      %v2221 = vcombine.high %v2128, %v2138
      %v2223 = vunpack.c.l.s4 1983009808
      %v2224 = vunpack.c.0.s8 %v2223
      %v2225 = vlaneseq
      %v2226 = vshrl.u32 %v2225, 7
      %v2227 = vsub.s32 %v2224, %v2226
      %v2228 = vrot.slane %v2220, %v2227
      %v2230 = vunpack.c.l.s4 1983009808
      %v2231 = vunpack.c.0.s8 %v2230
      %v2232 = vlaneseq
      %v2233 = vshrl.u32 %v2232, 7
      %v2234 = vsub.s32 %v2231, %v2233
      %v2235 = vrot.slane %v2221, %v2234
      %v2236 = vcombine.low %v2133, %v2143
      %v2237 = vcombine.high %v2133, %v2143
      %v2239 = vunpack.c.l.s4 1983009808
      %v2240 = vunpack.c.0.s8 %v2239
      %v2241 = vlaneseq
      %v2242 = vshrl.u32 %v2241, 7
      %v2243 = vsub.s32 %v2240, %v2242
      %v2244 = vrot.slane %v2236, %v2243
      %v2246 = vunpack.c.l.s4 1983009808
      %v2247 = vunpack.c.0.s8 %v2246
      %v2248 = vlaneseq
      %v2249 = vshrl.u32 %v2248, 7
      %v2250 = vsub.s32 %v2247, %v2249
      %v2251 = vrot.slane %v2237, %v2250
      %v2252 = vcombine.low %v2228, %v2244
      %v2253 = vcombine.high %v2228, %v2244
      %v2255 = vunpack.c.l.s4 1934713408
      %v2256 = vunpack.c.0.s8 %v2255
      %v2257 = vlaneseq
      %v2258 = vshrl.u32 %v2257, 7
      %v2259 = vsub.s32 %v2256, %v2258
      %v2260 = vrot.slane %v2252, %v2259
      %v2262 = vunpack.c.l.s4 1934713408
      %v2263 = vunpack.c.0.s8 %v2262
      %v2264 = vlaneseq
      %v2265 = vshrl.u32 %v2264, 7
      %v2266 = vsub.s32 %v2263, %v2265
      %v2267 = vrot.slane %v2253, %v2266
      %v2268 = vcombine.low %v2235, %v2251
      %v2269 = vcombine.high %v2235, %v2251
      %v2271 = vunpack.c.l.s4 1934713408
      %v2272 = vunpack.c.0.s8 %v2271
      %v2273 = vlaneseq
      %v2274 = vshrl.u32 %v2273, 7
      %v2275 = vsub.s32 %v2272, %v2274
      %v2276 = vrot.slane %v2268, %v2275
      %v2278 = vunpack.c.l.s4 1934713408
      %v2279 = vunpack.c.0.s8 %v2278
      %v2280 = vlaneseq
      %v2281 = vshrl.u32 %v2280, 7
      %v2282 = vsub.s32 %v2279, %v2281
      %v2283 = vrot.slane %v2269, %v2282
      %v2284 = vcombine.high %v2260, 0.0
      %v2285 = vcombine.high %v2267, 0.0
      %v2286 = vcombine.high %v2276, 0.0
      %v2287 = vcombine.high %v2283, 0.0
      %2289 = vrot.lane.b32.xlu0 %v2216, 16
      %v2290 = vpop.permute.xlu0 %2289
      %2293 = vrot.lane.b32.xlu0 %v2199, 32
      %v2294 = vpop.permute.xlu0 %2293
      %2297 = vrot.lane.b32.xlu0 %v2217, 48
      %v2298 = vpop.permute.xlu0 %2297
      %2301 = vrot.lane.b32.xlu0 %v2208, 64
      %v2302 = vpop.permute.xlu0 %2301
      %2305 = vrot.lane.b32.xlu0 %v2218, 80
      %v2306 = vpop.permute.xlu0 %2305
      %2309 = vrot.lane.b32.xlu0 %v2215, 96
      %v2310 = vpop.permute.xlu0 %2309
      %2313 = vrot.lane.b32.xlu0 %v2219, 112
      %v2314 = vpop.permute.xlu0 %2313
      %2317 = vrot.lane.b32.xlu0 %v2284, 16
      %v2318 = vpop.permute.xlu0 %2317
      %2321 = vrot.lane.b32.xlu0 %v2267, 32
      %v2322 = vpop.permute.xlu0 %2321
      %2325 = vrot.lane.b32.xlu0 %v2285, 48
      %v2326 = vpop.permute.xlu0 %2325
      %2329 = vrot.lane.b32.xlu0 %v2276, 64
      %v2330 = vpop.permute.xlu0 %2329
      %2333 = vrot.lane.b32.xlu0 %v2286, 80
      %v2334 = vpop.permute.xlu0 %2333
      %2337 = vrot.lane.b32.xlu0 %v2283, 96
      %v2338 = vpop.permute.xlu0 %2337
      %2341 = vrot.lane.b32.xlu0 %v2287, 112
      %v2342 = vpop.permute.xlu0 %2341
      %v2344 = vsel %vm935, %v2192, %v2290
      %v2345 = vsel %vm937, %v2344, %v2294
      %v2346 = vsel %vm939, %v2345, %v2298
      %v2347 = vsel %vm941, %v2346, %v2302
      %v2348 = vsel %vm943, %v2347, %v2306
      %v2349 = vsel %vm945, %v2348, %v2310
      %v2350 = vsel %vm947, %v2349, %v2314
      %v2351 = vsel %vm935, %v2260, %v2318
      %v2352 = vsel %vm937, %v2351, %v2322
      %v2353 = vsel %vm939, %v2352, %v2326
      %v2354 = vsel %vm941, %v2353, %v2330
      %v2355 = vsel %vm943, %v2354, %v2334
      %v2356 = vsel %vm945, %v2355, %v2338
      %v2357 = vsel %vm947, %v2356, %v2342
      %2358 = vrot.lane.b32.xlu0 %v2126, 127
      %v2359 = vpop.permute.xlu0 %2358
      %2360 = vrot.lane.b32.xlu0 %v2128, 127
      %v2361 = vpop.permute.xlu0 %2360
      %2362 = vrot.lane.b32.xlu0 %v2131, 127
      %v2363 = vpop.permute.xlu0 %2362
      %2364 = vrot.lane.b32.xlu0 %v2133, 127
      %v2365 = vpop.permute.xlu0 %2364
      %2366 = vrot.lane.b32.xlu0 %v2136, 127
      %v2367 = vpop.permute.xlu0 %2366
      %2368 = vrot.lane.b32.xlu0 %v2138, 127
      %v2369 = vpop.permute.xlu0 %2368
      %2370 = vrot.lane.b32.xlu0 %v2141, 127
      %v2371 = vpop.permute.xlu0 %2370
      %2372 = vrot.lane.b32.xlu0 %v2143, 127
      %v2373 = vpop.permute.xlu0 %2372
      %v2382 = vcombine.low %v2359, %v2367
      %v2383 = vcombine.high %v2359, %v2367
      %v2385 = vunpack.c.l.s4 1983009808
      %v2386 = vunpack.c.0.s8 %v2385
      %v2387 = vlaneseq
      %v2388 = vshrl.u32 %v2387, 7
      %v2389 = vsub.s32 %v2386, %v2388
      %v2390 = vrot.slane %v2382, %v2389
      %v2392 = vunpack.c.l.s4 1983009808
      %v2393 = vunpack.c.0.s8 %v2392
      %v2394 = vlaneseq
      %v2395 = vshrl.u32 %v2394, 7
      %v2396 = vsub.s32 %v2393, %v2395
      %v2397 = vrot.slane %v2383, %v2396
      %v2398 = vcombine.low %v2363, %v2371
      %v2399 = vcombine.high %v2363, %v2371
      %v2401 = vunpack.c.l.s4 1983009808
      %v2402 = vunpack.c.0.s8 %v2401
      %v2403 = vlaneseq
      %v2404 = vshrl.u32 %v2403, 7
      %v2405 = vsub.s32 %v2402, %v2404
      %v2406 = vrot.slane %v2398, %v2405
      %v2408 = vunpack.c.l.s4 1983009808
      %v2409 = vunpack.c.0.s8 %v2408
      %v2410 = vlaneseq
      %v2411 = vshrl.u32 %v2410, 7
      %v2412 = vsub.s32 %v2409, %v2411
      %v2413 = vrot.slane %v2399, %v2412
      %v2414 = vcombine.low %v2390, %v2406
      %v2415 = vcombine.high %v2390, %v2406
      %v2417 = vunpack.c.l.s4 1934713408
      %v2418 = vunpack.c.0.s8 %v2417
      %v2419 = vlaneseq
      %v2420 = vshrl.u32 %v2419, 7
      %v2421 = vsub.s32 %v2418, %v2420
      %v2422 = vrot.slane %v2414, %v2421
      %v2424 = vunpack.c.l.s4 1934713408
      %v2425 = vunpack.c.0.s8 %v2424
      %v2426 = vlaneseq
      %v2427 = vshrl.u32 %v2426, 7
      %v2428 = vsub.s32 %v2425, %v2427
      %v2429 = vrot.slane %v2415, %v2428
      %v2430 = vcombine.low %v2397, %v2413
      %v2431 = vcombine.high %v2397, %v2413
      %v2433 = vunpack.c.l.s4 1934713408
      %v2434 = vunpack.c.0.s8 %v2433
      %v2435 = vlaneseq
      %v2436 = vshrl.u32 %v2435, 7
      %v2437 = vsub.s32 %v2434, %v2436
      %v2438 = vrot.slane %v2430, %v2437
      %v2440 = vunpack.c.l.s4 1934713408
      %v2441 = vunpack.c.0.s8 %v2440
      %v2442 = vlaneseq
      %v2443 = vshrl.u32 %v2442, 7
      %v2444 = vsub.s32 %v2441, %v2443
      %v2445 = vrot.slane %v2431, %v2444
      %v2446 = vcombine.high %v2422, 0.0
      %v2447 = vcombine.high %v2429, 0.0
      %v2448 = vcombine.high %v2438, 0.0
      %v2449 = vcombine.high %v2445, 0.0
      %v2450 = vcombine.low %v2361, %v2369
      %v2451 = vcombine.high %v2361, %v2369
      %v2453 = vunpack.c.l.s4 1983009808
      %v2454 = vunpack.c.0.s8 %v2453
      %v2455 = vlaneseq
      %v2456 = vshrl.u32 %v2455, 7
      %v2457 = vsub.s32 %v2454, %v2456
      %v2458 = vrot.slane %v2450, %v2457
      %v2460 = vunpack.c.l.s4 1983009808
      %v2461 = vunpack.c.0.s8 %v2460
      %v2462 = vlaneseq
      %v2463 = vshrl.u32 %v2462, 7
      %v2464 = vsub.s32 %v2461, %v2463
      %v2465 = vrot.slane %v2451, %v2464
      %v2466 = vcombine.low %v2365, %v2373
      %v2467 = vcombine.high %v2365, %v2373
      %v2469 = vunpack.c.l.s4 1983009808
      %v2470 = vunpack.c.0.s8 %v2469
      %v2471 = vlaneseq
      %v2472 = vshrl.u32 %v2471, 7
      %v2473 = vsub.s32 %v2470, %v2472
      %v2474 = vrot.slane %v2466, %v2473
      %v2476 = vunpack.c.l.s4 1983009808
      %v2477 = vunpack.c.0.s8 %v2476
      %v2478 = vlaneseq
      %v2479 = vshrl.u32 %v2478, 7
      %v2480 = vsub.s32 %v2477, %v2479
      %v2481 = vrot.slane %v2467, %v2480
      %v2482 = vcombine.low %v2458, %v2474
      %v2483 = vcombine.high %v2458, %v2474
      %v2485 = vunpack.c.l.s4 1934713408
      %v2486 = vunpack.c.0.s8 %v2485
      %v2487 = vlaneseq
      %v2488 = vshrl.u32 %v2487, 7
      %v2489 = vsub.s32 %v2486, %v2488
      %v2490 = vrot.slane %v2482, %v2489
      %v2492 = vunpack.c.l.s4 1934713408
      %v2493 = vunpack.c.0.s8 %v2492
      %v2494 = vlaneseq
      %v2495 = vshrl.u32 %v2494, 7
      %v2496 = vsub.s32 %v2493, %v2495
      %v2497 = vrot.slane %v2483, %v2496
      %v2498 = vcombine.low %v2465, %v2481
      %v2499 = vcombine.high %v2465, %v2481
      %v2501 = vunpack.c.l.s4 1934713408
      %v2502 = vunpack.c.0.s8 %v2501
      %v2503 = vlaneseq
      %v2504 = vshrl.u32 %v2503, 7
      %v2505 = vsub.s32 %v2502, %v2504
      %v2506 = vrot.slane %v2498, %v2505
      %v2508 = vunpack.c.l.s4 1934713408
      %v2509 = vunpack.c.0.s8 %v2508
      %v2510 = vlaneseq
      %v2511 = vshrl.u32 %v2510, 7
      %v2512 = vsub.s32 %v2509, %v2511
      %v2513 = vrot.slane %v2499, %v2512
      %v2514 = vcombine.high %v2490, 0.0
      %v2515 = vcombine.high %v2497, 0.0
      %v2516 = vcombine.high %v2506, 0.0
      %v2517 = vcombine.high %v2513, 0.0
      %2519 = vrot.lane.b32.xlu0 %v2446, 16
      %v2520 = vpop.permute.xlu0 %2519
      %2523 = vrot.lane.b32.xlu0 %v2429, 32
      %v2524 = vpop.permute.xlu0 %2523
      %2527 = vrot.lane.b32.xlu0 %v2447, 48
      %v2528 = vpop.permute.xlu0 %2527
      %2531 = vrot.lane.b32.xlu0 %v2438, 64
      %v2532 = vpop.permute.xlu0 %2531
      %2535 = vrot.lane.b32.xlu0 %v2448, 80
      %v2536 = vpop.permute.xlu0 %2535
      %2539 = vrot.lane.b32.xlu0 %v2445, 96
      %v2540 = vpop.permute.xlu0 %2539
      %2543 = vrot.lane.b32.xlu0 %v2449, 112
      %v2544 = vpop.permute.xlu0 %2543
      %2547 = vrot.lane.b32.xlu0 %v2514, 16
      %v2548 = vpop.permute.xlu0 %2547
      %2551 = vrot.lane.b32.xlu0 %v2497, 32
      %v2552 = vpop.permute.xlu0 %2551
      %2555 = vrot.lane.b32.xlu0 %v2515, 48
      %v2556 = vpop.permute.xlu0 %2555
      %2559 = vrot.lane.b32.xlu0 %v2506, 64
      %v2560 = vpop.permute.xlu0 %2559
      %2563 = vrot.lane.b32.xlu0 %v2516, 80
      %v2564 = vpop.permute.xlu0 %2563
      %2567 = vrot.lane.b32.xlu0 %v2513, 96
      %v2568 = vpop.permute.xlu0 %2567
      %2571 = vrot.lane.b32.xlu0 %v2517, 112
      %v2572 = vpop.permute.xlu0 %2571
      %v2574 = vsel %vm935, %v2422, %v2520
      %v2575 = vsel %vm937, %v2574, %v2524
      %v2576 = vsel %vm939, %v2575, %v2528
      %v2577 = vsel %vm941, %v2576, %v2532
      %v2578 = vsel %vm943, %v2577, %v2536
      %v2579 = vsel %vm945, %v2578, %v2540
      %v2580 = vsel %vm947, %v2579, %v2544
      %v2581 = vsel %vm935, %v2490, %v2548
      %v2582 = vsel %vm937, %v2581, %v2552
      %v2583 = vsel %vm939, %v2582, %v2556
      %v2584 = vsel %vm941, %v2583, %v2560
      %v2585 = vsel %vm943, %v2584, %v2564
      %v2586 = vsel %vm945, %v2585, %v2568
      %v2587 = vsel %vm947, %v2586, %v2572
      %2588 = vrot.lane.b32.xlu0 %v2126, 126
      %v2589 = vpop.permute.xlu0 %2588
      %2590 = vrot.lane.b32.xlu0 %v2128, 126
      %v2591 = vpop.permute.xlu0 %2590
      %2592 = vrot.lane.b32.xlu0 %v2131, 126
      %v2593 = vpop.permute.xlu0 %2592
      %2594 = vrot.lane.b32.xlu0 %v2133, 126
      %v2595 = vpop.permute.xlu0 %2594
      %2596 = vrot.lane.b32.xlu0 %v2136, 126
      %v2597 = vpop.permute.xlu0 %2596
      %2598 = vrot.lane.b32.xlu0 %v2138, 126
      %v2599 = vpop.permute.xlu0 %2598
      %2600 = vrot.lane.b32.xlu0 %v2141, 126
      %v2601 = vpop.permute.xlu0 %2600
      %2602 = vrot.lane.b32.xlu0 %v2143, 126
      %v2603 = vpop.permute.xlu0 %2602
      %v2612 = vcombine.low %v2589, %v2597
      %v2613 = vcombine.high %v2589, %v2597
      %v2615 = vunpack.c.l.s4 1983009808
      %v2616 = vunpack.c.0.s8 %v2615
      %v2617 = vlaneseq
      %v2618 = vshrl.u32 %v2617, 7
      %v2619 = vsub.s32 %v2616, %v2618
      %v2620 = vrot.slane %v2612, %v2619
      %v2622 = vunpack.c.l.s4 1983009808
      %v2623 = vunpack.c.0.s8 %v2622
      %v2624 = vlaneseq
      %v2625 = vshrl.u32 %v2624, 7
      %v2626 = vsub.s32 %v2623, %v2625
      %v2627 = vrot.slane %v2613, %v2626
      %v2628 = vcombine.low %v2593, %v2601
      %v2629 = vcombine.high %v2593, %v2601
      %v2631 = vunpack.c.l.s4 1983009808
      %v2632 = vunpack.c.0.s8 %v2631
      %v2633 = vlaneseq
      %v2634 = vshrl.u32 %v2633, 7
      %v2635 = vsub.s32 %v2632, %v2634
      %v2636 = vrot.slane %v2628, %v2635
      %v2638 = vunpack.c.l.s4 1983009808
      %v2639 = vunpack.c.0.s8 %v2638
      %v2640 = vlaneseq
      %v2641 = vshrl.u32 %v2640, 7
      %v2642 = vsub.s32 %v2639, %v2641
      %v2643 = vrot.slane %v2629, %v2642
      %v2644 = vcombine.low %v2620, %v2636
      %v2645 = vcombine.high %v2620, %v2636
      %v2647 = vunpack.c.l.s4 1934713408
      %v2648 = vunpack.c.0.s8 %v2647
      %v2649 = vlaneseq
      %v2650 = vshrl.u32 %v2649, 7
      %v2651 = vsub.s32 %v2648, %v2650
      %v2652 = vrot.slane %v2644, %v2651
      %v2654 = vunpack.c.l.s4 1934713408
      %v2655 = vunpack.c.0.s8 %v2654
      %v2656 = vlaneseq
      %v2657 = vshrl.u32 %v2656, 7
      %v2658 = vsub.s32 %v2655, %v2657
      %v2659 = vrot.slane %v2645, %v2658
      %v2660 = vcombine.low %v2627, %v2643
      %v2661 = vcombine.high %v2627, %v2643
      %v2663 = vunpack.c.l.s4 1934713408
      %v2664 = vunpack.c.0.s8 %v2663
      %v2665 = vlaneseq
      %v2666 = vshrl.u32 %v2665, 7
      %v2667 = vsub.s32 %v2664, %v2666
      %v2668 = vrot.slane %v2660, %v2667
      %v2670 = vunpack.c.l.s4 1934713408
      %v2671 = vunpack.c.0.s8 %v2670
      %v2672 = vlaneseq
      %v2673 = vshrl.u32 %v2672, 7
      %v2674 = vsub.s32 %v2671, %v2673
      %v2675 = vrot.slane %v2661, %v2674
      %v2676 = vcombine.high %v2652, 0.0
      %v2677 = vcombine.high %v2659, 0.0
      %v2678 = vcombine.high %v2668, 0.0
      %v2679 = vcombine.high %v2675, 0.0
      %v2680 = vcombine.low %v2591, %v2599
      %v2681 = vcombine.high %v2591, %v2599
      %v2683 = vunpack.c.l.s4 1983009808
      %v2684 = vunpack.c.0.s8 %v2683
      %v2685 = vlaneseq
      %v2686 = vshrl.u32 %v2685, 7
      %v2687 = vsub.s32 %v2684, %v2686
      %v2688 = vrot.slane %v2680, %v2687
      %v2690 = vunpack.c.l.s4 1983009808
      %v2691 = vunpack.c.0.s8 %v2690
      %v2692 = vlaneseq
      %v2693 = vshrl.u32 %v2692, 7
      %v2694 = vsub.s32 %v2691, %v2693
      %v2695 = vrot.slane %v2681, %v2694
      %v2696 = vcombine.low %v2595, %v2603
      %v2697 = vcombine.high %v2595, %v2603
      %v2699 = vunpack.c.l.s4 1983009808
      %v2700 = vunpack.c.0.s8 %v2699
      %v2701 = vlaneseq
      %v2702 = vshrl.u32 %v2701, 7
      %v2703 = vsub.s32 %v2700, %v2702
      %v2704 = vrot.slane %v2696, %v2703
      %v2706 = vunpack.c.l.s4 1983009808
      %v2707 = vunpack.c.0.s8 %v2706
      %v2708 = vlaneseq
      %v2709 = vshrl.u32 %v2708, 7
      %v2710 = vsub.s32 %v2707, %v2709
      %v2711 = vrot.slane %v2697, %v2710
      %v2712 = vcombine.low %v2688, %v2704
      %v2713 = vcombine.high %v2688, %v2704
      %v2715 = vunpack.c.l.s4 1934713408
      %v2716 = vunpack.c.0.s8 %v2715
      %v2717 = vlaneseq
      %v2718 = vshrl.u32 %v2717, 7
      %v2719 = vsub.s32 %v2716, %v2718
      %v2720 = vrot.slane %v2712, %v2719
      %v2722 = vunpack.c.l.s4 1934713408
      %v2723 = vunpack.c.0.s8 %v2722
      %v2724 = vlaneseq
      %v2725 = vshrl.u32 %v2724, 7
      %v2726 = vsub.s32 %v2723, %v2725
      %v2727 = vrot.slane %v2713, %v2726
      %v2728 = vcombine.low %v2695, %v2711
      %v2729 = vcombine.high %v2695, %v2711
      %v2731 = vunpack.c.l.s4 1934713408
      %v2732 = vunpack.c.0.s8 %v2731
      %v2733 = vlaneseq
      %v2734 = vshrl.u32 %v2733, 7
      %v2735 = vsub.s32 %v2732, %v2734
      %v2736 = vrot.slane %v2728, %v2735
      %v2738 = vunpack.c.l.s4 1934713408
      %v2739 = vunpack.c.0.s8 %v2738
      %v2740 = vlaneseq
      %v2741 = vshrl.u32 %v2740, 7
      %v2742 = vsub.s32 %v2739, %v2741
      %v2743 = vrot.slane %v2729, %v2742
      %v2744 = vcombine.high %v2720, 0.0
      %v2745 = vcombine.high %v2727, 0.0
      %v2746 = vcombine.high %v2736, 0.0
      %v2747 = vcombine.high %v2743, 0.0
      %2749 = vrot.lane.b32.xlu0 %v2676, 16
      %v2750 = vpop.permute.xlu0 %2749
      %2753 = vrot.lane.b32.xlu0 %v2659, 32
      %v2754 = vpop.permute.xlu0 %2753
      %2757 = vrot.lane.b32.xlu0 %v2677, 48
      %v2758 = vpop.permute.xlu0 %2757
      %2761 = vrot.lane.b32.xlu0 %v2668, 64
      %v2762 = vpop.permute.xlu0 %2761
      %2765 = vrot.lane.b32.xlu0 %v2678, 80
      %v2766 = vpop.permute.xlu0 %2765
      %2769 = vrot.lane.b32.xlu0 %v2675, 96
      %v2770 = vpop.permute.xlu0 %2769
      %2773 = vrot.lane.b32.xlu0 %v2679, 112
      %v2774 = vpop.permute.xlu0 %2773
      %2777 = vrot.lane.b32.xlu0 %v2744, 16
      %v2778 = vpop.permute.xlu0 %2777
      %2781 = vrot.lane.b32.xlu0 %v2727, 32
      %v2782 = vpop.permute.xlu0 %2781
      %2785 = vrot.lane.b32.xlu0 %v2745, 48
      %v2786 = vpop.permute.xlu0 %2785
      %2789 = vrot.lane.b32.xlu0 %v2736, 64
      %v2790 = vpop.permute.xlu0 %2789
      %2793 = vrot.lane.b32.xlu0 %v2746, 80
      %v2794 = vpop.permute.xlu0 %2793
      %2797 = vrot.lane.b32.xlu0 %v2743, 96
      %v2798 = vpop.permute.xlu0 %2797
      %2801 = vrot.lane.b32.xlu0 %v2747, 112
      %v2802 = vpop.permute.xlu0 %2801
      %v2804 = vsel %vm935, %v2652, %v2750
      %v2805 = vsel %vm937, %v2804, %v2754
      %v2806 = vsel %vm939, %v2805, %v2758
      %v2807 = vsel %vm941, %v2806, %v2762
      %v2808 = vsel %vm943, %v2807, %v2766
      %v2809 = vsel %vm945, %v2808, %v2770
      %v2810 = vsel %vm947, %v2809, %v2774
      %v2811 = vsel %vm935, %v2720, %v2778
      %v2812 = vsel %vm937, %v2811, %v2782
      %v2813 = vsel %vm939, %v2812, %v2786
      %v2814 = vsel %vm941, %v2813, %v2790
      %v2815 = vsel %vm943, %v2814, %v2794
      %v2816 = vsel %vm945, %v2815, %v2798
      %v2817 = vsel %vm947, %v2816, %v2802
      %v2820 = vrot.slane %v1186, 4
      %v2821 = vrot.slane %v1193, 4
      %v2826 = vrot.slane %v1655, 4
      %v2827 = vrot.slane %v1662, 4
      %v2832 = vrot.slane %v2115, 4
      %v2833 = vrot.slane %v2122, 4
      %v2838 = vrot.slane %v2580, 4
      %v2839 = vrot.slane %v2587, 4
      %vm2842 = vcmask 1043456
      %v2843 = vsel %vm2842, %v948, %v2820
      %v2844 = vsel %vm2842, %v955, %v2821
      %v2845 = vsel %vm2842, %v1416, %v2826
      %v2846 = vsel %vm2842, %v1423, %v2827
      %v2847 = vsel %vm2842, %v1885, %v2832
      %v2848 = vsel %vm2842, %v1892, %v2833
      %v2849 = vsel %vm2842, %v2350, %v2838
      %v2850 = vsel %vm2842, %v2357, %v2839
      %v2851 = vld [vmem:[%s1] sm:$0xf]
      %v2852 = vld [vmem:[%s2] sm:$0xf]
      %2854 = vset.pattern.permute.xlu0 0
      %2855 = vperm.xlu0 %2854, %v2852
      %v2856 = vpop.permute.xlu0 %2855
      %vm2858 = vcmask 293888
      %v2860 = vsel %vm2858, %v2851, 0
      %v2863 = vsel %vm2842, %v2810, 0
      %v2866 = vsel %vm2842, %v2817, 0
      %2868 = vmatprep.subr.mxu0 %v2844
      %2869 = vmatpush1.msra.mxu0 %v2843
      %2870 = vmatprep.subr.mxu0 %v2846
      %2871 = vmatpush1.msra.mxu0 %v2845
      %2872 = vmatprep.subr.mxu0 %v2848
      %2873 = vmatpush1.msra.mxu0 %v2847
      %2874 = vmatprep.subr.mxu0 %v2850
      %2875 = vmatpush1.msra.mxu0 %v2849
      %2876 = vmatprep.subr.mxu0 %v2866
      %2877 = vmatpush1.msra.mxu0 %v2863
      %2878 = vmatprep.subr.mxu0 0.0
      %2879 = vmatpush1.msra.mxu0 0.0
      %2880 = vmatprep.subr.mxu0 0.0
      %2881 = vmatpush1.msra.mxu0 0.0
      %2882 = vmatprep.subr.mxu0 0.0
      %2883 = vmatpush1.msra.mxu0 0.0
      %2884 = vmatprep.subr.mxu0 0.0
      %2885 = vmatpush1.msra.mxu0 0.0
      %2886 = vmatprep.subr.mxu0 0.0
      %2887 = vmatpush1.msra.mxu0 0.0
      %2888 = vmatprep.subr.mxu0 0.0
      %2889 = vmatpush1.msra.mxu0 0.0
      %2890 = vmatprep.subr.mxu0 0.0
      %2891 = vmatpush1.msra.mxu0 0.0
      %2892 = vmatprep.subr.mxu0 0.0
      %2893 = vmatpush1.msra.mxu0 0.0
      %2894 = vmatprep.subr.mxu0 0.0
      %2895 = vmatpush1.msra.mxu0 0.0
      %2896 = vmatprep.subr.mxu0 0.0
      %2897 = vmatpush1.msra.mxu0 0.0
      %2898 = vmatprep.subr.mxu0 0.0
      %2899 = vmatpush1.msra.mxu0 0.0
      %2900 = vmatprep.subr.mxu0 0.0
      %2901 = vmatpush1.msra.mxu0 0.0
      %2902 = vmatprep.subr.mxu0 0.0
      %2903 = vmatpush1.msra.mxu0 0.0
      %2904 = vmatprep.subr.mxu0 0.0
      %2905 = vmatpush1.msra.mxu0 0.0
      %2906 = vmatprep.subr.mxu0 0.0
      %2907 = vmatpush1.msra.mxu0 0.0
      %2908 = vmatprep.subr.mxu0 0.0
      %2909 = vmatpush1.msra.mxu0 0.0
      %2910 = vmatprep.subr.mxu0 0.0
      %2911 = vmatpush1.msra.mxu0 0.0
      %2912 = vmatprep.subr.mxu0 0.0
      %2913 = vmatpush1.msra.mxu0 0.0
      %2914 = vmatprep.subr.mxu0 0.0
      %2915 = vmatpush1.msra.mxu0 0.0
      %2916 = vmatprep.subr.mxu0 0.0
      %2917 = vmatpush1.msra.mxu0 0.0
      %2918 = vmatprep.subr.mxu0 0.0
      %2919 = vmatpush1.msra.mxu0 0.0
      %2920 = vmatprep.subr.mxu0 0.0
      %2921 = vmatpush1.msra.mxu0 0.0
      %2922 = vmatprep.subr.mxu0 0.0
      %2923 = vmatpush1.msra.mxu0 0.0
      %2924 = vmatprep.subr.mxu0 0.0
      %2925 = vmatpush1.msra.mxu0 0.0
      %2926 = vmatprep.subr.mxu0 0.0
      %2927 = vmatpush1.msra.mxu0 0.0
      %2928 = vmatprep.subr.mxu0 0.0
      %2929 = vmatpush1.msra.mxu0 0.0
      %2930 = vmatprep.subr.mxu0 0.0
      %2931 = vmatpush1.msra.mxu0 0.0
      %2932 = vmatprep.mubr.f32.mxu0 0.0
      %2933 = vmatmul.mubr.f32.gmra.mrb[0].mxu0 %v2860
      %v2934 = vpop.f32.mrb[0].mxu0
      %v2935 = vadd.f32 %v2856, %v2934
      %v2936 = vpop.f32.mrb[0].mxu0
      %v2937 = vadd.f32 %v2856, %v2936
      %2938 = vdwg.mxu0
      %v2939 = vsel %vm2842, %v2935, 0.0
      %v2940 = vsel %vm2842, %v2937, 0.0
      %v2941 = vadd.f32 %v2939, %v2940
      %2942 = vadd.xlane.f32.xlu0 %v2941
      %v2943 = vpop.xlane.xlu0 %2942
      %v2944 = vrcp.pop 256.0
      %v2945 = vmul.f32 %v2943, %v2944
      %v2946 = vsub.f32 %v2935, %v2945
      %v2947 = vsub.f32 %v2937, %v2945
      %v2948 = vmul.f32 %v2946, %v2946
      %v2949 = vmul.f32 %v2947, %v2947
      %v2950 = vsel %vm2842, %v2948, 0.0
      %v2951 = vsel %vm2842, %v2949, 0.0
      %v2952 = vadd.f32 %v2950, %v2951
      %2953 = vadd.xlane.f32.xlu0 %v2952
      %v2954 = vpop.xlane.xlu0 %2953
      %v2955 = vmul.f32 %v2954, %v2944
      %v2956 = vadd.f32 %v2955, 1e-05
      %v2957 = vrsqrt.pop %v2956
      %v2958 = vmul.f32 %v2946, %v2957
      %v2959 = vmul.f32 %v2947, %v2957
      %v2960 = vld [vmem:[%s3] sm:$0xf]
      %2962 = vset.pattern.permute.xlu0 0
      %2963 = vperm.xlu0 %2962, %v2960
      %v2964 = vpop.permute.xlu0 %2963
      %v2966 = vmul.f32 %v2958, %v2964
      %v2967 = vmul.f32 %v2959, %v2964
      %v2968 = vld [vmem:[%s4] sm:$0xf]
      %2970 = vset.pattern.permute.xlu0 0
      %2971 = vperm.xlu0 %2970, %v2968
      %v2972 = vpop.permute.xlu0 %2971
      %v2974 = vadd.f32 %v2966, %v2972
      %v2975 = vadd.f32 %v2967, %v2972
      %v2976 = vmax.f32 %v2974, 0.0
      %v2977 = vmax.f32 %v2975, 0.0
      %2979 = vrot.lane.b32.xlu0 %v2976, 112
      %v2980 = vpop.permute.xlu0 %2979
      %2982 = vrot.lane.b32.xlu0 %v2976, 96
      %v2983 = vpop.permute.xlu0 %2982
      %2985 = vrot.lane.b32.xlu0 %v2976, 80
      %v2986 = vpop.permute.xlu0 %2985
      %2988 = vrot.lane.b32.xlu0 %v2976, 64
      %v2989 = vpop.permute.xlu0 %2988
      %2991 = vrot.lane.b32.xlu0 %v2976, 48
      %v2992 = vpop.permute.xlu0 %2991
      %2994 = vrot.lane.b32.xlu0 %v2976, 32
      %v2995 = vpop.permute.xlu0 %2994
      %2997 = vrot.lane.b32.xlu0 %v2976, 16
      %v2998 = vpop.permute.xlu0 %2997
      %3001 = vrot.lane.b32.xlu0 %v2977, 112
      %v3002 = vpop.permute.xlu0 %3001
      %3004 = vrot.lane.b32.xlu0 %v2977, 96
      %v3005 = vpop.permute.xlu0 %3004
      %3007 = vrot.lane.b32.xlu0 %v2977, 80
      %v3008 = vpop.permute.xlu0 %3007
      %3010 = vrot.lane.b32.xlu0 %v2977, 64
      %v3011 = vpop.permute.xlu0 %3010
      %3013 = vrot.lane.b32.xlu0 %v2977, 48
      %v3014 = vpop.permute.xlu0 %3013
      %3016 = vrot.lane.b32.xlu0 %v2977, 32
      %v3017 = vpop.permute.xlu0 %3016
      %3019 = vrot.lane.b32.xlu0 %v2977, 16
      %v3020 = vpop.permute.xlu0 %3019
      %v3022 = vcombine.low %v2976, %v2983
      %v3024 = vunpack.c.l.s4 1983009808
      %v3025 = vunpack.c.0.s8 %v3024
      %v3026 = vlaneseq
      %v3027 = vshrl.u32 %v3026, 7
      %v3028 = vsub.s32 %v3025, %v3027
      %v3029 = vrot.slane %v3022, %v3028
      %v3030 = vcombine.low %v2980, %v2986
      %v3032 = vunpack.c.l.s4 1983009808
      %v3033 = vunpack.c.0.s8 %v3032
      %v3034 = vlaneseq
      %v3035 = vshrl.u32 %v3034, 7
      %v3036 = vsub.s32 %v3033, %v3035
      %v3037 = vrot.slane %v3030, %v3036
      %v3038 = vcombine.low %v2989, %v2995
      %v3040 = vunpack.c.l.s4 1983009808
      %v3041 = vunpack.c.0.s8 %v3040
      %v3042 = vlaneseq
      %v3043 = vshrl.u32 %v3042, 7
      %v3044 = vsub.s32 %v3041, %v3043
      %v3045 = vrot.slane %v3038, %v3044
      %v3046 = vcombine.low %v2992, %v2998
      %v3048 = vunpack.c.l.s4 1983009808
      %v3049 = vunpack.c.0.s8 %v3048
      %v3050 = vlaneseq
      %v3051 = vshrl.u32 %v3050, 7
      %v3052 = vsub.s32 %v3049, %v3051
      %v3053 = vrot.slane %v3046, %v3052
      %v3054 = vcombine.low %v3029, %v3037
      %v3055 = vcombine.high %v3029, %v3037
      %v3057 = vunpack.c.l.s4 1934713408
      %v3058 = vunpack.c.0.s8 %v3057
      %v3059 = vlaneseq
      %v3060 = vshrl.u32 %v3059, 7
      %v3061 = vsub.s32 %v3058, %v3060
      %v3062 = vrot.slane %v3054, %v3061
      %v3064 = vunpack.c.l.s4 1934713408
      %v3065 = vunpack.c.0.s8 %v3064
      %v3066 = vlaneseq
      %v3067 = vshrl.u32 %v3066, 7
      %v3068 = vsub.s32 %v3065, %v3067
      %v3069 = vrot.slane %v3055, %v3068
      %v3070 = vcombine.low %v3045, %v3053
      %v3071 = vcombine.high %v3045, %v3053
      %v3073 = vunpack.c.l.s4 1934713408
      %v3074 = vunpack.c.0.s8 %v3073
      %v3075 = vlaneseq
      %v3076 = vshrl.u32 %v3075, 7
      %v3077 = vsub.s32 %v3074, %v3076
      %v3078 = vrot.slane %v3070, %v3077
      %v3080 = vunpack.c.l.s4 1934713408
      %v3081 = vunpack.c.0.s8 %v3080
      %v3082 = vlaneseq
      %v3083 = vshrl.u32 %v3082, 7
      %v3084 = vsub.s32 %v3081, %v3083
      %v3085 = vrot.slane %v3071, %v3084
      %v3086 = vcombine.low %v3062, %v3078
      %v3087 = vcombine.high %v3062, %v3078
      %v3088 = vcombine.low %v3069, %v3085
      %v3089 = vcombine.high %v3069, %v3085
      %v3090 = vcombine.low %v2977, %v3005
      %v3092 = vunpack.c.l.s4 1983009808
      %v3093 = vunpack.c.0.s8 %v3092
      %v3094 = vlaneseq
      %v3095 = vshrl.u32 %v3094, 7
      %v3096 = vsub.s32 %v3093, %v3095
      %v3097 = vrot.slane %v3090, %v3096
      %v3098 = vcombine.low %v3002, %v3008
      %v3100 = vunpack.c.l.s4 1983009808
      %v3101 = vunpack.c.0.s8 %v3100
      %v3102 = vlaneseq
      %v3103 = vshrl.u32 %v3102, 7
      %v3104 = vsub.s32 %v3101, %v3103
      %v3105 = vrot.slane %v3098, %v3104
      %v3106 = vcombine.low %v3011, %v3017
      %v3108 = vunpack.c.l.s4 1983009808
      %v3109 = vunpack.c.0.s8 %v3108
      %v3110 = vlaneseq
      %v3111 = vshrl.u32 %v3110, 7
      %v3112 = vsub.s32 %v3109, %v3111
      %v3113 = vrot.slane %v3106, %v3112
      %v3114 = vcombine.low %v3014, %v3020
      %v3116 = vunpack.c.l.s4 1983009808
      %v3117 = vunpack.c.0.s8 %v3116
      %v3118 = vlaneseq
      %v3119 = vshrl.u32 %v3118, 7
      %v3120 = vsub.s32 %v3117, %v3119
      %v3121 = vrot.slane %v3114, %v3120
      %v3122 = vcombine.low %v3097, %v3105
      %v3123 = vcombine.high %v3097, %v3105
      %v3125 = vunpack.c.l.s4 1934713408
      %v3126 = vunpack.c.0.s8 %v3125
      %v3127 = vlaneseq
      %v3128 = vshrl.u32 %v3127, 7
      %v3129 = vsub.s32 %v3126, %v3128
      %v3130 = vrot.slane %v3122, %v3129
      %v3132 = vunpack.c.l.s4 1934713408
      %v3133 = vunpack.c.0.s8 %v3132
      %v3134 = vlaneseq
      %v3135 = vshrl.u32 %v3134, 7
      %v3136 = vsub.s32 %v3133, %v3135
      %v3137 = vrot.slane %v3123, %v3136
      %v3138 = vcombine.low %v3113, %v3121
      %v3139 = vcombine.high %v3113, %v3121
      %v3141 = vunpack.c.l.s4 1934713408
      %v3142 = vunpack.c.0.s8 %v3141
      %v3143 = vlaneseq
      %v3144 = vshrl.u32 %v3143, 7
      %v3145 = vsub.s32 %v3142, %v3144
      %v3146 = vrot.slane %v3138, %v3145
      %v3148 = vunpack.c.l.s4 1934713408
      %v3149 = vunpack.c.0.s8 %v3148
      %v3150 = vlaneseq
      %v3151 = vshrl.u32 %v3150, 7
      %v3152 = vsub.s32 %v3149, %v3151
      %v3153 = vrot.slane %v3139, %v3152
      %v3154 = vcombine.low %v3130, %v3146
      %v3155 = vcombine.high %v3130, %v3146
      %v3156 = vcombine.low %v3137, %v3153
      %v3157 = vcombine.high %v3137, %v3153
      %v3162 = vrot.slane %v3086, 1
      %v3163 = vrot.slane %v3087, 1
      %v3164 = vrot.slane %v3088, 1
      %v3165 = vrot.slane %v3089, 1
      %v3174 = vrot.slane %v3086, 7
      %v3175 = vrot.slane %v3154, 7
      %v3176 = vsel %vm552, %v3174, %v3175
      %v3177 = vrot.slane %v3087, 7
      %v3178 = vrot.slane %v3155, 7
      %v3179 = vsel %vm552, %v3177, %v3178
      %v3180 = vrot.slane %v3088, 7
      %v3181 = vrot.slane %v3156, 7
      %v3182 = vsel %vm552, %v3180, %v3181
      %v3183 = vrot.slane %v3089, 7
      %v3184 = vrot.slane %v3157, 7
      %v3185 = vsel %vm552, %v3183, %v3184
      %v3194 = vrot.slane %v3154, 5
      %v3195 = vrot.slane %v3155, 5
      %v3196 = vrot.slane %v3156, 5
      %v3197 = vrot.slane %v3157, 5
      %v3202 = vsel %vm552, %v3162, %v3174
      %v3203 = vsel %vm552, %v3163, %v3177
      %v3204 = vsel %vm552, %v3164, %v3180
      %v3205 = vsel %vm552, %v3165, %v3183
      %v3206 = vsel %vm552, %v3175, %v3194
      %v3207 = vsel %vm552, %v3178, %v3195
      %v3208 = vsel %vm552, %v3181, %v3196
      %v3209 = vsel %vm552, %v3184, %v3197
      %3218 = vrot.lane.b32.xlu0 %v3202, 127
      %v3219 = vpop.permute.xlu0 %3218
      %3220 = vrot.lane.b32.xlu0 %v3176, 127
      %v3221 = vpop.permute.xlu0 %3220
      %3222 = vrot.lane.b32.xlu0 %v3206, 127
      %v3223 = vpop.permute.xlu0 %3222
      %3224 = vrot.lane.b32.xlu0 %v3203, 127
      %v3225 = vpop.permute.xlu0 %3224
      %3226 = vrot.lane.b32.xlu0 %v3179, 127
      %v3227 = vpop.permute.xlu0 %3226
      %3228 = vrot.lane.b32.xlu0 %v3207, 127
      %v3229 = vpop.permute.xlu0 %3228
      %3230 = vrot.lane.b32.xlu0 %v3204, 127
      %v3231 = vpop.permute.xlu0 %3230
      %3232 = vrot.lane.b32.xlu0 %v3182, 127
      %v3233 = vpop.permute.xlu0 %3232
      %3234 = vrot.lane.b32.xlu0 %v3208, 127
      %v3235 = vpop.permute.xlu0 %3234
      %3236 = vrot.lane.b32.xlu0 %v3205, 127
      %v3237 = vpop.permute.xlu0 %3236
      %3238 = vrot.lane.b32.xlu0 %v3185, 127
      %v3239 = vpop.permute.xlu0 %3238
      %3240 = vrot.lane.b32.xlu0 %v3209, 127
      %v3241 = vpop.permute.xlu0 %3240
      %3254 = vrot.lane.b32.xlu0 %v3202, 1
      %v3255 = vpop.permute.xlu0 %3254
      %3256 = vrot.lane.b32.xlu0 %v3176, 1
      %v3257 = vpop.permute.xlu0 %3256
      %3258 = vrot.lane.b32.xlu0 %v3206, 1
      %v3259 = vpop.permute.xlu0 %3258
      %3260 = vrot.lane.b32.xlu0 %v3203, 1
      %v3261 = vpop.permute.xlu0 %3260
      %3262 = vrot.lane.b32.xlu0 %v3179, 1
      %v3263 = vpop.permute.xlu0 %3262
      %3264 = vrot.lane.b32.xlu0 %v3207, 1
      %v3265 = vpop.permute.xlu0 %3264
      %3266 = vrot.lane.b32.xlu0 %v3204, 1
      %v3267 = vpop.permute.xlu0 %3266
      %3268 = vrot.lane.b32.xlu0 %v3182, 1
      %v3269 = vpop.permute.xlu0 %3268
      %3270 = vrot.lane.b32.xlu0 %v3208, 1
      %v3271 = vpop.permute.xlu0 %3270
      %3272 = vrot.lane.b32.xlu0 %v3205, 1
      %v3273 = vpop.permute.xlu0 %3272
      %3274 = vrot.lane.b32.xlu0 %v3185, 1
      %v3275 = vpop.permute.xlu0 %3274
      %3276 = vrot.lane.b32.xlu0 %v3209, 1
      %v3277 = vpop.permute.xlu0 %3276
      %3290 = vrot.lane.b32.xlu0 %v3202, 3
      %v3291 = vpop.permute.xlu0 %3290
      %3292 = vrot.lane.b32.xlu0 %v3176, 3
      %v3293 = vpop.permute.xlu0 %3292
      %3294 = vrot.lane.b32.xlu0 %v3206, 3
      %v3295 = vpop.permute.xlu0 %3294
      %3296 = vrot.lane.b32.xlu0 %v3203, 3
      %v3297 = vpop.permute.xlu0 %3296
      %3298 = vrot.lane.b32.xlu0 %v3179, 3
      %v3299 = vpop.permute.xlu0 %3298
      %3300 = vrot.lane.b32.xlu0 %v3207, 3
      %v3301 = vpop.permute.xlu0 %3300
      %3302 = vrot.lane.b32.xlu0 %v3204, 3
      %v3303 = vpop.permute.xlu0 %3302
      %3304 = vrot.lane.b32.xlu0 %v3182, 3
      %v3305 = vpop.permute.xlu0 %3304
      %3306 = vrot.lane.b32.xlu0 %v3208, 3
      %v3307 = vpop.permute.xlu0 %3306
      %3308 = vrot.lane.b32.xlu0 %v3205, 3
      %v3309 = vpop.permute.xlu0 %3308
      %3310 = vrot.lane.b32.xlu0 %v3185, 3
      %v3311 = vpop.permute.xlu0 %3310
      %3312 = vrot.lane.b32.xlu0 %v3209, 3
      %v3313 = vpop.permute.xlu0 %3312
      %v3326 = vsel %vm717, %v3219, %v3255
      %v3327 = vsel %vm717, %v3221, %v3257
      %v3328 = vsel %vm717, %v3223, %v3259
      %v3329 = vsel %vm717, %v3225, %v3261
      %v3330 = vsel %vm717, %v3227, %v3263
      %v3331 = vsel %vm717, %v3229, %v3265
      %v3332 = vsel %vm717, %v3231, %v3267
      %v3333 = vsel %vm717, %v3233, %v3269
      %v3334 = vsel %vm717, %v3235, %v3271
      %v3335 = vsel %vm717, %v3237, %v3273
      %v3336 = vsel %vm717, %v3239, %v3275
      %v3337 = vsel %vm717, %v3241, %v3277
      %v3338 = vsel %vm730, %v3326, %v3291
      %v3339 = vsel %vm730, %v3327, %v3293
      %v3340 = vsel %vm730, %v3328, %v3295
      %v3341 = vsel %vm730, %v3329, %v3297
      %v3342 = vsel %vm730, %v3330, %v3299
      %v3343 = vsel %vm730, %v3331, %v3301
      %v3344 = vsel %vm730, %v3332, %v3303
      %v3345 = vsel %vm730, %v3333, %v3305
      %v3346 = vsel %vm730, %v3334, %v3307
      %v3347 = vsel %vm730, %v3335, %v3309
      %v3348 = vsel %vm730, %v3336, %v3311
      %v3349 = vsel %vm730, %v3337, %v3313
      %v3350 = vcombine.low %v3338, %v3344
      %v3351 = vcombine.high %v3338, %v3344
      %v3353 = vunpack.c.l.s4 1983009808
      %v3354 = vunpack.c.0.s8 %v3353
      %v3355 = vlaneseq
      %v3356 = vshrl.u32 %v3355, 7
      %v3357 = vsub.s32 %v3354, %v3356
      %v3358 = vrot.slane %v3350, %v3357
      %v3360 = vunpack.c.l.s4 1983009808
      %v3361 = vunpack.c.0.s8 %v3360
      %v3362 = vlaneseq
      %v3363 = vshrl.u32 %v3362, 7
      %v3364 = vsub.s32 %v3361, %v3363
      %v3365 = vrot.slane %v3351, %v3364
      %v3366 = vcombine.low %v3341, %v3347
      %v3367 = vcombine.high %v3341, %v3347
      %v3369 = vunpack.c.l.s4 1983009808
      %v3370 = vunpack.c.0.s8 %v3369
      %v3371 = vlaneseq
      %v3372 = vshrl.u32 %v3371, 7
      %v3373 = vsub.s32 %v3370, %v3372
      %v3374 = vrot.slane %v3366, %v3373
      %v3376 = vunpack.c.l.s4 1983009808
      %v3377 = vunpack.c.0.s8 %v3376
      %v3378 = vlaneseq
      %v3379 = vshrl.u32 %v3378, 7
      %v3380 = vsub.s32 %v3377, %v3379
      %v3381 = vrot.slane %v3367, %v3380
      %v3382 = vcombine.low %v3358, %v3374
      %v3383 = vcombine.high %v3358, %v3374
      %v3385 = vunpack.c.l.s4 1934713408
      %v3386 = vunpack.c.0.s8 %v3385
      %v3387 = vlaneseq
      %v3388 = vshrl.u32 %v3387, 7
      %v3389 = vsub.s32 %v3386, %v3388
      %v3390 = vrot.slane %v3382, %v3389
      %v3392 = vunpack.c.l.s4 1934713408
      %v3393 = vunpack.c.0.s8 %v3392
      %v3394 = vlaneseq
      %v3395 = vshrl.u32 %v3394, 7
      %v3396 = vsub.s32 %v3393, %v3395
      %v3397 = vrot.slane %v3383, %v3396
      %v3398 = vcombine.low %v3365, %v3381
      %v3399 = vcombine.high %v3365, %v3381
      %v3401 = vunpack.c.l.s4 1934713408
      %v3402 = vunpack.c.0.s8 %v3401
      %v3403 = vlaneseq
      %v3404 = vshrl.u32 %v3403, 7
      %v3405 = vsub.s32 %v3402, %v3404
      %v3406 = vrot.slane %v3398, %v3405
      %v3408 = vunpack.c.l.s4 1934713408
      %v3409 = vunpack.c.0.s8 %v3408
      %v3410 = vlaneseq
      %v3411 = vshrl.u32 %v3410, 7
      %v3412 = vsub.s32 %v3409, %v3411
      %v3413 = vrot.slane %v3399, %v3412
      %v3414 = vcombine.high %v3390, 0.0
      %v3415 = vcombine.high %v3397, 0.0
      %v3416 = vcombine.high %v3406, 0.0
      %v3417 = vcombine.high %v3413, 0.0
      %v3418 = vcombine.low %v3339, %v3345
      %v3419 = vcombine.high %v3339, %v3345
      %v3421 = vunpack.c.l.s4 1983009808
      %v3422 = vunpack.c.0.s8 %v3421
      %v3423 = vlaneseq
      %v3424 = vshrl.u32 %v3423, 7
      %v3425 = vsub.s32 %v3422, %v3424
      %v3426 = vrot.slane %v3418, %v3425
      %v3428 = vunpack.c.l.s4 1983009808
      %v3429 = vunpack.c.0.s8 %v3428
      %v3430 = vlaneseq
      %v3431 = vshrl.u32 %v3430, 7
      %v3432 = vsub.s32 %v3429, %v3431
      %v3433 = vrot.slane %v3419, %v3432
      %v3434 = vcombine.low %v3342, %v3348
      %v3435 = vcombine.high %v3342, %v3348
      %v3437 = vunpack.c.l.s4 1983009808
      %v3438 = vunpack.c.0.s8 %v3437
      %v3439 = vlaneseq
      %v3440 = vshrl.u32 %v3439, 7
      %v3441 = vsub.s32 %v3438, %v3440
      %v3442 = vrot.slane %v3434, %v3441
      %v3444 = vunpack.c.l.s4 1983009808
      %v3445 = vunpack.c.0.s8 %v3444
      %v3446 = vlaneseq
      %v3447 = vshrl.u32 %v3446, 7
      %v3448 = vsub.s32 %v3445, %v3447
      %v3449 = vrot.slane %v3435, %v3448
      %v3450 = vcombine.low %v3426, %v3442
      %v3451 = vcombine.high %v3426, %v3442
      %v3453 = vunpack.c.l.s4 1934713408
      %v3454 = vunpack.c.0.s8 %v3453
      %v3455 = vlaneseq
      %v3456 = vshrl.u32 %v3455, 7
      %v3457 = vsub.s32 %v3454, %v3456
      %v3458 = vrot.slane %v3450, %v3457
      %v3460 = vunpack.c.l.s4 1934713408
      %v3461 = vunpack.c.0.s8 %v3460
      %v3462 = vlaneseq
      %v3463 = vshrl.u32 %v3462, 7
      %v3464 = vsub.s32 %v3461, %v3463
      %v3465 = vrot.slane %v3451, %v3464
      %v3466 = vcombine.low %v3433, %v3449
      %v3467 = vcombine.high %v3433, %v3449
      %v3469 = vunpack.c.l.s4 1934713408
      %v3470 = vunpack.c.0.s8 %v3469
      %v3471 = vlaneseq
      %v3472 = vshrl.u32 %v3471, 7
      %v3473 = vsub.s32 %v3470, %v3472
      %v3474 = vrot.slane %v3466, %v3473
      %v3476 = vunpack.c.l.s4 1934713408
      %v3477 = vunpack.c.0.s8 %v3476
      %v3478 = vlaneseq
      %v3479 = vshrl.u32 %v3478, 7
      %v3480 = vsub.s32 %v3477, %v3479
      %v3481 = vrot.slane %v3467, %v3480
      %v3482 = vcombine.high %v3458, 0.0
      %v3483 = vcombine.high %v3465, 0.0
      %v3484 = vcombine.high %v3474, 0.0
      %v3485 = vcombine.high %v3481, 0.0
      %3487 = vrot.lane.b32.xlu0 %v3414, 16
      %v3488 = vpop.permute.xlu0 %3487
      %3491 = vrot.lane.b32.xlu0 %v3397, 32
      %v3492 = vpop.permute.xlu0 %3491
      %3495 = vrot.lane.b32.xlu0 %v3415, 48
      %v3496 = vpop.permute.xlu0 %3495
      %3499 = vrot.lane.b32.xlu0 %v3406, 64
      %v3500 = vpop.permute.xlu0 %3499
      %3503 = vrot.lane.b32.xlu0 %v3416, 80
      %v3504 = vpop.permute.xlu0 %3503
      %3507 = vrot.lane.b32.xlu0 %v3413, 96
      %v3508 = vpop.permute.xlu0 %3507
      %3511 = vrot.lane.b32.xlu0 %v3417, 112
      %v3512 = vpop.permute.xlu0 %3511
      %3515 = vrot.lane.b32.xlu0 %v3482, 16
      %v3516 = vpop.permute.xlu0 %3515
      %3519 = vrot.lane.b32.xlu0 %v3465, 32
      %v3520 = vpop.permute.xlu0 %3519
      %3523 = vrot.lane.b32.xlu0 %v3483, 48
      %v3524 = vpop.permute.xlu0 %3523
      %3527 = vrot.lane.b32.xlu0 %v3474, 64
      %v3528 = vpop.permute.xlu0 %3527
      %3531 = vrot.lane.b32.xlu0 %v3484, 80
      %v3532 = vpop.permute.xlu0 %3531
      %3535 = vrot.lane.b32.xlu0 %v3481, 96
      %v3536 = vpop.permute.xlu0 %3535
      %3539 = vrot.lane.b32.xlu0 %v3485, 112
      %v3540 = vpop.permute.xlu0 %3539
      %v3542 = vsel %vm935, %v3390, %v3488
      %v3543 = vsel %vm937, %v3542, %v3492
      %v3544 = vsel %vm939, %v3543, %v3496
      %v3545 = vsel %vm941, %v3544, %v3500
      %v3546 = vsel %vm943, %v3545, %v3504
      %v3547 = vsel %vm945, %v3546, %v3508
      %v3548 = vsel %vm947, %v3547, %v3512
      %v3549 = vsel %vm935, %v3458, %v3516
      %v3550 = vsel %vm937, %v3549, %v3520
      %v3551 = vsel %vm939, %v3550, %v3524
      %v3552 = vsel %vm941, %v3551, %v3528
      %v3553 = vsel %vm943, %v3552, %v3532
      %v3554 = vsel %vm945, %v3553, %v3536
      %v3555 = vsel %vm947, %v3554, %v3540
      %3564 = vrot.lane.b32.xlu0 %v3338, 127
      %v3565 = vpop.permute.xlu0 %3564
      %3566 = vrot.lane.b32.xlu0 %v3339, 127
      %v3567 = vpop.permute.xlu0 %3566
      %3568 = vrot.lane.b32.xlu0 %v3341, 127
      %v3569 = vpop.permute.xlu0 %3568
      %3570 = vrot.lane.b32.xlu0 %v3342, 127
      %v3571 = vpop.permute.xlu0 %3570
      %3572 = vrot.lane.b32.xlu0 %v3344, 127
      %v3573 = vpop.permute.xlu0 %3572
      %3574 = vrot.lane.b32.xlu0 %v3345, 127
      %v3575 = vpop.permute.xlu0 %3574
      %3576 = vrot.lane.b32.xlu0 %v3347, 127
      %v3577 = vpop.permute.xlu0 %3576
      %3578 = vrot.lane.b32.xlu0 %v3348, 127
      %v3579 = vpop.permute.xlu0 %3578
      %v3588 = vcombine.low %v3565, %v3573
      %v3589 = vcombine.high %v3565, %v3573
      %v3591 = vunpack.c.l.s4 1983009808
      %v3592 = vunpack.c.0.s8 %v3591
      %v3593 = vlaneseq
      %v3594 = vshrl.u32 %v3593, 7
      %v3595 = vsub.s32 %v3592, %v3594
      %v3596 = vrot.slane %v3588, %v3595
      %v3598 = vunpack.c.l.s4 1983009808
      %v3599 = vunpack.c.0.s8 %v3598
      %v3600 = vlaneseq
      %v3601 = vshrl.u32 %v3600, 7
      %v3602 = vsub.s32 %v3599, %v3601
      %v3603 = vrot.slane %v3589, %v3602
      %v3604 = vcombine.low %v3569, %v3577
      %v3605 = vcombine.high %v3569, %v3577
      %v3607 = vunpack.c.l.s4 1983009808
      %v3608 = vunpack.c.0.s8 %v3607
      %v3609 = vlaneseq
      %v3610 = vshrl.u32 %v3609, 7
      %v3611 = vsub.s32 %v3608, %v3610
      %v3612 = vrot.slane %v3604, %v3611
      %v3614 = vunpack.c.l.s4 1983009808
      %v3615 = vunpack.c.0.s8 %v3614
      %v3616 = vlaneseq
      %v3617 = vshrl.u32 %v3616, 7
      %v3618 = vsub.s32 %v3615, %v3617
      %v3619 = vrot.slane %v3605, %v3618
      %v3620 = vcombine.low %v3596, %v3612
      %v3621 = vcombine.high %v3596, %v3612
      %v3623 = vunpack.c.l.s4 1934713408
      %v3624 = vunpack.c.0.s8 %v3623
      %v3625 = vlaneseq
      %v3626 = vshrl.u32 %v3625, 7
      %v3627 = vsub.s32 %v3624, %v3626
      %v3628 = vrot.slane %v3620, %v3627
      %v3630 = vunpack.c.l.s4 1934713408
      %v3631 = vunpack.c.0.s8 %v3630
      %v3632 = vlaneseq
      %v3633 = vshrl.u32 %v3632, 7
      %v3634 = vsub.s32 %v3631, %v3633
      %v3635 = vrot.slane %v3621, %v3634
      %v3636 = vcombine.low %v3603, %v3619
      %v3637 = vcombine.high %v3603, %v3619
      %v3639 = vunpack.c.l.s4 1934713408
      %v3640 = vunpack.c.0.s8 %v3639
      %v3641 = vlaneseq
      %v3642 = vshrl.u32 %v3641, 7
      %v3643 = vsub.s32 %v3640, %v3642
      %v3644 = vrot.slane %v3636, %v3643
      %v3646 = vunpack.c.l.s4 1934713408
      %v3647 = vunpack.c.0.s8 %v3646
      %v3648 = vlaneseq
      %v3649 = vshrl.u32 %v3648, 7
      %v3650 = vsub.s32 %v3647, %v3649
      %v3651 = vrot.slane %v3637, %v3650
      %v3652 = vcombine.high %v3628, 0.0
      %v3653 = vcombine.high %v3635, 0.0
      %v3654 = vcombine.high %v3644, 0.0
      %v3655 = vcombine.high %v3651, 0.0
      %v3656 = vcombine.low %v3567, %v3575
      %v3657 = vcombine.high %v3567, %v3575
      %v3659 = vunpack.c.l.s4 1983009808
      %v3660 = vunpack.c.0.s8 %v3659
      %v3661 = vlaneseq
      %v3662 = vshrl.u32 %v3661, 7
      %v3663 = vsub.s32 %v3660, %v3662
      %v3664 = vrot.slane %v3656, %v3663
      %v3666 = vunpack.c.l.s4 1983009808
      %v3667 = vunpack.c.0.s8 %v3666
      %v3668 = vlaneseq
      %v3669 = vshrl.u32 %v3668, 7
      %v3670 = vsub.s32 %v3667, %v3669
      %v3671 = vrot.slane %v3657, %v3670
      %v3672 = vcombine.low %v3571, %v3579
      %v3673 = vcombine.high %v3571, %v3579
      %v3675 = vunpack.c.l.s4 1983009808
      %v3676 = vunpack.c.0.s8 %v3675
      %v3677 = vlaneseq
      %v3678 = vshrl.u32 %v3677, 7
      %v3679 = vsub.s32 %v3676, %v3678
      %v3680 = vrot.slane %v3672, %v3679
      %v3682 = vunpack.c.l.s4 1983009808
      %v3683 = vunpack.c.0.s8 %v3682
      %v3684 = vlaneseq
      %v3685 = vshrl.u32 %v3684, 7
      %v3686 = vsub.s32 %v3683, %v3685
      %v3687 = vrot.slane %v3673, %v3686
      %v3688 = vcombine.low %v3664, %v3680
      %v3689 = vcombine.high %v3664, %v3680
      %v3691 = vunpack.c.l.s4 1934713408
      %v3692 = vunpack.c.0.s8 %v3691
      %v3693 = vlaneseq
      %v3694 = vshrl.u32 %v3693, 7
      %v3695 = vsub.s32 %v3692, %v3694
      %v3696 = vrot.slane %v3688, %v3695
      %v3698 = vunpack.c.l.s4 1934713408
      %v3699 = vunpack.c.0.s8 %v3698
      %v3700 = vlaneseq
      %v3701 = vshrl.u32 %v3700, 7
      %v3702 = vsub.s32 %v3699, %v3701
      %v3703 = vrot.slane %v3689, %v3702
      %v3704 = vcombine.low %v3671, %v3687
      %v3705 = vcombine.high %v3671, %v3687
      %v3707 = vunpack.c.l.s4 1934713408
      %v3708 = vunpack.c.0.s8 %v3707
      %v3709 = vlaneseq
      %v3710 = vshrl.u32 %v3709, 7
      %v3711 = vsub.s32 %v3708, %v3710
      %v3712 = vrot.slane %v3704, %v3711
      %v3714 = vunpack.c.l.s4 1934713408
      %v3715 = vunpack.c.0.s8 %v3714
      %v3716 = vlaneseq
      %v3717 = vshrl.u32 %v3716, 7
      %v3718 = vsub.s32 %v3715, %v3717
      %v3719 = vrot.slane %v3705, %v3718
      %v3720 = vcombine.high %v3696, 0.0
      %v3721 = vcombine.high %v3703, 0.0
      %v3722 = vcombine.high %v3712, 0.0
      %v3723 = vcombine.high %v3719, 0.0
      %3725 = vrot.lane.b32.xlu0 %v3652, 16
      %v3726 = vpop.permute.xlu0 %3725
      %3729 = vrot.lane.b32.xlu0 %v3635, 32
      %v3730 = vpop.permute.xlu0 %3729
      %3733 = vrot.lane.b32.xlu0 %v3653, 48
      %v3734 = vpop.permute.xlu0 %3733
      %3737 = vrot.lane.b32.xlu0 %v3644, 64
      %v3738 = vpop.permute.xlu0 %3737
      %3741 = vrot.lane.b32.xlu0 %v3654, 80
      %v3742 = vpop.permute.xlu0 %3741
      %3745 = vrot.lane.b32.xlu0 %v3651, 96
      %v3746 = vpop.permute.xlu0 %3745
      %3749 = vrot.lane.b32.xlu0 %v3655, 112
      %v3750 = vpop.permute.xlu0 %3749
      %3753 = vrot.lane.b32.xlu0 %v3720, 16
      %v3754 = vpop.permute.xlu0 %3753
      %3757 = vrot.lane.b32.xlu0 %v3703, 32
      %v3758 = vpop.permute.xlu0 %3757
      %3761 = vrot.lane.b32.xlu0 %v3721, 48
      %v3762 = vpop.permute.xlu0 %3761
      %3765 = vrot.lane.b32.xlu0 %v3712, 64
      %v3766 = vpop.permute.xlu0 %3765
      %3769 = vrot.lane.b32.xlu0 %v3722, 80
      %v3770 = vpop.permute.xlu0 %3769
      %3773 = vrot.lane.b32.xlu0 %v3719, 96
      %v3774 = vpop.permute.xlu0 %3773
      %3777 = vrot.lane.b32.xlu0 %v3723, 112
      %v3778 = vpop.permute.xlu0 %3777
      %v3780 = vsel %vm935, %v3628, %v3726
      %v3781 = vsel %vm937, %v3780, %v3730
      %v3782 = vsel %vm939, %v3781, %v3734
      %v3783 = vsel %vm941, %v3782, %v3738
      %v3784 = vsel %vm943, %v3783, %v3742
      %v3785 = vsel %vm945, %v3784, %v3746
      %v3786 = vsel %vm947, %v3785, %v3750
      %v3787 = vsel %vm935, %v3696, %v3754
      %v3788 = vsel %vm937, %v3787, %v3758
      %v3789 = vsel %vm939, %v3788, %v3762
      %v3790 = vsel %vm941, %v3789, %v3766
      %v3791 = vsel %vm943, %v3790, %v3770
      %v3792 = vsel %vm945, %v3791, %v3774
      %v3793 = vsel %vm947, %v3792, %v3778
      %3794 = vrot.lane.b32.xlu0 %v3338, 126
      %v3795 = vpop.permute.xlu0 %3794
      %3796 = vrot.lane.b32.xlu0 %v3339, 126
      %v3797 = vpop.permute.xlu0 %3796
      %3798 = vrot.lane.b32.xlu0 %v3341, 126
      %v3799 = vpop.permute.xlu0 %3798
      %3800 = vrot.lane.b32.xlu0 %v3342, 126
      %v3801 = vpop.permute.xlu0 %3800
      %3802 = vrot.lane.b32.xlu0 %v3344, 126
      %v3803 = vpop.permute.xlu0 %3802
      %3804 = vrot.lane.b32.xlu0 %v3345, 126
      %v3805 = vpop.permute.xlu0 %3804
      %3806 = vrot.lane.b32.xlu0 %v3347, 126
      %v3807 = vpop.permute.xlu0 %3806
      %3808 = vrot.lane.b32.xlu0 %v3348, 126
      %v3809 = vpop.permute.xlu0 %3808
      %v3818 = vcombine.low %v3795, %v3803
      %v3819 = vcombine.high %v3795, %v3803
      %v3821 = vunpack.c.l.s4 1983009808
      %v3822 = vunpack.c.0.s8 %v3821
      %v3823 = vlaneseq
      %v3824 = vshrl.u32 %v3823, 7
      %v3825 = vsub.s32 %v3822, %v3824
      %v3826 = vrot.slane %v3818, %v3825
      %v3828 = vunpack.c.l.s4 1983009808
      %v3829 = vunpack.c.0.s8 %v3828
      %v3830 = vlaneseq
      %v3831 = vshrl.u32 %v3830, 7
      %v3832 = vsub.s32 %v3829, %v3831
      %v3833 = vrot.slane %v3819, %v3832
      %v3834 = vcombine.low %v3799, %v3807
      %v3835 = vcombine.high %v3799, %v3807
      %v3837 = vunpack.c.l.s4 1983009808
      %v3838 = vunpack.c.0.s8 %v3837
      %v3839 = vlaneseq
      %v3840 = vshrl.u32 %v3839, 7
      %v3841 = vsub.s32 %v3838, %v3840
      %v3842 = vrot.slane %v3834, %v3841
      %v3844 = vunpack.c.l.s4 1983009808
      %v3845 = vunpack.c.0.s8 %v3844
      %v3846 = vlaneseq
      %v3847 = vshrl.u32 %v3846, 7
      %v3848 = vsub.s32 %v3845, %v3847
      %v3849 = vrot.slane %v3835, %v3848
      %v3850 = vcombine.low %v3826, %v3842
      %v3851 = vcombine.high %v3826, %v3842
      %v3853 = vunpack.c.l.s4 1934713408
      %v3854 = vunpack.c.0.s8 %v3853
      %v3855 = vlaneseq
      %v3856 = vshrl.u32 %v3855, 7
      %v3857 = vsub.s32 %v3854, %v3856
      %v3858 = vrot.slane %v3850, %v3857
      %v3860 = vunpack.c.l.s4 1934713408
      %v3861 = vunpack.c.0.s8 %v3860
      %v3862 = vlaneseq
      %v3863 = vshrl.u32 %v3862, 7
      %v3864 = vsub.s32 %v3861, %v3863
      %v3865 = vrot.slane %v3851, %v3864
      %v3866 = vcombine.low %v3833, %v3849
      %v3867 = vcombine.high %v3833, %v3849
      %v3869 = vunpack.c.l.s4 1934713408
      %v3870 = vunpack.c.0.s8 %v3869
      %v3871 = vlaneseq
      %v3872 = vshrl.u32 %v3871, 7
      %v3873 = vsub.s32 %v3870, %v3872
      %v3874 = vrot.slane %v3866, %v3873
      %v3876 = vunpack.c.l.s4 1934713408
      %v3877 = vunpack.c.0.s8 %v3876
      %v3878 = vlaneseq
      %v3879 = vshrl.u32 %v3878, 7
      %v3880 = vsub.s32 %v3877, %v3879
      %v3881 = vrot.slane %v3867, %v3880
      %v3882 = vcombine.high %v3858, 0.0
      %v3883 = vcombine.high %v3865, 0.0
      %v3884 = vcombine.high %v3874, 0.0
      %v3885 = vcombine.high %v3881, 0.0
      %v3886 = vcombine.low %v3797, %v3805
      %v3887 = vcombine.high %v3797, %v3805
      %v3889 = vunpack.c.l.s4 1983009808
      %v3890 = vunpack.c.0.s8 %v3889
      %v3891 = vlaneseq
      %v3892 = vshrl.u32 %v3891, 7
      %v3893 = vsub.s32 %v3890, %v3892
      %v3894 = vrot.slane %v3886, %v3893
      %v3896 = vunpack.c.l.s4 1983009808
      %v3897 = vunpack.c.0.s8 %v3896
      %v3898 = vlaneseq
      %v3899 = vshrl.u32 %v3898, 7
      %v3900 = vsub.s32 %v3897, %v3899
      %v3901 = vrot.slane %v3887, %v3900
      %v3902 = vcombine.low %v3801, %v3809
      %v3903 = vcombine.high %v3801, %v3809
      %v3905 = vunpack.c.l.s4 1983009808
      %v3906 = vunpack.c.0.s8 %v3905
      %v3907 = vlaneseq
      %v3908 = vshrl.u32 %v3907, 7
      %v3909 = vsub.s32 %v3906, %v3908
      %v3910 = vrot.slane %v3902, %v3909
      %v3912 = vunpack.c.l.s4 1983009808
      %v3913 = vunpack.c.0.s8 %v3912
      %v3914 = vlaneseq
      %v3915 = vshrl.u32 %v3914, 7
      %v3916 = vsub.s32 %v3913, %v3915
      %v3917 = vrot.slane %v3903, %v3916
      %v3918 = vcombine.low %v3894, %v3910
      %v3919 = vcombine.high %v3894, %v3910
      %v3921 = vunpack.c.l.s4 1934713408
      %v3922 = vunpack.c.0.s8 %v3921
      %v3923 = vlaneseq
      %v3924 = vshrl.u32 %v3923, 7
      %v3925 = vsub.s32 %v3922, %v3924
      %v3926 = vrot.slane %v3918, %v3925
      %v3928 = vunpack.c.l.s4 1934713408
      %v3929 = vunpack.c.0.s8 %v3928
      %v3930 = vlaneseq
      %v3931 = vshrl.u32 %v3930, 7
      %v3932 = vsub.s32 %v3929, %v3931
      %v3933 = vrot.slane %v3919, %v3932
      %v3934 = vcombine.low %v3901, %v3917
      %v3935 = vcombine.high %v3901, %v3917
      %v3937 = vunpack.c.l.s4 1934713408
      %v3938 = vunpack.c.0.s8 %v3937
      %v3939 = vlaneseq
      %v3940 = vshrl.u32 %v3939, 7
      %v3941 = vsub.s32 %v3938, %v3940
      %v3942 = vrot.slane %v3934, %v3941
      %v3944 = vunpack.c.l.s4 1934713408
      %v3945 = vunpack.c.0.s8 %v3944
      %v3946 = vlaneseq
      %v3947 = vshrl.u32 %v3946, 7
      %v3948 = vsub.s32 %v3945, %v3947
      %v3949 = vrot.slane %v3935, %v3948
      %v3950 = vcombine.high %v3926, 0.0
      %v3951 = vcombine.high %v3933, 0.0
      %v3952 = vcombine.high %v3942, 0.0
      %v3953 = vcombine.high %v3949, 0.0
      %3955 = vrot.lane.b32.xlu0 %v3882, 16
      %v3956 = vpop.permute.xlu0 %3955
      %3959 = vrot.lane.b32.xlu0 %v3865, 32
      %v3960 = vpop.permute.xlu0 %3959
      %3963 = vrot.lane.b32.xlu0 %v3883, 48
      %v3964 = vpop.permute.xlu0 %3963
      %3967 = vrot.lane.b32.xlu0 %v3874, 64
      %v3968 = vpop.permute.xlu0 %3967
      %3971 = vrot.lane.b32.xlu0 %v3884, 80
      %v3972 = vpop.permute.xlu0 %3971
      %3975 = vrot.lane.b32.xlu0 %v3881, 96
      %v3976 = vpop.permute.xlu0 %3975
      %3979 = vrot.lane.b32.xlu0 %v3885, 112
      %v3980 = vpop.permute.xlu0 %3979
      %3983 = vrot.lane.b32.xlu0 %v3950, 16
      %v3984 = vpop.permute.xlu0 %3983
      %3987 = vrot.lane.b32.xlu0 %v3933, 32
      %v3988 = vpop.permute.xlu0 %3987
      %3991 = vrot.lane.b32.xlu0 %v3951, 48
      %v3992 = vpop.permute.xlu0 %3991
      %3995 = vrot.lane.b32.xlu0 %v3942, 64
      %v3996 = vpop.permute.xlu0 %3995
      %3999 = vrot.lane.b32.xlu0 %v3952, 80
      %v4000 = vpop.permute.xlu0 %3999
      %4003 = vrot.lane.b32.xlu0 %v3949, 96
      %v4004 = vpop.permute.xlu0 %4003
      %4007 = vrot.lane.b32.xlu0 %v3953, 112
      %v4008 = vpop.permute.xlu0 %4007
      %v4010 = vsel %vm935, %v3858, %v3956
      %v4011 = vsel %vm937, %v4010, %v3960
      %v4012 = vsel %vm939, %v4011, %v3964
      %v4013 = vsel %vm941, %v4012, %v3968
      %v4014 = vsel %vm943, %v4013, %v3972
      %v4015 = vsel %vm945, %v4014, %v3976
      %v4016 = vsel %vm947, %v4015, %v3980
      %v4017 = vsel %vm935, %v3926, %v3984
      %v4018 = vsel %vm937, %v4017, %v3988
      %v4019 = vsel %vm939, %v4018, %v3992
      %v4020 = vsel %vm941, %v4019, %v3996
      %v4021 = vsel %vm943, %v4020, %v4000
      %v4022 = vsel %vm945, %v4021, %v4004
      %v4023 = vsel %vm947, %v4022, %v4008
      %v4028 = vrot.slane %v3338, 1
      %v4029 = vrot.slane %v3339, 1
      %v4030 = vsel %vm1428, %v4028, %v4029
      %v4031 = vrot.slane %v3340, 1
      %v4032 = vsel %vm1428, %v4029, %v4031
      %v4033 = vrot.slane %v3341, 1
      %v4034 = vrot.slane %v3342, 1
      %v4035 = vsel %vm1428, %v4033, %v4034
      %v4036 = vrot.slane %v3343, 1
      %v4037 = vsel %vm1428, %v4034, %v4036
      %v4038 = vrot.slane %v3344, 1
      %v4039 = vrot.slane %v3345, 1
      %v4040 = vsel %vm1428, %v4038, %v4039
      %v4041 = vrot.slane %v3346, 1
      %v4042 = vsel %vm1428, %v4039, %v4041
      %v4043 = vrot.slane %v3347, 1
      %v4044 = vrot.slane %v3348, 1
      %v4045 = vsel %vm1428, %v4043, %v4044
      %v4046 = vrot.slane %v3349, 1
      %v4047 = vsel %vm1428, %v4044, %v4046
      %v4056 = vcombine.low %v4030, %v4040
      %v4057 = vcombine.high %v4030, %v4040
      %v4059 = vunpack.c.l.s4 1983009808
      %v4060 = vunpack.c.0.s8 %v4059
      %v4061 = vlaneseq
      %v4062 = vshrl.u32 %v4061, 7
      %v4063 = vsub.s32 %v4060, %v4062
      %v4064 = vrot.slane %v4056, %v4063
      %v4066 = vunpack.c.l.s4 1983009808
      %v4067 = vunpack.c.0.s8 %v4066
      %v4068 = vlaneseq
      %v4069 = vshrl.u32 %v4068, 7
      %v4070 = vsub.s32 %v4067, %v4069
      %v4071 = vrot.slane %v4057, %v4070
      %v4072 = vcombine.low %v4035, %v4045
      %v4073 = vcombine.high %v4035, %v4045
      %v4075 = vunpack.c.l.s4 1983009808
      %v4076 = vunpack.c.0.s8 %v4075
      %v4077 = vlaneseq
      %v4078 = vshrl.u32 %v4077, 7
      %v4079 = vsub.s32 %v4076, %v4078
      %v4080 = vrot.slane %v4072, %v4079
      %v4082 = vunpack.c.l.s4 1983009808
      %v4083 = vunpack.c.0.s8 %v4082
      %v4084 = vlaneseq
      %v4085 = vshrl.u32 %v4084, 7
      %v4086 = vsub.s32 %v4083, %v4085
      %v4087 = vrot.slane %v4073, %v4086
      %v4088 = vcombine.low %v4064, %v4080
      %v4089 = vcombine.high %v4064, %v4080
      %v4091 = vunpack.c.l.s4 1934713408
      %v4092 = vunpack.c.0.s8 %v4091
      %v4093 = vlaneseq
      %v4094 = vshrl.u32 %v4093, 7
      %v4095 = vsub.s32 %v4092, %v4094
      %v4096 = vrot.slane %v4088, %v4095
      %v4098 = vunpack.c.l.s4 1934713408
      %v4099 = vunpack.c.0.s8 %v4098
      %v4100 = vlaneseq
      %v4101 = vshrl.u32 %v4100, 7
      %v4102 = vsub.s32 %v4099, %v4101
      %v4103 = vrot.slane %v4089, %v4102
      %v4104 = vcombine.low %v4071, %v4087
      %v4105 = vcombine.high %v4071, %v4087
      %v4107 = vunpack.c.l.s4 1934713408
      %v4108 = vunpack.c.0.s8 %v4107
      %v4109 = vlaneseq
      %v4110 = vshrl.u32 %v4109, 7
      %v4111 = vsub.s32 %v4108, %v4110
      %v4112 = vrot.slane %v4104, %v4111
      %v4114 = vunpack.c.l.s4 1934713408
      %v4115 = vunpack.c.0.s8 %v4114
      %v4116 = vlaneseq
      %v4117 = vshrl.u32 %v4116, 7
      %v4118 = vsub.s32 %v4115, %v4117
      %v4119 = vrot.slane %v4105, %v4118
      %v4120 = vcombine.high %v4096, 0.0
      %v4121 = vcombine.high %v4103, 0.0
      %v4122 = vcombine.high %v4112, 0.0
      %v4123 = vcombine.high %v4119, 0.0
      %v4124 = vcombine.low %v4032, %v4042
      %v4125 = vcombine.high %v4032, %v4042
      %v4127 = vunpack.c.l.s4 1983009808
      %v4128 = vunpack.c.0.s8 %v4127
      %v4129 = vlaneseq
      %v4130 = vshrl.u32 %v4129, 7
      %v4131 = vsub.s32 %v4128, %v4130
      %v4132 = vrot.slane %v4124, %v4131
      %v4134 = vunpack.c.l.s4 1983009808
      %v4135 = vunpack.c.0.s8 %v4134
      %v4136 = vlaneseq
      %v4137 = vshrl.u32 %v4136, 7
      %v4138 = vsub.s32 %v4135, %v4137
      %v4139 = vrot.slane %v4125, %v4138
      %v4140 = vcombine.low %v4037, %v4047
      %v4141 = vcombine.high %v4037, %v4047
      %v4143 = vunpack.c.l.s4 1983009808
      %v4144 = vunpack.c.0.s8 %v4143
      %v4145 = vlaneseq
      %v4146 = vshrl.u32 %v4145, 7
      %v4147 = vsub.s32 %v4144, %v4146
      %v4148 = vrot.slane %v4140, %v4147
      %v4150 = vunpack.c.l.s4 1983009808
      %v4151 = vunpack.c.0.s8 %v4150
      %v4152 = vlaneseq
      %v4153 = vshrl.u32 %v4152, 7
      %v4154 = vsub.s32 %v4151, %v4153
      %v4155 = vrot.slane %v4141, %v4154
      %v4156 = vcombine.low %v4132, %v4148
      %v4157 = vcombine.high %v4132, %v4148
      %v4159 = vunpack.c.l.s4 1934713408
      %v4160 = vunpack.c.0.s8 %v4159
      %v4161 = vlaneseq
      %v4162 = vshrl.u32 %v4161, 7
      %v4163 = vsub.s32 %v4160, %v4162
      %v4164 = vrot.slane %v4156, %v4163
      %v4166 = vunpack.c.l.s4 1934713408
      %v4167 = vunpack.c.0.s8 %v4166
      %v4168 = vlaneseq
      %v4169 = vshrl.u32 %v4168, 7
      %v4170 = vsub.s32 %v4167, %v4169
      %v4171 = vrot.slane %v4157, %v4170
      %v4172 = vcombine.low %v4139, %v4155
      %v4173 = vcombine.high %v4139, %v4155
      %v4175 = vunpack.c.l.s4 1934713408
      %v4176 = vunpack.c.0.s8 %v4175
      %v4177 = vlaneseq
      %v4178 = vshrl.u32 %v4177, 7
      %v4179 = vsub.s32 %v4176, %v4178
      %v4180 = vrot.slane %v4172, %v4179
      %v4182 = vunpack.c.l.s4 1934713408
      %v4183 = vunpack.c.0.s8 %v4182
      %v4184 = vlaneseq
      %v4185 = vshrl.u32 %v4184, 7
      %v4186 = vsub.s32 %v4183, %v4185
      %v4187 = vrot.slane %v4173, %v4186
      %v4188 = vcombine.high %v4164, 0.0
      %v4189 = vcombine.high %v4171, 0.0
      %v4190 = vcombine.high %v4180, 0.0
      %v4191 = vcombine.high %v4187, 0.0
      %4193 = vrot.lane.b32.xlu0 %v4120, 16
      %v4194 = vpop.permute.xlu0 %4193
      %4197 = vrot.lane.b32.xlu0 %v4103, 32
      %v4198 = vpop.permute.xlu0 %4197
      %4201 = vrot.lane.b32.xlu0 %v4121, 48
      %v4202 = vpop.permute.xlu0 %4201
      %4205 = vrot.lane.b32.xlu0 %v4112, 64
      %v4206 = vpop.permute.xlu0 %4205
      %4209 = vrot.lane.b32.xlu0 %v4122, 80
      %v4210 = vpop.permute.xlu0 %4209
      %4213 = vrot.lane.b32.xlu0 %v4119, 96
      %v4214 = vpop.permute.xlu0 %4213
      %4217 = vrot.lane.b32.xlu0 %v4123, 112
      %v4218 = vpop.permute.xlu0 %4217
      %4221 = vrot.lane.b32.xlu0 %v4188, 16
      %v4222 = vpop.permute.xlu0 %4221
      %4225 = vrot.lane.b32.xlu0 %v4171, 32
      %v4226 = vpop.permute.xlu0 %4225
      %4229 = vrot.lane.b32.xlu0 %v4189, 48
      %v4230 = vpop.permute.xlu0 %4229
      %4233 = vrot.lane.b32.xlu0 %v4180, 64
      %v4234 = vpop.permute.xlu0 %4233
      %4237 = vrot.lane.b32.xlu0 %v4190, 80
      %v4238 = vpop.permute.xlu0 %4237
      %4241 = vrot.lane.b32.xlu0 %v4187, 96
      %v4242 = vpop.permute.xlu0 %4241
      %4245 = vrot.lane.b32.xlu0 %v4191, 112
      %v4246 = vpop.permute.xlu0 %4245
      %v4248 = vsel %vm935, %v4096, %v4194
      %v4249 = vsel %vm937, %v4248, %v4198
      %v4250 = vsel %vm939, %v4249, %v4202
      %v4251 = vsel %vm941, %v4250, %v4206
      %v4252 = vsel %vm943, %v4251, %v4210
      %v4253 = vsel %vm945, %v4252, %v4214
      %v4254 = vsel %vm947, %v4253, %v4218
      %v4255 = vsel %vm935, %v4164, %v4222
      %v4256 = vsel %vm937, %v4255, %v4226
      %v4257 = vsel %vm939, %v4256, %v4230
      %v4258 = vsel %vm941, %v4257, %v4234
      %v4259 = vsel %vm943, %v4258, %v4238
      %v4260 = vsel %vm945, %v4259, %v4242
      %v4261 = vsel %vm947, %v4260, %v4246
      %4262 = vrot.lane.b32.xlu0 %v4030, 127
      %v4263 = vpop.permute.xlu0 %4262
      %4264 = vrot.lane.b32.xlu0 %v4032, 127
      %v4265 = vpop.permute.xlu0 %4264
      %4266 = vrot.lane.b32.xlu0 %v4035, 127
      %v4267 = vpop.permute.xlu0 %4266
      %4268 = vrot.lane.b32.xlu0 %v4037, 127
      %v4269 = vpop.permute.xlu0 %4268
      %4270 = vrot.lane.b32.xlu0 %v4040, 127
      %v4271 = vpop.permute.xlu0 %4270
      %4272 = vrot.lane.b32.xlu0 %v4042, 127
      %v4273 = vpop.permute.xlu0 %4272
      %4274 = vrot.lane.b32.xlu0 %v4045, 127
      %v4275 = vpop.permute.xlu0 %4274
      %4276 = vrot.lane.b32.xlu0 %v4047, 127
      %v4277 = vpop.permute.xlu0 %4276
      %v4286 = vcombine.low %v4263, %v4271
      %v4287 = vcombine.high %v4263, %v4271
      %v4289 = vunpack.c.l.s4 1983009808
      %v4290 = vunpack.c.0.s8 %v4289
      %v4291 = vlaneseq
      %v4292 = vshrl.u32 %v4291, 7
      %v4293 = vsub.s32 %v4290, %v4292
      %v4294 = vrot.slane %v4286, %v4293
      %v4296 = vunpack.c.l.s4 1983009808
      %v4297 = vunpack.c.0.s8 %v4296
      %v4298 = vlaneseq
      %v4299 = vshrl.u32 %v4298, 7
      %v4300 = vsub.s32 %v4297, %v4299
      %v4301 = vrot.slane %v4287, %v4300
      %v4302 = vcombine.low %v4267, %v4275
      %v4303 = vcombine.high %v4267, %v4275
      %v4305 = vunpack.c.l.s4 1983009808
      %v4306 = vunpack.c.0.s8 %v4305
      %v4307 = vlaneseq
      %v4308 = vshrl.u32 %v4307, 7
      %v4309 = vsub.s32 %v4306, %v4308
      %v4310 = vrot.slane %v4302, %v4309
      %v4312 = vunpack.c.l.s4 1983009808
      %v4313 = vunpack.c.0.s8 %v4312
      %v4314 = vlaneseq
      %v4315 = vshrl.u32 %v4314, 7
      %v4316 = vsub.s32 %v4313, %v4315
      %v4317 = vrot.slane %v4303, %v4316
      %v4318 = vcombine.low %v4294, %v4310
      %v4319 = vcombine.high %v4294, %v4310
      %v4321 = vunpack.c.l.s4 1934713408
      %v4322 = vunpack.c.0.s8 %v4321
      %v4323 = vlaneseq
      %v4324 = vshrl.u32 %v4323, 7
      %v4325 = vsub.s32 %v4322, %v4324
      %v4326 = vrot.slane %v4318, %v4325
      %v4328 = vunpack.c.l.s4 1934713408
      %v4329 = vunpack.c.0.s8 %v4328
      %v4330 = vlaneseq
      %v4331 = vshrl.u32 %v4330, 7
      %v4332 = vsub.s32 %v4329, %v4331
      %v4333 = vrot.slane %v4319, %v4332
      %v4334 = vcombine.low %v4301, %v4317
      %v4335 = vcombine.high %v4301, %v4317
      %v4337 = vunpack.c.l.s4 1934713408
      %v4338 = vunpack.c.0.s8 %v4337
      %v4339 = vlaneseq
      %v4340 = vshrl.u32 %v4339, 7
      %v4341 = vsub.s32 %v4338, %v4340
      %v4342 = vrot.slane %v4334, %v4341
      %v4344 = vunpack.c.l.s4 1934713408
      %v4345 = vunpack.c.0.s8 %v4344
      %v4346 = vlaneseq
      %v4347 = vshrl.u32 %v4346, 7
      %v4348 = vsub.s32 %v4345, %v4347
      %v4349 = vrot.slane %v4335, %v4348
      %v4350 = vcombine.high %v4326, 0.0
      %v4351 = vcombine.high %v4333, 0.0
      %v4352 = vcombine.high %v4342, 0.0
      %v4353 = vcombine.high %v4349, 0.0
      %v4354 = vcombine.low %v4265, %v4273
      %v4355 = vcombine.high %v4265, %v4273
      %v4357 = vunpack.c.l.s4 1983009808
      %v4358 = vunpack.c.0.s8 %v4357
      %v4359 = vlaneseq
      %v4360 = vshrl.u32 %v4359, 7
      %v4361 = vsub.s32 %v4358, %v4360
      %v4362 = vrot.slane %v4354, %v4361
      %v4364 = vunpack.c.l.s4 1983009808
      %v4365 = vunpack.c.0.s8 %v4364
      %v4366 = vlaneseq
      %v4367 = vshrl.u32 %v4366, 7
      %v4368 = vsub.s32 %v4365, %v4367
      %v4369 = vrot.slane %v4355, %v4368
      %v4370 = vcombine.low %v4269, %v4277
      %v4371 = vcombine.high %v4269, %v4277
      %v4373 = vunpack.c.l.s4 1983009808
      %v4374 = vunpack.c.0.s8 %v4373
      %v4375 = vlaneseq
      %v4376 = vshrl.u32 %v4375, 7
      %v4377 = vsub.s32 %v4374, %v4376
      %v4378 = vrot.slane %v4370, %v4377
      %v4380 = vunpack.c.l.s4 1983009808
      %v4381 = vunpack.c.0.s8 %v4380
      %v4382 = vlaneseq
      %v4383 = vshrl.u32 %v4382, 7
      %v4384 = vsub.s32 %v4381, %v4383
      %v4385 = vrot.slane %v4371, %v4384
      %v4386 = vcombine.low %v4362, %v4378
      %v4387 = vcombine.high %v4362, %v4378
      %v4389 = vunpack.c.l.s4 1934713408
      %v4390 = vunpack.c.0.s8 %v4389
      %v4391 = vlaneseq
      %v4392 = vshrl.u32 %v4391, 7
      %v4393 = vsub.s32 %v4390, %v4392
      %v4394 = vrot.slane %v4386, %v4393
      %v4396 = vunpack.c.l.s4 1934713408
      %v4397 = vunpack.c.0.s8 %v4396
      %v4398 = vlaneseq
      %v4399 = vshrl.u32 %v4398, 7
      %v4400 = vsub.s32 %v4397, %v4399
      %v4401 = vrot.slane %v4387, %v4400
      %v4402 = vcombine.low %v4369, %v4385
      %v4403 = vcombine.high %v4369, %v4385
      %v4405 = vunpack.c.l.s4 1934713408
      %v4406 = vunpack.c.0.s8 %v4405
      %v4407 = vlaneseq
      %v4408 = vshrl.u32 %v4407, 7
      %v4409 = vsub.s32 %v4406, %v4408
      %v4410 = vrot.slane %v4402, %v4409
      %v4412 = vunpack.c.l.s4 1934713408
      %v4413 = vunpack.c.0.s8 %v4412
      %v4414 = vlaneseq
      %v4415 = vshrl.u32 %v4414, 7
      %v4416 = vsub.s32 %v4413, %v4415
      %v4417 = vrot.slane %v4403, %v4416
      %v4418 = vcombine.high %v4394, 0.0
      %v4419 = vcombine.high %v4401, 0.0
      %v4420 = vcombine.high %v4410, 0.0
      %v4421 = vcombine.high %v4417, 0.0
      %4423 = vrot.lane.b32.xlu0 %v4350, 16
      %v4424 = vpop.permute.xlu0 %4423
      %4427 = vrot.lane.b32.xlu0 %v4333, 32
      %v4428 = vpop.permute.xlu0 %4427
      %4431 = vrot.lane.b32.xlu0 %v4351, 48
      %v4432 = vpop.permute.xlu0 %4431
      %4435 = vrot.lane.b32.xlu0 %v4342, 64
      %v4436 = vpop.permute.xlu0 %4435
      %4439 = vrot.lane.b32.xlu0 %v4352, 80
      %v4440 = vpop.permute.xlu0 %4439
      %4443 = vrot.lane.b32.xlu0 %v4349, 96
      %v4444 = vpop.permute.xlu0 %4443
      %4447 = vrot.lane.b32.xlu0 %v4353, 112
      %v4448 = vpop.permute.xlu0 %4447
      %4451 = vrot.lane.b32.xlu0 %v4418, 16
      %v4452 = vpop.permute.xlu0 %4451
      %4455 = vrot.lane.b32.xlu0 %v4401, 32
      %v4456 = vpop.permute.xlu0 %4455
      %4459 = vrot.lane.b32.xlu0 %v4419, 48
      %v4460 = vpop.permute.xlu0 %4459
      %4463 = vrot.lane.b32.xlu0 %v4410, 64
      %v4464 = vpop.permute.xlu0 %4463
      %4467 = vrot.lane.b32.xlu0 %v4420, 80
      %v4468 = vpop.permute.xlu0 %4467
      %4471 = vrot.lane.b32.xlu0 %v4417, 96
      %v4472 = vpop.permute.xlu0 %4471
      %4475 = vrot.lane.b32.xlu0 %v4421, 112
      %v4476 = vpop.permute.xlu0 %4475
      %v4478 = vsel %vm935, %v4326, %v4424
      %v4479 = vsel %vm937, %v4478, %v4428
      %v4480 = vsel %vm939, %v4479, %v4432
      %v4481 = vsel %vm941, %v4480, %v4436
      %v4482 = vsel %vm943, %v4481, %v4440
      %v4483 = vsel %vm945, %v4482, %v4444
      %v4484 = vsel %vm947, %v4483, %v4448
      %v4485 = vsel %vm935, %v4394, %v4452
      %v4486 = vsel %vm937, %v4485, %v4456
      %v4487 = vsel %vm939, %v4486, %v4460
      %v4488 = vsel %vm941, %v4487, %v4464
      %v4489 = vsel %vm943, %v4488, %v4468
      %v4490 = vsel %vm945, %v4489, %v4472
      %v4491 = vsel %vm947, %v4490, %v4476
      %4492 = vrot.lane.b32.xlu0 %v4030, 126
      %v4493 = vpop.permute.xlu0 %4492
      %4494 = vrot.lane.b32.xlu0 %v4032, 126
      %v4495 = vpop.permute.xlu0 %4494
      %4496 = vrot.lane.b32.xlu0 %v4035, 126
      %v4497 = vpop.permute.xlu0 %4496
      %4498 = vrot.lane.b32.xlu0 %v4037, 126
      %v4499 = vpop.permute.xlu0 %4498
      %4500 = vrot.lane.b32.xlu0 %v4040, 126
      %v4501 = vpop.permute.xlu0 %4500
      %4502 = vrot.lane.b32.xlu0 %v4042, 126
      %v4503 = vpop.permute.xlu0 %4502
      %4504 = vrot.lane.b32.xlu0 %v4045, 126
      %v4505 = vpop.permute.xlu0 %4504
      %4506 = vrot.lane.b32.xlu0 %v4047, 126
      %v4507 = vpop.permute.xlu0 %4506
      %v4516 = vcombine.low %v4493, %v4501
      %v4517 = vcombine.high %v4493, %v4501
      %v4519 = vunpack.c.l.s4 1983009808
      %v4520 = vunpack.c.0.s8 %v4519
      %v4521 = vlaneseq
      %v4522 = vshrl.u32 %v4521, 7
      %v4523 = vsub.s32 %v4520, %v4522
      %v4524 = vrot.slane %v4516, %v4523
      %v4526 = vunpack.c.l.s4 1983009808
      %v4527 = vunpack.c.0.s8 %v4526
      %v4528 = vlaneseq
      %v4529 = vshrl.u32 %v4528, 7
      %v4530 = vsub.s32 %v4527, %v4529
      %v4531 = vrot.slane %v4517, %v4530
      %v4532 = vcombine.low %v4497, %v4505
      %v4533 = vcombine.high %v4497, %v4505
      %v4535 = vunpack.c.l.s4 1983009808
      %v4536 = vunpack.c.0.s8 %v4535
      %v4537 = vlaneseq
      %v4538 = vshrl.u32 %v4537, 7
      %v4539 = vsub.s32 %v4536, %v4538
      %v4540 = vrot.slane %v4532, %v4539
      %v4542 = vunpack.c.l.s4 1983009808
      %v4543 = vunpack.c.0.s8 %v4542
      %v4544 = vlaneseq
      %v4545 = vshrl.u32 %v4544, 7
      %v4546 = vsub.s32 %v4543, %v4545
      %v4547 = vrot.slane %v4533, %v4546
      %v4548 = vcombine.low %v4524, %v4540
      %v4549 = vcombine.high %v4524, %v4540
      %v4551 = vunpack.c.l.s4 1934713408
      %v4552 = vunpack.c.0.s8 %v4551
      %v4553 = vlaneseq
      %v4554 = vshrl.u32 %v4553, 7
      %v4555 = vsub.s32 %v4552, %v4554
      %v4556 = vrot.slane %v4548, %v4555
      %v4558 = vunpack.c.l.s4 1934713408
      %v4559 = vunpack.c.0.s8 %v4558
      %v4560 = vlaneseq
      %v4561 = vshrl.u32 %v4560, 7
      %v4562 = vsub.s32 %v4559, %v4561
      %v4563 = vrot.slane %v4549, %v4562
      %v4564 = vcombine.low %v4531, %v4547
      %v4565 = vcombine.high %v4531, %v4547
      %v4567 = vunpack.c.l.s4 1934713408
      %v4568 = vunpack.c.0.s8 %v4567
      %v4569 = vlaneseq
      %v4570 = vshrl.u32 %v4569, 7
      %v4571 = vsub.s32 %v4568, %v4570
      %v4572 = vrot.slane %v4564, %v4571
      %v4574 = vunpack.c.l.s4 1934713408
      %v4575 = vunpack.c.0.s8 %v4574
      %v4576 = vlaneseq
      %v4577 = vshrl.u32 %v4576, 7
      %v4578 = vsub.s32 %v4575, %v4577
      %v4579 = vrot.slane %v4565, %v4578
      %v4580 = vcombine.high %v4556, 0.0
      %v4581 = vcombine.high %v4563, 0.0
      %v4582 = vcombine.high %v4572, 0.0
      %v4583 = vcombine.high %v4579, 0.0
      %v4584 = vcombine.low %v4495, %v4503
      %v4585 = vcombine.high %v4495, %v4503
      %v4587 = vunpack.c.l.s4 1983009808
      %v4588 = vunpack.c.0.s8 %v4587
      %v4589 = vlaneseq
      %v4590 = vshrl.u32 %v4589, 7
      %v4591 = vsub.s32 %v4588, %v4590
      %v4592 = vrot.slane %v4584, %v4591
      %v4594 = vunpack.c.l.s4 1983009808
      %v4595 = vunpack.c.0.s8 %v4594
      %v4596 = vlaneseq
      %v4597 = vshrl.u32 %v4596, 7
      %v4598 = vsub.s32 %v4595, %v4597
      %v4599 = vrot.slane %v4585, %v4598
      %v4600 = vcombine.low %v4499, %v4507
      %v4601 = vcombine.high %v4499, %v4507
      %v4603 = vunpack.c.l.s4 1983009808
      %v4604 = vunpack.c.0.s8 %v4603
      %v4605 = vlaneseq
      %v4606 = vshrl.u32 %v4605, 7
      %v4607 = vsub.s32 %v4604, %v4606
      %v4608 = vrot.slane %v4600, %v4607
      %v4610 = vunpack.c.l.s4 1983009808
      %v4611 = vunpack.c.0.s8 %v4610
      %v4612 = vlaneseq
      %v4613 = vshrl.u32 %v4612, 7
      %v4614 = vsub.s32 %v4611, %v4613
      %v4615 = vrot.slane %v4601, %v4614
      %v4616 = vcombine.low %v4592, %v4608
      %v4617 = vcombine.high %v4592, %v4608
      %v4619 = vunpack.c.l.s4 1934713408
      %v4620 = vunpack.c.0.s8 %v4619
      %v4621 = vlaneseq
      %v4622 = vshrl.u32 %v4621, 7
      %v4623 = vsub.s32 %v4620, %v4622
      %v4624 = vrot.slane %v4616, %v4623
      %v4626 = vunpack.c.l.s4 1934713408
      %v4627 = vunpack.c.0.s8 %v4626
      %v4628 = vlaneseq
      %v4629 = vshrl.u32 %v4628, 7
      %v4630 = vsub.s32 %v4627, %v4629
      %v4631 = vrot.slane %v4617, %v4630
      %v4632 = vcombine.low %v4599, %v4615
      %v4633 = vcombine.high %v4599, %v4615
      %v4635 = vunpack.c.l.s4 1934713408
      %v4636 = vunpack.c.0.s8 %v4635
      %v4637 = vlaneseq
      %v4638 = vshrl.u32 %v4637, 7
      %v4639 = vsub.s32 %v4636, %v4638
      %v4640 = vrot.slane %v4632, %v4639
      %v4642 = vunpack.c.l.s4 1934713408
      %v4643 = vunpack.c.0.s8 %v4642
      %v4644 = vlaneseq
      %v4645 = vshrl.u32 %v4644, 7
      %v4646 = vsub.s32 %v4643, %v4645
      %v4647 = vrot.slane %v4633, %v4646
      %v4648 = vcombine.high %v4624, 0.0
      %v4649 = vcombine.high %v4631, 0.0
      %v4650 = vcombine.high %v4640, 0.0
      %v4651 = vcombine.high %v4647, 0.0
      %4653 = vrot.lane.b32.xlu0 %v4580, 16
      %v4654 = vpop.permute.xlu0 %4653
      %4657 = vrot.lane.b32.xlu0 %v4563, 32
      %v4658 = vpop.permute.xlu0 %4657
      %4661 = vrot.lane.b32.xlu0 %v4581, 48
      %v4662 = vpop.permute.xlu0 %4661
      %4665 = vrot.lane.b32.xlu0 %v4572, 64
      %v4666 = vpop.permute.xlu0 %4665
      %4669 = vrot.lane.b32.xlu0 %v4582, 80
      %v4670 = vpop.permute.xlu0 %4669
      %4673 = vrot.lane.b32.xlu0 %v4579, 96
      %v4674 = vpop.permute.xlu0 %4673
      %4677 = vrot.lane.b32.xlu0 %v4583, 112
      %v4678 = vpop.permute.xlu0 %4677
      %4681 = vrot.lane.b32.xlu0 %v4648, 16
      %v4682 = vpop.permute.xlu0 %4681
      %4685 = vrot.lane.b32.xlu0 %v4631, 32
      %v4686 = vpop.permute.xlu0 %4685
      %4689 = vrot.lane.b32.xlu0 %v4649, 48
      %v4690 = vpop.permute.xlu0 %4689
      %4693 = vrot.lane.b32.xlu0 %v4640, 64
      %v4694 = vpop.permute.xlu0 %4693
      %4697 = vrot.lane.b32.xlu0 %v4650, 80
      %v4698 = vpop.permute.xlu0 %4697
      %4701 = vrot.lane.b32.xlu0 %v4647, 96
      %v4702 = vpop.permute.xlu0 %4701
      %4705 = vrot.lane.b32.xlu0 %v4651, 112
      %v4706 = vpop.permute.xlu0 %4705
      %v4708 = vsel %vm935, %v4556, %v4654
      %v4709 = vsel %vm937, %v4708, %v4658
      %v4710 = vsel %vm939, %v4709, %v4662
      %v4711 = vsel %vm941, %v4710, %v4666
      %v4712 = vsel %vm943, %v4711, %v4670
      %v4713 = vsel %vm945, %v4712, %v4674
      %v4714 = vsel %vm947, %v4713, %v4678
      %v4715 = vsel %vm935, %v4624, %v4682
      %v4716 = vsel %vm937, %v4715, %v4686
      %v4717 = vsel %vm939, %v4716, %v4690
      %v4718 = vsel %vm941, %v4717, %v4694
      %v4719 = vsel %vm943, %v4718, %v4698
      %v4720 = vsel %vm945, %v4719, %v4702
      %v4721 = vsel %vm947, %v4720, %v4706
      %v4722 = vrot.slane %v3338, 2
      %v4723 = vrot.slane %v3339, 2
      %v4724 = vsel %vm2123, %v4722, %v4723
      %v4725 = vrot.slane %v3340, 2
      %v4726 = vsel %vm2123, %v4723, %v4725
      %v4727 = vrot.slane %v3341, 2
      %v4728 = vrot.slane %v3342, 2
      %v4729 = vsel %vm2123, %v4727, %v4728
      %v4730 = vrot.slane %v3343, 2
      %v4731 = vsel %vm2123, %v4728, %v4730
      %v4732 = vrot.slane %v3344, 2
      %v4733 = vrot.slane %v3345, 2
      %v4734 = vsel %vm2123, %v4732, %v4733
      %v4735 = vrot.slane %v3346, 2
      %v4736 = vsel %vm2123, %v4733, %v4735
      %v4737 = vrot.slane %v3347, 2
      %v4738 = vrot.slane %v3348, 2
      %v4739 = vsel %vm2123, %v4737, %v4738
      %v4740 = vrot.slane %v3349, 2
      %v4741 = vsel %vm2123, %v4738, %v4740
      %v4750 = vcombine.low %v4724, %v4734
      %v4751 = vcombine.high %v4724, %v4734
      %v4753 = vunpack.c.l.s4 1983009808
      %v4754 = vunpack.c.0.s8 %v4753
      %v4755 = vlaneseq
      %v4756 = vshrl.u32 %v4755, 7
      %v4757 = vsub.s32 %v4754, %v4756
      %v4758 = vrot.slane %v4750, %v4757
      %v4760 = vunpack.c.l.s4 1983009808
      %v4761 = vunpack.c.0.s8 %v4760
      %v4762 = vlaneseq
      %v4763 = vshrl.u32 %v4762, 7
      %v4764 = vsub.s32 %v4761, %v4763
      %v4765 = vrot.slane %v4751, %v4764
      %v4766 = vcombine.low %v4729, %v4739
      %v4767 = vcombine.high %v4729, %v4739
      %v4769 = vunpack.c.l.s4 1983009808
      %v4770 = vunpack.c.0.s8 %v4769
      %v4771 = vlaneseq
      %v4772 = vshrl.u32 %v4771, 7
      %v4773 = vsub.s32 %v4770, %v4772
      %v4774 = vrot.slane %v4766, %v4773
      %v4776 = vunpack.c.l.s4 1983009808
      %v4777 = vunpack.c.0.s8 %v4776
      %v4778 = vlaneseq
      %v4779 = vshrl.u32 %v4778, 7
      %v4780 = vsub.s32 %v4777, %v4779
      %v4781 = vrot.slane %v4767, %v4780
      %v4782 = vcombine.low %v4758, %v4774
      %v4783 = vcombine.high %v4758, %v4774
      %v4785 = vunpack.c.l.s4 1934713408
      %v4786 = vunpack.c.0.s8 %v4785
      %v4787 = vlaneseq
      %v4788 = vshrl.u32 %v4787, 7
      %v4789 = vsub.s32 %v4786, %v4788
      %v4790 = vrot.slane %v4782, %v4789
      %v4792 = vunpack.c.l.s4 1934713408
      %v4793 = vunpack.c.0.s8 %v4792
      %v4794 = vlaneseq
      %v4795 = vshrl.u32 %v4794, 7
      %v4796 = vsub.s32 %v4793, %v4795
      %v4797 = vrot.slane %v4783, %v4796
      %v4798 = vcombine.low %v4765, %v4781
      %v4799 = vcombine.high %v4765, %v4781
      %v4801 = vunpack.c.l.s4 1934713408
      %v4802 = vunpack.c.0.s8 %v4801
      %v4803 = vlaneseq
      %v4804 = vshrl.u32 %v4803, 7
      %v4805 = vsub.s32 %v4802, %v4804
      %v4806 = vrot.slane %v4798, %v4805
      %v4808 = vunpack.c.l.s4 1934713408
      %v4809 = vunpack.c.0.s8 %v4808
      %v4810 = vlaneseq
      %v4811 = vshrl.u32 %v4810, 7
      %v4812 = vsub.s32 %v4809, %v4811
      %v4813 = vrot.slane %v4799, %v4812
      %v4814 = vcombine.high %v4790, 0.0
      %v4815 = vcombine.high %v4797, 0.0
      %v4816 = vcombine.high %v4806, 0.0
      %v4817 = vcombine.high %v4813, 0.0
      %v4818 = vcombine.low %v4726, %v4736
      %v4819 = vcombine.high %v4726, %v4736
      %v4821 = vunpack.c.l.s4 1983009808
      %v4822 = vunpack.c.0.s8 %v4821
      %v4823 = vlaneseq
      %v4824 = vshrl.u32 %v4823, 7
      %v4825 = vsub.s32 %v4822, %v4824
      %v4826 = vrot.slane %v4818, %v4825
      %v4828 = vunpack.c.l.s4 1983009808
      %v4829 = vunpack.c.0.s8 %v4828
      %v4830 = vlaneseq
      %v4831 = vshrl.u32 %v4830, 7
      %v4832 = vsub.s32 %v4829, %v4831
      %v4833 = vrot.slane %v4819, %v4832
      %v4834 = vcombine.low %v4731, %v4741
      %v4835 = vcombine.high %v4731, %v4741
      %v4837 = vunpack.c.l.s4 1983009808
      %v4838 = vunpack.c.0.s8 %v4837
      %v4839 = vlaneseq
      %v4840 = vshrl.u32 %v4839, 7
      %v4841 = vsub.s32 %v4838, %v4840
      %v4842 = vrot.slane %v4834, %v4841
      %v4844 = vunpack.c.l.s4 1983009808
      %v4845 = vunpack.c.0.s8 %v4844
      %v4846 = vlaneseq
      %v4847 = vshrl.u32 %v4846, 7
      %v4848 = vsub.s32 %v4845, %v4847
      %v4849 = vrot.slane %v4835, %v4848
      %v4850 = vcombine.low %v4826, %v4842
      %v4851 = vcombine.high %v4826, %v4842
      %v4853 = vunpack.c.l.s4 1934713408
      %v4854 = vunpack.c.0.s8 %v4853
      %v4855 = vlaneseq
      %v4856 = vshrl.u32 %v4855, 7
      %v4857 = vsub.s32 %v4854, %v4856
      %v4858 = vrot.slane %v4850, %v4857
      %v4860 = vunpack.c.l.s4 1934713408
      %v4861 = vunpack.c.0.s8 %v4860
      %v4862 = vlaneseq
      %v4863 = vshrl.u32 %v4862, 7
      %v4864 = vsub.s32 %v4861, %v4863
      %v4865 = vrot.slane %v4851, %v4864
      %v4866 = vcombine.low %v4833, %v4849
      %v4867 = vcombine.high %v4833, %v4849
      %v4869 = vunpack.c.l.s4 1934713408
      %v4870 = vunpack.c.0.s8 %v4869
      %v4871 = vlaneseq
      %v4872 = vshrl.u32 %v4871, 7
      %v4873 = vsub.s32 %v4870, %v4872
      %v4874 = vrot.slane %v4866, %v4873
      %v4876 = vunpack.c.l.s4 1934713408
      %v4877 = vunpack.c.0.s8 %v4876
      %v4878 = vlaneseq
      %v4879 = vshrl.u32 %v4878, 7
      %v4880 = vsub.s32 %v4877, %v4879
      %v4881 = vrot.slane %v4867, %v4880
      %v4882 = vcombine.high %v4858, 0.0
      %v4883 = vcombine.high %v4865, 0.0
      %v4884 = vcombine.high %v4874, 0.0
      %v4885 = vcombine.high %v4881, 0.0
      %4887 = vrot.lane.b32.xlu0 %v4814, 16
      %v4888 = vpop.permute.xlu0 %4887
      %4891 = vrot.lane.b32.xlu0 %v4797, 32
      %v4892 = vpop.permute.xlu0 %4891
      %4895 = vrot.lane.b32.xlu0 %v4815, 48
      %v4896 = vpop.permute.xlu0 %4895
      %4899 = vrot.lane.b32.xlu0 %v4806, 64
      %v4900 = vpop.permute.xlu0 %4899
      %4903 = vrot.lane.b32.xlu0 %v4816, 80
      %v4904 = vpop.permute.xlu0 %4903
      %4907 = vrot.lane.b32.xlu0 %v4813, 96
      %v4908 = vpop.permute.xlu0 %4907
      %4911 = vrot.lane.b32.xlu0 %v4817, 112
      %v4912 = vpop.permute.xlu0 %4911
      %4915 = vrot.lane.b32.xlu0 %v4882, 16
      %v4916 = vpop.permute.xlu0 %4915
      %4919 = vrot.lane.b32.xlu0 %v4865, 32
      %v4920 = vpop.permute.xlu0 %4919
      %4923 = vrot.lane.b32.xlu0 %v4883, 48
      %v4924 = vpop.permute.xlu0 %4923
      %4927 = vrot.lane.b32.xlu0 %v4874, 64
      %v4928 = vpop.permute.xlu0 %4927
      %4931 = vrot.lane.b32.xlu0 %v4884, 80
      %v4932 = vpop.permute.xlu0 %4931
      %4935 = vrot.lane.b32.xlu0 %v4881, 96
      %v4936 = vpop.permute.xlu0 %4935
      %4939 = vrot.lane.b32.xlu0 %v4885, 112
      %v4940 = vpop.permute.xlu0 %4939
      %v4942 = vsel %vm935, %v4790, %v4888
      %v4943 = vsel %vm937, %v4942, %v4892
      %v4944 = vsel %vm939, %v4943, %v4896
      %v4945 = vsel %vm941, %v4944, %v4900
      %v4946 = vsel %vm943, %v4945, %v4904
      %v4947 = vsel %vm945, %v4946, %v4908
      %v4948 = vsel %vm947, %v4947, %v4912
      %v4949 = vsel %vm935, %v4858, %v4916
      %v4950 = vsel %vm937, %v4949, %v4920
      %v4951 = vsel %vm939, %v4950, %v4924
      %v4952 = vsel %vm941, %v4951, %v4928
      %v4953 = vsel %vm943, %v4952, %v4932
      %v4954 = vsel %vm945, %v4953, %v4936
      %v4955 = vsel %vm947, %v4954, %v4940
      %4956 = vrot.lane.b32.xlu0 %v4724, 127
      %v4957 = vpop.permute.xlu0 %4956
      %4958 = vrot.lane.b32.xlu0 %v4726, 127
      %v4959 = vpop.permute.xlu0 %4958
      %4960 = vrot.lane.b32.xlu0 %v4729, 127
      %v4961 = vpop.permute.xlu0 %4960
      %4962 = vrot.lane.b32.xlu0 %v4731, 127
      %v4963 = vpop.permute.xlu0 %4962
      %4964 = vrot.lane.b32.xlu0 %v4734, 127
      %v4965 = vpop.permute.xlu0 %4964
      %4966 = vrot.lane.b32.xlu0 %v4736, 127
      %v4967 = vpop.permute.xlu0 %4966
      %4968 = vrot.lane.b32.xlu0 %v4739, 127
      %v4969 = vpop.permute.xlu0 %4968
      %4970 = vrot.lane.b32.xlu0 %v4741, 127
      %v4971 = vpop.permute.xlu0 %4970
      %v4980 = vcombine.low %v4957, %v4965
      %v4981 = vcombine.high %v4957, %v4965
      %v4983 = vunpack.c.l.s4 1983009808
      %v4984 = vunpack.c.0.s8 %v4983
      %v4985 = vlaneseq
      %v4986 = vshrl.u32 %v4985, 7
      %v4987 = vsub.s32 %v4984, %v4986
      %v4988 = vrot.slane %v4980, %v4987
      %v4990 = vunpack.c.l.s4 1983009808
      %v4991 = vunpack.c.0.s8 %v4990
      %v4992 = vlaneseq
      %v4993 = vshrl.u32 %v4992, 7
      %v4994 = vsub.s32 %v4991, %v4993
      %v4995 = vrot.slane %v4981, %v4994
      %v4996 = vcombine.low %v4961, %v4969
      %v4997 = vcombine.high %v4961, %v4969
      %v4999 = vunpack.c.l.s4 1983009808
      %v5000 = vunpack.c.0.s8 %v4999
      %v5001 = vlaneseq
      %v5002 = vshrl.u32 %v5001, 7
      %v5003 = vsub.s32 %v5000, %v5002
      %v5004 = vrot.slane %v4996, %v5003
      %v5006 = vunpack.c.l.s4 1983009808
      %v5007 = vunpack.c.0.s8 %v5006
      %v5008 = vlaneseq
      %v5009 = vshrl.u32 %v5008, 7
      %v5010 = vsub.s32 %v5007, %v5009
      %v5011 = vrot.slane %v4997, %v5010
      %v5012 = vcombine.low %v4988, %v5004
      %v5013 = vcombine.high %v4988, %v5004
      %v5015 = vunpack.c.l.s4 1934713408
      %v5016 = vunpack.c.0.s8 %v5015
      %v5017 = vlaneseq
      %v5018 = vshrl.u32 %v5017, 7
      %v5019 = vsub.s32 %v5016, %v5018
      %v5020 = vrot.slane %v5012, %v5019
      %v5022 = vunpack.c.l.s4 1934713408
      %v5023 = vunpack.c.0.s8 %v5022
      %v5024 = vlaneseq
      %v5025 = vshrl.u32 %v5024, 7
      %v5026 = vsub.s32 %v5023, %v5025
      %v5027 = vrot.slane %v5013, %v5026
      %v5028 = vcombine.low %v4995, %v5011
      %v5029 = vcombine.high %v4995, %v5011
      %v5031 = vunpack.c.l.s4 1934713408
      %v5032 = vunpack.c.0.s8 %v5031
      %v5033 = vlaneseq
      %v5034 = vshrl.u32 %v5033, 7
      %v5035 = vsub.s32 %v5032, %v5034
      %v5036 = vrot.slane %v5028, %v5035
      %v5038 = vunpack.c.l.s4 1934713408
      %v5039 = vunpack.c.0.s8 %v5038
      %v5040 = vlaneseq
      %v5041 = vshrl.u32 %v5040, 7
      %v5042 = vsub.s32 %v5039, %v5041
      %v5043 = vrot.slane %v5029, %v5042
      %v5044 = vcombine.high %v5020, 0.0
      %v5045 = vcombine.high %v5027, 0.0
      %v5046 = vcombine.high %v5036, 0.0
      %v5047 = vcombine.high %v5043, 0.0
      %v5048 = vcombine.low %v4959, %v4967
      %v5049 = vcombine.high %v4959, %v4967
      %v5051 = vunpack.c.l.s4 1983009808
      %v5052 = vunpack.c.0.s8 %v5051
      %v5053 = vlaneseq
      %v5054 = vshrl.u32 %v5053, 7
      %v5055 = vsub.s32 %v5052, %v5054
      %v5056 = vrot.slane %v5048, %v5055
      %v5058 = vunpack.c.l.s4 1983009808
      %v5059 = vunpack.c.0.s8 %v5058
      %v5060 = vlaneseq
      %v5061 = vshrl.u32 %v5060, 7
      %v5062 = vsub.s32 %v5059, %v5061
      %v5063 = vrot.slane %v5049, %v5062
      %v5064 = vcombine.low %v4963, %v4971
      %v5065 = vcombine.high %v4963, %v4971
      %v5067 = vunpack.c.l.s4 1983009808
      %v5068 = vunpack.c.0.s8 %v5067
      %v5069 = vlaneseq
      %v5070 = vshrl.u32 %v5069, 7
      %v5071 = vsub.s32 %v5068, %v5070
      %v5072 = vrot.slane %v5064, %v5071
      %v5074 = vunpack.c.l.s4 1983009808
      %v5075 = vunpack.c.0.s8 %v5074
      %v5076 = vlaneseq
      %v5077 = vshrl.u32 %v5076, 7
      %v5078 = vsub.s32 %v5075, %v5077
      %v5079 = vrot.slane %v5065, %v5078
      %v5080 = vcombine.low %v5056, %v5072
      %v5081 = vcombine.high %v5056, %v5072
      %v5083 = vunpack.c.l.s4 1934713408
      %v5084 = vunpack.c.0.s8 %v5083
      %v5085 = vlaneseq
      %v5086 = vshrl.u32 %v5085, 7
      %v5087 = vsub.s32 %v5084, %v5086
      %v5088 = vrot.slane %v5080, %v5087
      %v5090 = vunpack.c.l.s4 1934713408
      %v5091 = vunpack.c.0.s8 %v5090
      %v5092 = vlaneseq
      %v5093 = vshrl.u32 %v5092, 7
      %v5094 = vsub.s32 %v5091, %v5093
      %v5095 = vrot.slane %v5081, %v5094
      %v5096 = vcombine.low %v5063, %v5079
      %v5097 = vcombine.high %v5063, %v5079
      %v5099 = vunpack.c.l.s4 1934713408
      %v5100 = vunpack.c.0.s8 %v5099
      %v5101 = vlaneseq
      %v5102 = vshrl.u32 %v5101, 7
      %v5103 = vsub.s32 %v5100, %v5102
      %v5104 = vrot.slane %v5096, %v5103
      %v5106 = vunpack.c.l.s4 1934713408
      %v5107 = vunpack.c.0.s8 %v5106
      %v5108 = vlaneseq
      %v5109 = vshrl.u32 %v5108, 7
      %v5110 = vsub.s32 %v5107, %v5109
      %v5111 = vrot.slane %v5097, %v5110
      %v5112 = vcombine.high %v5088, 0.0
      %v5113 = vcombine.high %v5095, 0.0
      %v5114 = vcombine.high %v5104, 0.0
      %v5115 = vcombine.high %v5111, 0.0
      %5117 = vrot.lane.b32.xlu0 %v5044, 16
      %v5118 = vpop.permute.xlu0 %5117
      %5121 = vrot.lane.b32.xlu0 %v5027, 32
      %v5122 = vpop.permute.xlu0 %5121
      %5125 = vrot.lane.b32.xlu0 %v5045, 48
      %v5126 = vpop.permute.xlu0 %5125
      %5129 = vrot.lane.b32.xlu0 %v5036, 64
      %v5130 = vpop.permute.xlu0 %5129
      %5133 = vrot.lane.b32.xlu0 %v5046, 80
      %v5134 = vpop.permute.xlu0 %5133
      %5137 = vrot.lane.b32.xlu0 %v5043, 96
      %v5138 = vpop.permute.xlu0 %5137
      %5141 = vrot.lane.b32.xlu0 %v5047, 112
      %v5142 = vpop.permute.xlu0 %5141
      %5145 = vrot.lane.b32.xlu0 %v5112, 16
      %v5146 = vpop.permute.xlu0 %5145
      %5149 = vrot.lane.b32.xlu0 %v5095, 32
      %v5150 = vpop.permute.xlu0 %5149
      %5153 = vrot.lane.b32.xlu0 %v5113, 48
      %v5154 = vpop.permute.xlu0 %5153
      %5157 = vrot.lane.b32.xlu0 %v5104, 64
      %v5158 = vpop.permute.xlu0 %5157
      %5161 = vrot.lane.b32.xlu0 %v5114, 80
      %v5162 = vpop.permute.xlu0 %5161
      %5165 = vrot.lane.b32.xlu0 %v5111, 96
      %v5166 = vpop.permute.xlu0 %5165
      %5169 = vrot.lane.b32.xlu0 %v5115, 112
      %v5170 = vpop.permute.xlu0 %5169
      %v5172 = vsel %vm935, %v5020, %v5118
      %v5173 = vsel %vm937, %v5172, %v5122
      %v5174 = vsel %vm939, %v5173, %v5126
      %v5175 = vsel %vm941, %v5174, %v5130
      %v5176 = vsel %vm943, %v5175, %v5134
      %v5177 = vsel %vm945, %v5176, %v5138
      %v5178 = vsel %vm947, %v5177, %v5142
      %v5179 = vsel %vm935, %v5088, %v5146
      %v5180 = vsel %vm937, %v5179, %v5150
      %v5181 = vsel %vm939, %v5180, %v5154
      %v5182 = vsel %vm941, %v5181, %v5158
      %v5183 = vsel %vm943, %v5182, %v5162
      %v5184 = vsel %vm945, %v5183, %v5166
      %v5185 = vsel %vm947, %v5184, %v5170
      %5186 = vrot.lane.b32.xlu0 %v4724, 126
      %v5187 = vpop.permute.xlu0 %5186
      %5188 = vrot.lane.b32.xlu0 %v4726, 126
      %v5189 = vpop.permute.xlu0 %5188
      %5190 = vrot.lane.b32.xlu0 %v4729, 126
      %v5191 = vpop.permute.xlu0 %5190
      %5192 = vrot.lane.b32.xlu0 %v4731, 126
      %v5193 = vpop.permute.xlu0 %5192
      %5194 = vrot.lane.b32.xlu0 %v4734, 126
      %v5195 = vpop.permute.xlu0 %5194
      %5196 = vrot.lane.b32.xlu0 %v4736, 126
      %v5197 = vpop.permute.xlu0 %5196
      %5198 = vrot.lane.b32.xlu0 %v4739, 126
      %v5199 = vpop.permute.xlu0 %5198
      %5200 = vrot.lane.b32.xlu0 %v4741, 126
      %v5201 = vpop.permute.xlu0 %5200
      %v5210 = vcombine.low %v5187, %v5195
      %v5211 = vcombine.high %v5187, %v5195
      %v5213 = vunpack.c.l.s4 1983009808
      %v5214 = vunpack.c.0.s8 %v5213
      %v5215 = vlaneseq
      %v5216 = vshrl.u32 %v5215, 7
      %v5217 = vsub.s32 %v5214, %v5216
      %v5218 = vrot.slane %v5210, %v5217
      %v5220 = vunpack.c.l.s4 1983009808
      %v5221 = vunpack.c.0.s8 %v5220
      %v5222 = vlaneseq
      %v5223 = vshrl.u32 %v5222, 7
      %v5224 = vsub.s32 %v5221, %v5223
      %v5225 = vrot.slane %v5211, %v5224
      %v5226 = vcombine.low %v5191, %v5199
      %v5227 = vcombine.high %v5191, %v5199
      %v5229 = vunpack.c.l.s4 1983009808
      %v5230 = vunpack.c.0.s8 %v5229
      %v5231 = vlaneseq
      %v5232 = vshrl.u32 %v5231, 7
      %v5233 = vsub.s32 %v5230, %v5232
      %v5234 = vrot.slane %v5226, %v5233
      %v5236 = vunpack.c.l.s4 1983009808
      %v5237 = vunpack.c.0.s8 %v5236
      %v5238 = vlaneseq
      %v5239 = vshrl.u32 %v5238, 7
      %v5240 = vsub.s32 %v5237, %v5239
      %v5241 = vrot.slane %v5227, %v5240
      %v5242 = vcombine.low %v5218, %v5234
      %v5243 = vcombine.high %v5218, %v5234
      %v5245 = vunpack.c.l.s4 1934713408
      %v5246 = vunpack.c.0.s8 %v5245
      %v5247 = vlaneseq
      %v5248 = vshrl.u32 %v5247, 7
      %v5249 = vsub.s32 %v5246, %v5248
      %v5250 = vrot.slane %v5242, %v5249
      %v5252 = vunpack.c.l.s4 1934713408
      %v5253 = vunpack.c.0.s8 %v5252
      %v5254 = vlaneseq
      %v5255 = vshrl.u32 %v5254, 7
      %v5256 = vsub.s32 %v5253, %v5255
      %v5257 = vrot.slane %v5243, %v5256
      %v5258 = vcombine.low %v5225, %v5241
      %v5259 = vcombine.high %v5225, %v5241
      %v5261 = vunpack.c.l.s4 1934713408
      %v5262 = vunpack.c.0.s8 %v5261
      %v5263 = vlaneseq
      %v5264 = vshrl.u32 %v5263, 7
      %v5265 = vsub.s32 %v5262, %v5264
      %v5266 = vrot.slane %v5258, %v5265
      %v5268 = vunpack.c.l.s4 1934713408
      %v5269 = vunpack.c.0.s8 %v5268
      %v5270 = vlaneseq
      %v5271 = vshrl.u32 %v5270, 7
      %v5272 = vsub.s32 %v5269, %v5271
      %v5273 = vrot.slane %v5259, %v5272
      %v5274 = vcombine.high %v5250, 0.0
      %v5275 = vcombine.high %v5257, 0.0
      %v5276 = vcombine.high %v5266, 0.0
      %v5277 = vcombine.high %v5273, 0.0
      %v5278 = vcombine.low %v5189, %v5197
      %v5279 = vcombine.high %v5189, %v5197
      %v5281 = vunpack.c.l.s4 1983009808
      %v5282 = vunpack.c.0.s8 %v5281
      %v5283 = vlaneseq
      %v5284 = vshrl.u32 %v5283, 7
      %v5285 = vsub.s32 %v5282, %v5284
      %v5286 = vrot.slane %v5278, %v5285
      %v5288 = vunpack.c.l.s4 1983009808
      %v5289 = vunpack.c.0.s8 %v5288
      %v5290 = vlaneseq
      %v5291 = vshrl.u32 %v5290, 7
      %v5292 = vsub.s32 %v5289, %v5291
      %v5293 = vrot.slane %v5279, %v5292
      %v5294 = vcombine.low %v5193, %v5201
      %v5295 = vcombine.high %v5193, %v5201
      %v5297 = vunpack.c.l.s4 1983009808
      %v5298 = vunpack.c.0.s8 %v5297
      %v5299 = vlaneseq
      %v5300 = vshrl.u32 %v5299, 7
      %v5301 = vsub.s32 %v5298, %v5300
      %v5302 = vrot.slane %v5294, %v5301
      %v5304 = vunpack.c.l.s4 1983009808
      %v5305 = vunpack.c.0.s8 %v5304
      %v5306 = vlaneseq
      %v5307 = vshrl.u32 %v5306, 7
      %v5308 = vsub.s32 %v5305, %v5307
      %v5309 = vrot.slane %v5295, %v5308
      %v5310 = vcombine.low %v5286, %v5302
      %v5311 = vcombine.high %v5286, %v5302
      %v5313 = vunpack.c.l.s4 1934713408
      %v5314 = vunpack.c.0.s8 %v5313
      %v5315 = vlaneseq
      %v5316 = vshrl.u32 %v5315, 7
      %v5317 = vsub.s32 %v5314, %v5316
      %v5318 = vrot.slane %v5310, %v5317
      %v5320 = vunpack.c.l.s4 1934713408
      %v5321 = vunpack.c.0.s8 %v5320
      %v5322 = vlaneseq
      %v5323 = vshrl.u32 %v5322, 7
      %v5324 = vsub.s32 %v5321, %v5323
      %v5325 = vrot.slane %v5311, %v5324
      %v5326 = vcombine.low %v5293, %v5309
      %v5327 = vcombine.high %v5293, %v5309
      %v5329 = vunpack.c.l.s4 1934713408
      %v5330 = vunpack.c.0.s8 %v5329
      %v5331 = vlaneseq
      %v5332 = vshrl.u32 %v5331, 7
      %v5333 = vsub.s32 %v5330, %v5332
      %v5334 = vrot.slane %v5326, %v5333
      %v5336 = vunpack.c.l.s4 1934713408
      %v5337 = vunpack.c.0.s8 %v5336
      %v5338 = vlaneseq
      %v5339 = vshrl.u32 %v5338, 7
      %v5340 = vsub.s32 %v5337, %v5339
      %v5341 = vrot.slane %v5327, %v5340
      %v5342 = vcombine.high %v5318, 0.0
      %v5343 = vcombine.high %v5325, 0.0
      %v5344 = vcombine.high %v5334, 0.0
      %v5345 = vcombine.high %v5341, 0.0
      %5347 = vrot.lane.b32.xlu0 %v5274, 16
      %v5348 = vpop.permute.xlu0 %5347
      %5351 = vrot.lane.b32.xlu0 %v5257, 32
      %v5352 = vpop.permute.xlu0 %5351
      %5355 = vrot.lane.b32.xlu0 %v5275, 48
      %v5356 = vpop.permute.xlu0 %5355
      %5359 = vrot.lane.b32.xlu0 %v5266, 64
      %v5360 = vpop.permute.xlu0 %5359
      %5363 = vrot.lane.b32.xlu0 %v5276, 80
      %v5364 = vpop.permute.xlu0 %5363
      %5367 = vrot.lane.b32.xlu0 %v5273, 96
      %v5368 = vpop.permute.xlu0 %5367
      %5371 = vrot.lane.b32.xlu0 %v5277, 112
      %v5372 = vpop.permute.xlu0 %5371
      %5375 = vrot.lane.b32.xlu0 %v5342, 16
      %v5376 = vpop.permute.xlu0 %5375
      %5379 = vrot.lane.b32.xlu0 %v5325, 32
      %v5380 = vpop.permute.xlu0 %5379
      %5383 = vrot.lane.b32.xlu0 %v5343, 48
      %v5384 = vpop.permute.xlu0 %5383
      %5387 = vrot.lane.b32.xlu0 %v5334, 64
      %v5388 = vpop.permute.xlu0 %5387
      %5391 = vrot.lane.b32.xlu0 %v5344, 80
      %v5392 = vpop.permute.xlu0 %5391
      %5395 = vrot.lane.b32.xlu0 %v5341, 96
      %v5396 = vpop.permute.xlu0 %5395
      %5399 = vrot.lane.b32.xlu0 %v5345, 112
      %v5400 = vpop.permute.xlu0 %5399
      %v5402 = vsel %vm935, %v5250, %v5348
      %v5403 = vsel %vm937, %v5402, %v5352
      %v5404 = vsel %vm939, %v5403, %v5356
      %v5405 = vsel %vm941, %v5404, %v5360
      %v5406 = vsel %vm943, %v5405, %v5364
      %v5407 = vsel %vm945, %v5406, %v5368
      %v5408 = vsel %vm947, %v5407, %v5372
      %v5409 = vsel %vm935, %v5318, %v5376
      %v5410 = vsel %vm937, %v5409, %v5380
      %v5411 = vsel %vm939, %v5410, %v5384
      %v5412 = vsel %vm941, %v5411, %v5388
      %v5413 = vsel %vm943, %v5412, %v5392
      %v5414 = vsel %vm945, %v5413, %v5396
      %v5415 = vsel %vm947, %v5414, %v5400
      %v5418 = vrot.slane %v3786, 4
      %v5419 = vrot.slane %v3793, 4
      %v5424 = vrot.slane %v4254, 4
      %v5425 = vrot.slane %v4261, 4
      %v5430 = vrot.slane %v4714, 4
      %v5431 = vrot.slane %v4721, 4
      %v5436 = vrot.slane %v5178, 4
      %v5437 = vrot.slane %v5185, 4
      %v5440 = vsel %vm2842, %v3548, %v5418
      %v5441 = vsel %vm2842, %v3555, %v5419
      %v5442 = vsel %vm2842, %v4016, %v5424
      %v5443 = vsel %vm2842, %v4023, %v5425
      %v5444 = vsel %vm2842, %v4484, %v5430
      %v5445 = vsel %vm2842, %v4491, %v5431
      %v5446 = vsel %vm2842, %v4948, %v5436
      %v5447 = vsel %vm2842, %v4955, %v5437
      %v5448 = vld [vmem:[%s5] sm:$0xf]
      %v5449 = vld [vmem:[%s6] sm:$0xf]
      %5451 = vset.pattern.permute.xlu0 0
      %5452 = vperm.xlu0 %5451, %v5449
      %v5453 = vpop.permute.xlu0 %5452
      %v5456 = vsel %vm2858, %v5448, 0
      %v5459 = vsel %vm2842, %v5408, 0
      %v5462 = vsel %vm2842, %v5415, 0
      %5464 = vmatprep.subr.mxu0 %v5441
      %5465 = vmatpush1.msra.mxu0 %v5440
      %5466 = vmatprep.subr.mxu0 %v5443
      %5467 = vmatpush1.msra.mxu0 %v5442
      %5468 = vmatprep.subr.mxu0 %v5445
      %5469 = vmatpush1.msra.mxu0 %v5444
      %5470 = vmatprep.subr.mxu0 %v5447
      %5471 = vmatpush1.msra.mxu0 %v5446
      %5472 = vmatprep.subr.mxu0 %v5462
      %5473 = vmatpush1.msra.mxu0 %v5459
      %5474 = vmatprep.subr.mxu0 0.0
      %5475 = vmatpush1.msra.mxu0 0.0
      %5476 = vmatprep.subr.mxu0 0.0
      %5477 = vmatpush1.msra.mxu0 0.0
      %5478 = vmatprep.subr.mxu0 0.0
      %5479 = vmatpush1.msra.mxu0 0.0
      %5480 = vmatprep.subr.mxu0 0.0
      %5481 = vmatpush1.msra.mxu0 0.0
      %5482 = vmatprep.subr.mxu0 0.0
      %5483 = vmatpush1.msra.mxu0 0.0
      %5484 = vmatprep.subr.mxu0 0.0
      %5485 = vmatpush1.msra.mxu0 0.0
      %5486 = vmatprep.subr.mxu0 0.0
      %5487 = vmatpush1.msra.mxu0 0.0
      %5488 = vmatprep.subr.mxu0 0.0
      %5489 = vmatpush1.msra.mxu0 0.0
      %5490 = vmatprep.subr.mxu0 0.0
      %5491 = vmatpush1.msra.mxu0 0.0
      %5492 = vmatprep.subr.mxu0 0.0
      %5493 = vmatpush1.msra.mxu0 0.0
      %5494 = vmatprep.subr.mxu0 0.0
      %5495 = vmatpush1.msra.mxu0 0.0
      %5496 = vmatprep.subr.mxu0 0.0
      %5497 = vmatpush1.msra.mxu0 0.0
      %5498 = vmatprep.subr.mxu0 0.0
      %5499 = vmatpush1.msra.mxu0 0.0
      %5500 = vmatprep.subr.mxu0 0.0
      %5501 = vmatpush1.msra.mxu0 0.0
      %5502 = vmatprep.subr.mxu0 0.0
      %5503 = vmatpush1.msra.mxu0 0.0
      %5504 = vmatprep.subr.mxu0 0.0
      %5505 = vmatpush1.msra.mxu0 0.0
      %5506 = vmatprep.subr.mxu0 0.0
      %5507 = vmatpush1.msra.mxu0 0.0
      %5508 = vmatprep.subr.mxu0 0.0
      %5509 = vmatpush1.msra.mxu0 0.0
      %5510 = vmatprep.subr.mxu0 0.0
      %5511 = vmatpush1.msra.mxu0 0.0
      %5512 = vmatprep.subr.mxu0 0.0
      %5513 = vmatpush1.msra.mxu0 0.0
      %5514 = vmatprep.subr.mxu0 0.0
      %5515 = vmatpush1.msra.mxu0 0.0
      %5516 = vmatprep.subr.mxu0 0.0
      %5517 = vmatpush1.msra.mxu0 0.0
      %5518 = vmatprep.subr.mxu0 0.0
      %5519 = vmatpush1.msra.mxu0 0.0
      %5520 = vmatprep.subr.mxu0 0.0
      %5521 = vmatpush1.msra.mxu0 0.0
      %5522 = vmatprep.subr.mxu0 0.0
      %5523 = vmatpush1.msra.mxu0 0.0
      %5524 = vmatprep.subr.mxu0 0.0
      %5525 = vmatpush1.msra.mxu0 0.0
      %5526 = vmatprep.subr.mxu0 0.0
      %5527 = vmatpush1.msra.mxu0 0.0
      %5528 = vmatprep.mubr.f32.mxu0 0.0
      %5529 = vmatmul.mubr.f32.gmra.mrb[0].mxu0 %v5456
      %v5530 = vpop.f32.mrb[0].mxu0
      %v5531 = vadd.f32 %v5453, %v5530
      %v5532 = vpop.f32.mrb[0].mxu0
      %v5533 = vadd.f32 %v5453, %v5532
      %5534 = vdwg.mxu0
      %v5535 = vsel %vm2842, %v5531, 0.0
      %v5536 = vsel %vm2842, %v5533, 0.0
      %v5537 = vadd.f32 %v5535, %v5536
      %5538 = vadd.xlane.f32.xlu0 %v5537
      %v5539 = vpop.xlane.xlu0 %5538
      %v5540 = vmul.f32 %v5539, %v2944
      %v5541 = vsub.f32 %v5531, %v5540
      %v5542 = vsub.f32 %v5533, %v5540
      %v5543 = vmul.f32 %v5541, %v5541
      %v5544 = vmul.f32 %v5542, %v5542
      %v5545 = vsel %vm2842, %v5543, 0.0
      %v5546 = vsel %vm2842, %v5544, 0.0
      %v5547 = vadd.f32 %v5545, %v5546
      %5548 = vadd.xlane.f32.xlu0 %v5547
      %v5549 = vpop.xlane.xlu0 %5548
      %v5550 = vmul.f32 %v5549, %v2944
      %v5551 = vadd.f32 %v5550, 1e-05
      %v5552 = vrsqrt.pop %v5551
      %v5553 = vmul.f32 %v5541, %v5552
      %v5554 = vmul.f32 %v5542, %v5552
      %v5555 = vld [vmem:[%s7] sm:$0xf]
      %5557 = vset.pattern.permute.xlu0 0
      %5558 = vperm.xlu0 %5557, %v5555
      %v5559 = vpop.permute.xlu0 %5558
      %v5561 = vmul.f32 %v5553, %v5559
      %v5562 = vmul.f32 %v5554, %v5559
      %v5563 = vld [vmem:[%s8] sm:$0xf]
      %5565 = vset.pattern.permute.xlu0 0
      %5566 = vperm.xlu0 %5565, %v5563
      %v5567 = vpop.permute.xlu0 %5566
      %v5569 = vadd.f32 %v5561, %v5567
      %v5570 = vadd.f32 %v5562, %v5567
      %v5571 = vcombine.high %v333, %v333
      %v5573 = vadd.f32 %v5569, %v333
      %v5574 = vadd.f32 %v5570, %v5571
      %v5577 = vcombine.low %v5573, %v5574
      %5579 = vst [vmem:[%s332] sm:$0xff] %v5577
      %p5580 = scmp.lt.s32.totalorder %s20, 1
      %s5581 = scalar_select %p5580, %s20, 1
      %s5582 = smul.addr %s5581, 2
      %s5583 = smul.addr %s5582, 4
      %s5584 = scalar_lea.vmem %s9, %s5583
      // Predicated region
      $region57: #{residual_block.1} parent=55 // pred_check
        %p5585 = pneg %p232
      $region58: #{residual_block.1} parent=55 // pred_check_branch
        %5587 = sbr.rel (%p5585) target = $region60
      $region59: #{residual_block.1} parent=55 // pred_region
        _
      $region60: #{residual_block.1} parent=55 // pred_fallthru
        _
    $region56: #{residual_block.1} parent=5 // pred_fallthru
      _
    %p5588 = scmp.le.s32.totalorder 2, %s15
    // Predicated region
    $region61: #{residual_block.1} parent=5 // pred_check
      %p5589 = pneg %p5588
    $region62: #{residual_block.1} parent=5 // pred_check_branch
      %5591 = sbr.rel (%p5589) target = $region64
    $region63: #{residual_block.1} parent=5 // pred_region
      %s5592 = ssub.s32 %s15, 2
      // Predicated region
      $region65: #{residual_block.1} parent=63 // pred_check
        %p5593 = pneg %p238
      $region66: #{residual_block.1} parent=63 // pred_check_branch
        %5595 = sbr.rel (%p5593) target = $region68
      $region67: #{residual_block.1} parent=63 // pred_region
        %p5596 = scmp.lt.s32.totalorder %s21, 1
        %s5597 = scalar_select %p5596, %s21, 1
        %s5598 = smul.addr %s5597, 2
        %s5599 = smul.addr %s5598, 4
        %s5600 = scalar_lea.vmem %s9, %s5599
      $region68: #{residual_block.1} parent=63 // pred_fallthru
        _
    $region64: #{residual_block.1} parent=5 // pred_fallthru
      _
  $region6: #{residual_block.1} parent=0 // loop_footer
    %s19 = sadd.s32 1, %s15
  $region7: #{residual_block.1} parent=0 // loop_footer_branch
    %14 = sbr.rel target = $region3
  $region8: #{residual_block.1} parent=0 // loop_exit
    _

</llo_original>
